<compile_context>
chip_gen: v7x
topology: tpu7x:2x2x1
jax: 0.10.0
libtpu: 0.0.40
codegen_flags: <defaults>
</compile_context>

<pallas_src>
import functools

import numpy as np
import jax
import jax.numpy as jnp
from jax.experimental import pallas as pl
from jax.experimental.pallas import tpu as pltpu

BN_EPS = 1e-5
_VMEM_LIMIT = 36 * 1024 * 1024   # conservative: fits v7x (64 MiB) and v5e/v6e (128 MiB)


def _round_up(x, m):
    return ((x + m - 1) // m) * m


def _pick_row_tile(m, max_tile=1024, min_tile=256):
    """Pick a row tile (multiple of 8). Prefer exact divisors of m to avoid padding."""
    if m <= max_tile:
        t = _round_up(max(m, 8), 8)
        return t, t
    for t in range(max_tile, min_tile - 1, -8):
        if m % t == 0:
            return t, m
    fb = min(512, max_tile)
    return fb, _round_up(m, fb)


# --------------------------------------------------------------------------
# Matmul kernels (bf16 in, f32 accumulate), optionally with fused BN statistics
# --------------------------------------------------------------------------
def _matmul_kernel(x_ref, w_ref, o_ref, acc_ref):
    @pl.when(pl.program_id(2) == 0)
    def _init():
        acc_ref[...] = jnp.zeros_like(acc_ref)

    acc_ref[...] += jnp.dot(x_ref[...], w_ref[...],
                            preferred_element_type=jnp.float32)

    @pl.when(pl.program_id(2) == pl.num_programs(2) - 1)
    def _done():
        o_ref[...] = acc_ref[...].astype(o_ref.dtype)


def _matmul_stats_kernel(x_ref, w_ref, o_ref, s_ref, q_ref, acc_ref):
    @pl.when(pl.program_id(2) == 0)
    def _init():
        acc_ref[...] = jnp.zeros_like(acc_ref)

    acc_ref[...] += jnp.dot(x_ref[...], w_ref[...],
                            preferred_element_type=jnp.float32)

    @pl.when(pl.program_id(2) == pl.num_programs(2) - 1)
    def _done():
        acc = acc_ref[...]
        o_ref[...] = acc.astype(o_ref.dtype)
        # Per-row-tile partial sums, replicated over 8 sublanes and pre-scaled by 1/8
        # so a plain sum over all rows outside the kernel yields the true totals.
        s = jnp.sum(acc, axis=0, keepdims=True) * 0.125
        q = jnp.sum(acc * acc, axis=0, keepdims=True) * 0.125
        s_ref[...] = jnp.broadcast_to(s, s_ref.shape)
        q_ref[...] = jnp.broadcast_to(q, q_ref.shape)


@functools.partial(jax.jit, static_argnames=("with_stats",))
def pallas_matmul(x, w, with_stats=False):
    """(M, K) @ (K, N) on the MXU. bf16 inputs, f32 accumulation, bf16 output.

    When with_stats=True also returns per-output-channel sum and sum-of-squares of
    the f32 result (used to fuse BatchNorm batch-statistics into the producer)."""
    M, K = x.shape
    N = w.shape[1]
    x = x.astype(jnp.bfloat16)
    w = w.astype(jnp.bfloat16)

    TM, Mp = _pick_row_tile(M)
    if K <= 2048:                     # single K tile (full dim, no padding needed)
        TK, Kp = K, K
    else:                             # e.g. decoder 3x3: K = 9216 -> 18 x 512 tiles
        TK, Kp = 512, _round_up(K, 512)
    TN = N                            # all conv output widths here are <= 960

    if Mp != M or Kp != K:
        x = jnp.pad(x, ((0, Mp - M), (0, Kp - K)))
    if Kp != K:
        w = jnp.pad(w, ((0, Kp - K), (0, 0)))

    grid = (Mp // TM, 1, Kp // TK)
    x_spec = pl.BlockSpec((TM, TK), lambda i, j, k: (i, k))
    w_spec = pl.BlockSpec((TK, TN), lambda i, j, k: (k, j))
    o_spec = pl.BlockSpec((TM, TN), lambda i, j, k: (i, j))
    params = pltpu.CompilerParams(
        dimension_semantics=("parallel", "parallel", "arbitrary"),
        vmem_limit_bytes=_VMEM_LIMIT)
    scratch = [pltpu.VMEM((TM, TN), jnp.float32)]

    if not with_stats:
        out = pl.pallas_call(
            _matmul_kernel,
            out_shape=jax.ShapeDtypeStruct((Mp, N), jnp.bfloat16),
            grid=grid, in_specs=[x_spec, w_spec], out_specs=o_spec,
            scratch_shapes=scratch, compiler_params=params,
        )(x, w)
        return out[:M]

    n_tiles = Mp // TM
    out, s_part, q_part = pl.pallas_call(
        _matmul_stats_kernel,
        out_shape=(jax.ShapeDtypeStruct((Mp, N), jnp.bfloat16),
                   jax.ShapeDtypeStruct((n_tiles * 8, N), jnp.float32),
                   jax.ShapeDtypeStruct((n_tiles * 8, N), jnp.float32)),
        grid=grid,
        in_specs=[x_spec, w_spec],
        out_specs=(o_spec,
                   pl.BlockSpec((8, TN), lambda i, j, k: (i, j)),
                   pl.BlockSpec((8, TN), lambda i, j, k: (i, j))),
        scratch_shapes=scratch, compiler_params=params,
    )(x, w)
    return out[:M], jnp.sum(s_part, axis=0), jnp.sum(q_part, axis=0)


# --------------------------------------------------------------------------
# Fused BatchNorm-affine + activation (+ optional residual add) kernel
# --------------------------------------------------------------------------
def _apply_act(y, act):
    if act == "relu":
        return jnp.maximum(y, 0.0)
    if act == "hardswish":
        return y * jnp.clip(y + 3.0, 0.0, 6.0) * (1.0 / 6.0)
    return y


def _affine_kernel(x_ref, s_ref, b_ref, o_ref, *, act):
    y = x_ref[...].astype(jnp.float32) * s_ref[...] + b_ref[...]
    o_ref[...] = _apply_act(y, act).astype(o_ref.dtype)


def _affine_res_kernel(x_ref, s_ref, b_ref, r_ref, o_ref, *, act):
    y = x_ref[...].astype(jnp.float32) * s_ref[...] + b_ref[...]
    y = _apply_act(y, act) + r_ref[...].astype(jnp.float32)
    o_ref[...] = y.astype(o_ref.dtype)


@functools.partial(jax.jit, static_argnames=("act",))
def pallas_affine_act(x, scale, shift, act="none", residual=None):
    """y = act(x * scale + shift) [+ residual], per-channel scale/shift, bf16 storage."""
    M, C = x.shape
    x = x.astype(jnp.bfloat16)
    TM, Mp = _pick_row_tile(M)
    if Mp != M:
        x = jnp.pad(x, ((0, Mp - M), (0, 0)))
    scale = scale.reshape(1, C).astype(jnp.float32)
    shift = shift.reshape(1, C).astype(jnp.float32)
    row_spec = pl.BlockSpec((TM, C), lambda i: (i, 0))
    vec_spec = pl.BlockSpec((1, C), lambda i: (0, 0))
    params = pltpu.CompilerParams(dimension_semantics=("parallel",),
                                  vmem_limit_bytes=_VMEM_LIMIT)
    if residual is None:
        out = pl.pallas_call(
            functools.partial(_affine_kernel, act=act),
            out_shape=jax.ShapeDtypeStruct((Mp, C), jnp.bfloat16),
            grid=(Mp // TM,),
            in_specs=[row_spec, vec_spec, vec_spec],
            out_specs=row_spec, compiler_params=params,
        )(x, scale, shift)
    else:
        r = residual.astype(jnp.bfloat16)
        if Mp != M:
            r = jnp.pad(r, ((0, Mp - M), (0, 0)))
        out = pl.pallas_call(
            functools.partial(_affine_res_kernel, act=act),
            out_shape=jax.ShapeDtypeStruct((Mp, C), jnp.bfloat16),
            grid=(Mp // TM,),
            in_specs=[row_spec, vec_spec, vec_spec, row_spec],
            out_specs=row_spec, compiler_params=params,
        )(x, scale, shift, r)
    return out[:M]


# --------------------------------------------------------------------------
# Depthwise conv multiply-accumulate kernel (with fused BN statistics)
# --------------------------------------------------------------------------
def _dw_kernel(p_ref, w_ref, o_ref, s_ref, q_ref):
    w = w_ref[...]
    acc = p_ref[0].astype(jnp.float32) * w[0:1, :]
    for t in range(1, p_ref.shape[0]):             # static unroll over k*k taps
        acc = acc + p_ref[t].astype(jnp.float32) * w[t:t + 1, :]
    o_ref[...] = acc.astype(o_ref.dtype)
    s = jnp.sum(acc, axis=0, keepdims=True) * 0.125
    q = jnp.sum(acc * acc, axis=0, keepdims=True) * 0.125
    s_ref[...] = jnp.broadcast_to(s, s_ref.shape)
    q_ref[...] = jnp.broadcast_to(q, q_ref.shape)


@jax.jit
def pallas_depthwise_mac(patches, w):
    """patches: (KK, M, C) bf16, w: (KK, C) -> (M, C) bf16 plus per-channel
    sum / sum-of-squares (fused BatchNorm statistics)."""
    KK, M, C = patches.shape
    patches = patches.astype(jnp.bfloat16)
    w = w.astype(jnp.float32)
    cap = (6 * 1024 * 1024) // (KK * C * 2)
    cap = max(128, min(1024, (cap // 8) * 8))
    TM, Mp = _pick_row_tile(M, max_tile=cap, min_tile=128)
    if Mp != M:
        patches = jnp.pad(patches, ((0, 0), (0, Mp - M), (0, 0)))
    n_tiles = Mp // TM
    # TODO(synk): replace the HBM patch stack with a haloed-tile manual DMA to cut the
    # KK-fold input traffic.
    out, s_part, q_part = pl.pallas_call(
        _dw_kernel,
        out_shape=(jax.ShapeDtypeStruct((Mp, C), jnp.bfloat16),
                   jax.ShapeDtypeStruct((n_tiles * 8, C), jnp.float32),
                   jax.ShapeDtypeStruct((n_tiles * 8, C), jnp.float32)),
        grid=(n_tiles,),
        in_specs=[pl.BlockSpec((KK, TM, C), lambda i: (0, i, 0)),
                  pl.BlockSpec((KK, C), lambda i: (0, 0))],
        out_specs=(pl.BlockSpec((TM, C), lambda i: (i, 0)),
                   pl.BlockSpec((8, C), lambda i: (i, 0)),
                   pl.BlockSpec((8, C), lambda i: (i, 0))),
        compiler_params=pltpu.CompilerParams(
            dimension_semantics=("parallel",),
            vmem_limit_bytes=_VMEM_LIMIT),
    )(patches, w)
    return out[:M], jnp.sum(s_part, axis=0), jnp.sum(q_part, axis=0)


# --------------------------------------------------------------------------
# Separable bilinear resize kernel: apply interpolation matrix along axis 1
# --------------------------------------------------------------------------
def _resize_kernel(x_ref, r_ref, o_ref):
    r = r_ref[...]
    for g in range(x_ref.shape[0]):                # static unroll over batch rows
        o_ref[g] = jnp.dot(r, x_ref[g],
                           preferred_element_type=jnp.float32).astype(o_ref.dtype)


@jax.jit
def pallas_resize_axis1(x, R):
    """y[g, o, d] = sum_s R[o, s] * x[g, s, d]   (x: (G, S, D), R: (So, S))."""
    G, S, D = x.shape
    So = R.shape[0]
    x = x.astype(jnp.bfloat16)
    R = R.astype(jnp.bfloat16)
    Dp = _round_up(D, 128)
    TD = 128
    for t in (2048, 1024, 512, 256, 128):
        if Dp % t == 0:
            TD = t
            break
    if Dp != D:
        x = jnp.pad(x, ((0, 0), (0, 0), (0, Dp - D)))
    TG = 1
    for t in (8, 4, 2):
        if G % t == 0 and t * (S + So) * TD * 2 <= (6 << 20):
            TG = t
            break
    out = pl.pallas_call(
        _resize_kernel,
        out_shape=jax.ShapeDtypeStruct((G, So, Dp), jnp.bfloat16),
        grid=(G // TG, Dp // TD),
        in_specs=[pl.BlockSpec((TG, S, TD), lambda g, d: (g, 0, d)),
                  pl.BlockSpec((So, S), lambda g, d: (0, 0))],
        out_specs=pl.BlockSpec((TG, So, TD), lambda g, d: (g, 0, d)),
        compiler_params=pltpu.CompilerParams(
            dimension_semantics=("parallel", "parallel"),
            vmem_limit_bytes=_VMEM_LIMIT),
    )(x, R)
    return out[:, :, :D] if Dp != D else out


# --------------------------------------------------------------------------
# Layer helpers (NHWC, bf16 activations, Pallas kernels + thin XLA glue)
# --------------------------------------------------------------------------
def _bn_scale_shift(s, q, n, gamma, beta):
    mean = s / n
    var = jnp.maximum(q / n - mean * mean, 0.0)
    scale = gamma * jax.lax.rsqrt(var + BN_EPS)
    shift = beta - mean * scale
    return scale, shift


def conv1x1_bn_act(x, w, gamma, beta, act, residual=None):
    B, H, W, C = x.shape
    n = B * H * W
    y, s, q = pallas_matmul(x.reshape(n, C), w, with_stats=True)
    scale, shift = _bn_scale_shift(s, q, n, gamma, beta)
    res = residual.reshape(n, -1) if residual is not None else None
    out = pallas_affine_act(y, scale, shift, act=act, residual=res)
    return out.reshape(B, H, W, w.shape[1])


def conv2d_bn_act(x, w, gamma, beta, act, stride=1, padding=0, dilation=1):
    """Dense KxK (optionally dilated) conv via bf16 im2col + fused-stats matmul + BN."""
    B, H, W, C = x.shape
    kh, kw, _, Cout = w.shape
    x = x.astype(jnp.bfloat16)
    xp = jnp.pad(x, ((0, 0), (padding, padding), (padding, padding), (0, 0)))
    Ho = (H + 2 * padding - dilation * (kh - 1) - 1) // stride + 1
    Wo = (W + 2 * padding - dilation * (kw - 1) - 1) // stride + 1
    cols = []
    for i in range(kh):
        for j in range(kw):
            patch = jax.lax.slice(
                xp,
                (0, i * dilation, j * dilation, 0),
                (B, i * dilation + (Ho - 1) * stride + 1,
                 j * dilation + (Wo - 1) * stride + 1, C),
                (1, stride, stride, 1))
            cols.append(patch)
    n = B * Ho * Wo
    xcol = jnp.concatenate(cols, axis=-1).reshape(n, kh * kw * C)
    # TODO(synk): fuse the kh*kw tap loop into the matmul grid to avoid materializing
    # the bf16 im2col tensor in HBM.
    y, s, q = pallas_matmul(xcol, w.reshape(kh * kw * C, Cout), with_stats=True)
    scale, shift = _bn_scale_shift(s, q, n, gamma, beta)
    out = pallas_affine_act(y, scale, shift, act=act)
    return out.reshape(B, Ho, Wo, Cout)


def depthwise_bn(x, w, gamma, beta, stride=1, padding=1):
    """Depthwise conv (groups == channels) + BatchNorm (no activation)."""
    B, H, W, C = x.shape
    kh, kw, _ = w.shape
    x = x.astype(jnp.bfloat16)
    xp = jnp.pad(x, ((0, 0), (padding, padding), (padding, padding), (0, 0)))
    Ho = (H + 2 * padding - kh) // stride + 1
    Wo = (W + 2 * padding - kw) // stride + 1
    n = B * Ho * Wo
    pats = []
    for i in range(kh):
        for j in range(kw):
            patch = jax.lax.slice(
                xp, (0, i, j, 0),
                (B, i + (Ho - 1) * stride + 1, j + (Wo - 1) * stride + 1, C),
                (1, stride, stride, 1))
            pats.append(patch.reshape(n, C))
    patches = jnp.stack(pats, axis=0)
    y, s, q = pallas_depthwise_mac(patches, w.reshape(kh * kw, C))
    scale, shift = _bn_scale_shift(s, q, n, gamma, beta)
    out = pallas_affine_act(y, scale, shift, act="none")
    return out.reshape(B, Ho, Wo, C)


def _interp_matrix(n_in, n_out):
    """PyTorch bilinear interpolation weights, align_corners=False, antialias=False."""
    R = np.zeros((n_out, n_in), np.float32)
    scale = n_in / n_out
    for o in range(n_out):
        src = max((o + 0.5) * scale - 0.5, 0.0)
        i0 = min(int(np.floor(src)), n_in - 1)
        i1 = min(i0 + 1, n_in - 1)
        w1 = src - i0
        R[o, i0] += 1.0 - w1
        R[o, i1] += w1
    return jnp.asarray(R)


def upsample_bilinear(x, size):
    """nn.Upsample(mode='bilinear', align_corners=False) as separable Pallas matmuls
    applied directly on NHWC views (no transposes)."""
    B, H, W, C = x.shape
    Ho, Wo = size
    out = x
    if Ho != H:
        out = pallas_resize_axis1(out.reshape(B, H, W * C), _interp_matrix(H, Ho))
        out = out.reshape(B, Ho, W, C)
    if Wo != W:
        out = pallas_resize_axis1(out.reshape(B * Ho, W, C), _interp_matrix(W, Wo))
        out = out.reshape(B, Ho, Wo, C)
    return out


def _hardswish(x):
    return x * jnp.clip(x + 3.0, 0.0, 6.0) * (1.0 / 6.0)


# --------------------------------------------------------------------------
# Deterministic parameter initialization
# --------------------------------------------------------------------------
def _make_param_gen(key):
    state = {"key": key}

    def nxt():
        state["key"], sub = jax.random.split(state["key"])
        return sub

    return nxt


def _conv_w(nxt, shape, fan_in):
    return jax.random.normal(nxt(), shape, jnp.float32) * (1.0 / np.sqrt(fan_in))


def _bn_params(c):
    return jnp.ones((c,), jnp.float32), jnp.zeros((c,), jnp.float32)


def init_mbn(nxt, cin, exp, cout, k, act, use_se, stride=1, padding=1):
    g1, b1 = _bn_params(exp)
    gd, bd = _bn_params(exp)
    g2, b2 = _bn_params(cout)
    p = {
        "act": act, "use_se": use_se, "stride": stride, "padding": padding,
        "skip": (stride == 1 and cin == cout),
        "w1": _conv_w(nxt, (cin, exp), cin), "g1": g1, "b1": b1,
        "wd": _conv_w(nxt, (k, k, exp), k * k), "gd": gd, "bd": bd,
        "w2": _conv_w(nxt, (exp, cout), exp), "g2": g2, "b2": b2,
    }
    if use_se:
        p["wse1"] = _conv_w(nxt, (exp, cin), exp)
        p["bse1"] = jnp.zeros((cin,), jnp.float32)
        p["wse2"] = _conv_w(nxt, (cin, exp), cin)
        p["bse2"] = jnp.zeros((exp,), jnp.float32)
    return p


def mbn_forward(x, p):
    h = conv1x1_bn_act(x, p["w1"], p["g1"], p["b1"], p["act"])
    d = depthwise_bn(h, p["wd"], p["gd"], p["bd"],
                     stride=p["stride"], padding=p["padding"])
    if p["use_se"]:
        # Tiny (B, C) tensors: plain XLA beats padded Pallas calls here.
        s = jnp.mean(d.astype(jnp.float32), axis=(1, 2))
        s = jnp.maximum(s @ p["wse1"] + p["bse1"], 0.0)
        s = _hardswish(s @ p["wse2"] + p["bse2"])
        d = (d.astype(jnp.float32) * s[:, None, None, :]).astype(jnp.bfloat16)
    residual = x if p["skip"] else None
    return conv1x1_bn_act(d, p["w2"], p["g2"], p["b2"], "none", residual=residual)


def init_dcnn(nxt):
    g, b = _bn_params(16)
    return {
        "in_w": _conv_w(nxt, (3, 3, 3, 16), 27), "in_g": g, "in_b": b,
        "seq1": [init_mbn(nxt, 16, 16, 16, 3, "relu", False, 1, 1)],
        "seq2": [init_mbn(nxt, 16, 64, 24, 3, "relu", False, 2, 1),
                 init_mbn(nxt, 24, 72, 24, 3, "relu", False, 1, 1)],
        "seq3": [init_mbn(nxt, 24, 72, 40, 5, "relu", True, 2, 2),
                 init_mbn(nxt, 40, 120, 40, 5, "relu", True, 1, 2),
                 init_mbn(nxt, 40, 120, 40, 5, "relu", True, 1, 2)],
        "seq4": [init_mbn(nxt, 40, 240, 80, 3, "hardswish", False, 2, 1),
                 init_mbn(nxt, 80, 200, 80, 3, "hardswish", False, 1, 1),
                 init_mbn(nxt, 80, 184, 80, 3, "hardswish", False, 1, 1),
                 init_mbn(nxt, 80, 184, 80, 3, "hardswish", False, 1, 1),
                 init_mbn(nxt, 80, 480, 112, 3, "hardswish", True, 1, 1),
                 init_mbn(nxt, 112, 672, 160, 3, "hardswish", True, 1, 1),
                 init_mbn(nxt, 160, 672, 160, 5, "hardswish", True, 1, 2),
                 init_mbn(nxt, 160, 960, 160, 5, "hardswish", True, 1, 2),
                 init_mbn(nxt, 160, 960, 160, 5, "hardswish", True, 1, 2)],
    }


def dcnn_forward(x, p):
    out = conv2d_bn_act(x, p["in_w"], p["in_g"], p["in_b"], "hardswish",
                        stride=2, padding=1)
    for blk in p["seq1"]:
        out = mbn_forward(out, blk)
    f1 = out
    for blk in p["seq2"]:
        out = mbn_forward(out, blk)
    f2 = out
    for blk in p["seq3"]:
        out = mbn_forward(out, blk)
    f3 = out
    for blk in p["seq4"]:
        out = mbn_forward(out, blk)
    return f1, f2, f3, out


def init_aspp(nxt):
    p = {}
    p["std_w"] = _conv_w(nxt, (160, 256), 160)
    p["std_g"], p["std_b"] = _bn_params(256)
    for name in ("a1", "a2", "a3"):
        p[name + "_w"] = _conv_w(nxt, (3, 3, 160, 256), 9 * 160)
        p[name + "_g"], p[name + "_b"] = _bn_params(256)
    p["gap_w"] = _conv_w(nxt, (160, 256), 160)
    p["gap_g"], p["gap_b"] = _bn_params(256)
    p["fin_w"] = _conv_w(nxt, (1280, 256), 1280)
    p["fin_g"], p["fin_b"] = _bn_params(256)
    return p


def aspp_forward(x, p):
    out1 = conv1x1_bn_act(x, p["std_w"], p["std_g"], p["std_b"], "relu")
    out2 = conv2d_bn_act(x, p["a1_w"], p["a1_g"], p["a1_b"], "relu",
                         stride=1, padding=6, dilation=6)
    out3 = conv2d_bn_act(x, p["a2_w"], p["a2_g"], p["a2_b"], "relu",
                         stride=1, padding=12, dilation=12)
    out4 = conv2d_bn_act(x, p["a3_w"], p["a3_g"], p["a3_b"], "relu",
                         stride=1, padding=18, dilation=18)
    g = jnp.mean(x.astype(jnp.float32), axis=(1, 2), keepdims=True)   # AdaptiveAvgPool2d(1)
    g = conv1x1_bn_act(g, p["gap_w"], p["gap_g"], p["gap_b"], "relu")
    out5 = jnp.broadcast_to(g, out1.shape).astype(out1.dtype)
    cat = jnp.concatenate([out1, out2, out3, out4, out5], axis=-1)
    # Dropout(0.1) is the identity at inference.
    return conv1x1_bn_act(cat, p["fin_w"], p["fin_g"], p["fin_b"], "relu")


def init_decoder(nxt):
    p = {}
    p["f1_w"] = _conv_w(nxt, (16, 256), 16)
    p["f1_g"], p["f1_b"] = _bn_params(256)
    p["f2_w"] = _conv_w(nxt, (24, 256), 24)
    p["f2_g"], p["f2_b"] = _bn_params(256)
    p["f3_w"] = _conv_w(nxt, (40, 256), 40)
    p["f3_g"], p["f3_b"] = _bn_params(256)
    p["fin_w3"] = _conv_w(nxt, (3, 3, 1024, 256), 9 * 1024)
    p["fin_g"], p["fin_b"] = _bn_params(256)
    p["fin_w1"] = _conv_w(nxt, (256, 2), 256)
    p["fin_bias"] = jnp.zeros((2,), jnp.float32)
    return p


def decoder_forward(f1, f2, f3, f4, p, target_size):
    o1 = conv1x1_bn_act(f1, p["f1_w"], p["f1_g"], p["f1_b"], "relu")
    o2 = conv1x1_bn_act(f2, p["f2_w"], p["f2_g"], p["f2_b"], "relu")
    o3 = conv1x1_bn_act(f3, p["f3_w"], p["f3_g"], p["f3_b"], "relu")
    # Original module hardcodes f2_size=(128,128) (512x512 input); here it equals
    # input_size // 4 which matches f2's resolution for any consistent input size.
    f2_size = f2.shape[1:3]
    o1 = upsample_bilinear(o1, f2_size)
    o3 = upsample_bilinear(o3, f2_size)
    o4 = upsample_bilinear(f4, f2_size)
    cat = jnp.concatenate([o1, o2, o3, o4], axis=-1)
    out = conv2d_bn_act(cat, p["fin_w3"], p["fin_g"], p["fin_b"], "relu",
                        stride=1, padding=0)   # nn.Conv2d default padding=0
    B, Ho, Wo, C = out.shape
    y = pallas_matmul(out.reshape(B * Ho * Wo, C), p["fin_w1"])
    y = y.astype(jnp.float32) + p["fin_bias"]
    out = y.reshape(B, Ho, Wo, 2)
    return upsample_bilinear(out, target_size)


def init_fire_segmentation_model(key):
    nxt = _make_param_gen(key)
    return {"dcnn": init_dcnn(nxt),
            "aspp": init_aspp(nxt),
            "decoder": init_decoder(nxt)}


def fire_segmentation_forward(params, x_nchw):
    """FireSegmentationModel.forward: (B,3,H,W) NCHW -> (B,2,H,W) NCHW."""
    x = jnp.transpose(x_nchw, (0, 2, 3, 1)).astype(jnp.float32)   # NCHW -> NHWC
    f1, f2, f3, enc_out = dcnn_forward(x, params["dcnn"])
    f4 = aspp_forward(enc_out, params["aspp"])
    out = decoder_forward(f1, f2, f3, f4, params["decoder"],
                          target_size=x.shape[1:3])
    return jnp.transpose(out, (0, 3, 1, 2)).astype(jnp.float32)   # NHWC -> NCHW


if __name__ == "__main__":
    key = jax.random.PRNGKey(0)
    pkey, xkey = jax.random.split(key)
    params = init_fire_segmentation_model(pkey)

    # Small input: original model targets 512x512; 64x64 gives f1=32, f2=16, f3=8, f4=4.
    x = jax.random.normal(xkey, (2, 3, 64, 64), jnp.float32)

    out = fire_segmentation_forward(params, x)
    out = jax.block_until_ready(out)

    assert out.shape == (2, 2, 64, 64), out.shape
    assert bool(jnp.all(jnp.isfinite(out))), "non-finite output"
    print("KERNEL_OK")
</pallas_src>

<mosaic_0001>
module attributes {stable_mosaic.version = 11 : i64} {
  func.func @_matmul_stats_kernel(%arg0: i32, %arg1: i32, %arg2: i32, %arg3: memref<1024x27xbf16, #tpu.memory_space<vmem>>, %arg4: memref<27x16xbf16, #tpu.memory_space<vmem>>, %arg5: memref<1024x16xbf16, #tpu.memory_space<vmem>>, %arg6: memref<8x16xf32, #tpu.memory_space<vmem>>, %arg7: memref<8x16xf32, #tpu.memory_space<vmem>>, %arg8: memref<1024x16xf32, #tpu.memory_space<vmem>>) attributes {dimension_semantics = [#tpu.dimension_semantics<parallel>, #tpu.dimension_semantics<parallel>, #tpu.dimension_semantics<arbitrary>], iteration_bounds = array<i64: 2, 1, 1>, scalar_prefetch = 0 : i64, scratch_operands = 1 : i64, tpu.core_type = #tpu.core_type<tc>, window_params = [{transform_indices = @transform_0, window_bounds = array<i64: 1024, 27>}, {transform_indices = @transform_1, window_bounds = array<i64: 27, 16>}, {transform_indices = @transform_2, window_bounds = array<i64: 1024, 16>}, {transform_indices = @transform_3, window_bounds = array<i64: 8, 16>}, {transform_indices = @transform_4, window_bounds = array<i64: 8, 16>}]} {
    %c0_i32 = arith.constant 0 : i32
    %0 = arith.cmpi eq, %arg2, %c0_i32 : i32
    %1 = arith.extui %0 : i1 to i32
    %c0_i32_0 = arith.constant 0 : i32
    %2 = arith.cmpi ne, %1, %c0_i32_0 : i32
    scf.if %2 {
      %cst_10 = arith.constant 0.000000e+00 : f32
      %12 = vector.broadcast %cst_10 : f32 to vector<1024x16xf32>
      %c0_11 = arith.constant 0 : index
      %c0_12 = arith.constant 0 : index
      %13 = vector.load %arg8[%c0_11, %c0_12] : memref<1024x16xf32, #tpu.memory_space<vmem>>, vector<1024x16xf32>
      tpu.vector_store %arg8[%c0_11, %c0_12], %12 {strides = array<i32>} : memref<1024x16xf32, #tpu.memory_space<vmem>>, vector<1024x16xf32>,
    } else {
    }
    %c0 = arith.constant 0 : index
    %c0_1 = arith.constant 0 : index
    %3 = vector.load %arg8[%c0, %c0_1] : memref<1024x16xf32, #tpu.memory_space<vmem>>, vector<1024x16xf32>
    %c0_2 = arith.constant 0 : index
    %c0_3 = arith.constant 0 : index
    %4 = vector.load %arg3[%c0_2, %c0_3] : memref<1024x27xbf16, #tpu.memory_space<vmem>>, vector<1024x27xbf16>
    %c0_4 = arith.constant 0 : index
    %c0_5 = arith.constant 0 : index
    %5 = vector.load %arg4[%c0_4, %c0_5] : memref<27x16xbf16, #tpu.memory_space<vmem>>, vector<27x16xbf16>
    %cst = arith.constant dense<0.000000e+00> : vector<1024x16xf32>
    %6 = tpu.matmul %4, %5, %cst {dimension_numbers = #tpu.dot_dimension_numbers<[1], [0], [0], [1], [0, 0, 1, 1], [], []>} : vector<1024x27xbf16>, vector<27x16xbf16>, vector<1024x16xf32> -> vector<1024x16xf32>
    %7 = arith.addf %3, %6 : vector<1024x16xf32>
    %c0_6 = arith.constant 0 : index
    %c0_7 = arith.constant 0 : index
    %8 = vector.load %arg8[%c0_6, %c0_7] : memref<1024x16xf32, #tpu.memory_space<vmem>>, vector<1024x16xf32>
    tpu.vector_store %arg8[%c0_6, %c0_7], %7 {strides = array<i32>} : memref<1024x16xf32, #tpu.memory_space<vmem>>, vector<1024x16xf32>,
    %c0_i32_8 = arith.constant 0 : i32
    %9 = arith.cmpi eq, %arg2, %c0_i32_8 : i32
    %10 = arith.extui %9 : i1 to i32
    %c0_i32_9 = arith.constant 0 : i32
    %11 = arith.cmpi ne, %10, %c0_i32_9 : i32
    scf.if %11 {
      %c0_10 = arith.constant 0 : index
      %c0_11 = arith.constant 0 : index
      %12 = vector.load %arg8[%c0_10, %c0_11] : memref<1024x16xf32, #tpu.memory_space<vmem>>, vector<1024x16xf32>
      %13 = arith.truncf %12 : vector<1024x16xf32> to vector<1024x16xbf16>
      %c0_12 = arith.constant 0 : index
      %c0_13 = arith.constant 0 : index
      %14 = vector.load %arg5[%c0_12, %c0_13] : memref<1024x16xbf16, #tpu.memory_space<vmem>>, vector<1024x16xbf16>
      tpu.vector_store %arg5[%c0_12, %c0_13], %13 {strides = array<i32>} : memref<1024x16xbf16, #tpu.memory_space<vmem>>, vector<1024x16xbf16>,
      %cst_14 = arith.constant dense<0.000000e+00> : vector<16xf32>
      %15 = vector.multi_reduction <add>, %12, %cst_14 [0] : vector<1024x16xf32> to vector<16xf32>
      %16 = vector.shape_cast %15 : vector<16xf32> to vector<1x16xf32>
      %cst_15 = arith.constant 1.250000e-01 : f32
      %17 = vector.broadcast %cst_15 : f32 to vector<1x16xf32>
      %18 = arith.mulf %16, %17 : vector<1x16xf32>
      %19 = arith.mulf %12, %12 : vector<1024x16xf32>
      %cst_16 = arith.constant dense<0.000000e+00> : vector<16xf32>
      %20 = vector.multi_reduction <add>, %19, %cst_16 [0] : vector<1024x16xf32> to vector<16xf32>
      %21 = vector.shape_cast %20 : vector<16xf32> to vector<1x16xf32>
      %cst_17 = arith.constant 1.250000e-01 : f32
      %22 = vector.broadcast %cst_17 : f32 to vector<1x16xf32>
      %23 = arith.mulf %21, %22 : vector<1x16xf32>
      %24 = vector.shape_cast %18 : vector<1x16xf32> to vector<1x16xf32>
      %25 = vector.broadcast %24 : vector<1x16xf32> to vector<8x16xf32>
      %c0_18 = arith.constant 0 : index
      %c0_19 = arith.constant 0 : index
      %26 = vector.load %arg6[%c0_18, %c0_19] : memref<8x16xf32, #tpu.memory_space<vmem>>, vector<8x16xf32>
      tpu.vector_store %arg6[%c0_18, %c0_19], %25 {strides = array<i32>} : memref<8x16xf32, #tpu.memory_space<vmem>>, vector<8x16xf32>,
      %27 = vector.shape_cast %23 : vector<1x16xf32> to vector<1x16xf32>
      %28 = vector.broadcast %27 : vector<1x16xf32> to vector<8x16xf32>
      %c0_20 = arith.constant 0 : index
      %c0_21 = arith.constant 0 : index
      %29 = vector.load %arg7[%c0_20, %c0_21] : memref<8x16xf32, #tpu.memory_space<vmem>>, vector<8x16xf32>
      tpu.vector_store %arg7[%c0_20, %c0_21], %28 {strides = array<i32>} : memref<8x16xf32, #tpu.memory_space<vmem>>, vector<8x16xf32>,
    } else {
    }
    return
  }
  func.func @transform_0(%arg0: i32, %arg1: i32, %arg2: i32) -> (i32, i32) {
    %c0_i32 = arith.constant 0 : i32
    return %arg0, %arg2 : i32, i32
  }
  func.func @transform_1(%arg0: i32, %arg1: i32, %arg2: i32) -> (i32, i32) {
    %c0_i32 = arith.constant 0 : i32
    return %arg2, %arg1 : i32, i32
  }
  func.func @transform_2(%arg0: i32, %arg1: i32, %arg2: i32) -> (i32, i32) {
    %c0_i32 = arith.constant 0 : i32
    return %arg0, %arg1 : i32, i32
  }
  func.func @transform_3(%arg0: i32, %arg1: i32, %arg2: i32) -> (i32, i32) {
    %c0_i32 = arith.constant 0 : i32
    return %arg0, %arg1 : i32, i32
  }
  func.func @transform_4(%arg0: i32, %arg1: i32, %arg2: i32) -> (i32, i32) {
    %c0_i32 = arith.constant 0 : i32
    return %arg0, %arg1 : i32, i32
  }
}

</mosaic_0001>

<llo_original>
// kernel: pallas_matmul.1
$region0: #{pallas_matmul.1}
  #allocation0 [shape = 'u32[]', space=smem, size = 0x4, offset = 0x4, fixed_abs, tag = 'smem constant byte address 0x4 - core index']
  #allocation1 [shape = 'u32[144,128]{1,0:T(1,128)}', space=vmem, size = 0x12000, scoped, tag = 'internal scratch']
  #allocation2 [shape = 'f32[1024,16]{1,0:T(8,128)}', space=vmem, size = 0x80000, scoped, tag = 'scratch operand']
  %s0 = inlined_call_operand.vmem [shape: bf16[2048,27], index: 0, kind: input, shape index: {}]
  %s1 = inlined_call_operand.vmem [shape: bf16[27,16], index: 1, kind: input, shape index: {}]
  %s2 = inlined_call_operand.vmem [shape: bf16[2048,16], index: 2, kind: output, shape index: {0}]
  %s3 = inlined_call_operand.vmem [shape: f32[16,16], index: 3, kind: output, shape index: {1}]
  %s4 = inlined_call_operand.vmem [shape: f32[16,16], index: 4, kind: output, shape index: {2}]
  %5 = xla_tuple %s2, %s3, %s4
  %s6 = sld [smem:[#allocation0]]
  $region65: #{pallas_matmul.1} parent=0
    _
  %s8 = ssub.s32 1, %s6
  %s9 = scalar_select 0, %s8, %s6
  loop: start=0, step=1, limit=4
  $region2: #{pallas_matmul.1} parent=0 // loop_pre_header
    _
  $region3: #{pallas_matmul.1} parent=0 // loop_header
    %s11 = sphi 0, %s15
    %p12 = scmp.ge.s32.totalorder %s11, 4
    %s18 = sphi 0, %s37
    %s19 = sphi 0, %s33
    %s20 = sphi 0, %s29
    %s21 = sphi 0, %s18
    %s22 = sphi 0, %s19
    %s23 = sphi 0, %s20
    %s24 = sphi 0, %s21
    %s25 = sphi 0, %s22
    %s26 = sphi 0, %s23
    %s42 = sphi 0, %s44
    %s45 = sphi 0, %s42
    %s46 = sphi 0, %s45
    %s62 = sphi 0, %s46
    %s70 = sphi 0, %s72
    %s73 = sphi 0, %s70
    %s74 = sphi 0, %s73
    %s90 = sphi 0, %s74
    %s98 = sphi 0, %s100
    %s101 = sphi 0, %s98
    %s102 = sphi 0, %s101
    %s118 = sphi 0, %s102
    %s126 = sphi 0, %s128
    %s129 = sphi 0, %s126
    %s130 = sphi 0, %s129
    %s146 = sphi 0, %s130
    %s154 = sphi 0, %s156
    %s157 = sphi 0, %s154
    %s158 = sphi 0, %s157
    %s174 = sphi 0, %s158
  $region4: #{pallas_matmul.1} parent=0 // loop_header_branch
    %14 = sbr.rel (%p12) target = $region8
  $region5: #{pallas_matmul.1} parent=0 // loop_body
    %s16 = ssub.s32 %s11, 1
    %s17 = ssub.s32 %s11, 2
    %s27 = sadd.s32 1, %s20
    %p28 = scmp.ge.s32.totalorder %s27, 1
    %s29 = scalar_select %p28, 0, %s27
    %s30 = sadd.s32 1, %s19
    %s31 = scalar_select %p28, %s30, %s19
    %p32 = scmp.ge.s32.totalorder %s31, 1
    %s33 = scalar_select %p32, 0, %s31
    %s34 = sadd.s32 1, %s18
    %s35 = scalar_select %p32, %s34, %s18
    %p36 = scmp.ge.s32.totalorder %s35, 2
    %s37 = scalar_select %p36, 0, %s35
    %s38 = ssub.s32 %s18, %s37
    %s39 = ssub.s32 %s20, %s29
    %s40 = sor.u32 %s38, %s39
    %p41 = scmp.eq.s32.totalorder %s40, 0
    %s43 = sadd.s32 %s42, 1
    %s44 = scalar_select %p41, %s42, %s43
    %p47 = pneg %p41
    %p48 = scmp.eq.s32.totalorder %s11, 1
    %p49 = por %p47, %p48
    %p50 = scmp.ne.s32.totalorder %s42, %s45
    %p51 = scmp.eq.s32.totalorder %s11, 0
    %p52 = por %p50, %p51
    %p53 = scmp.ne.s32.totalorder %s42, %s45
    %p54 = scmp.eq.s32.totalorder %s16, 1
    %p55 = por %p53, %p54
    %p56 = scmp.ne.s32.totalorder %s45, %s46
    %p57 = scmp.eq.s32.totalorder %s16, 0
    %p58 = por %p56, %p57
    %p59 = scmp.ne.s32.totalorder %s45, %s46
    %p60 = scmp.eq.s32.totalorder %s17, 1
    %p61 = por %p59, %p60
    %p63 = scmp.ne.s32.totalorder %s46, %s62
    %p64 = scmp.eq.s32.totalorder %s17, 0
    %p65 = por %p63, %p64
    %s66 = ssub.s32 %s20, %s29
    %s67 = ssub.s32 %s19, %s33
    %s68 = sor.u32 %s66, %s67
    %p69 = scmp.eq.s32.totalorder %s68, 0
    %s71 = sadd.s32 %s70, 1
    %s72 = scalar_select %p69, %s70, %s71
    %p75 = pneg %p69
    %p76 = scmp.eq.s32.totalorder %s11, 1
    %p77 = por %p75, %p76
    %p78 = scmp.ne.s32.totalorder %s70, %s73
    %p79 = scmp.eq.s32.totalorder %s11, 0
    %p80 = por %p78, %p79
    %p81 = scmp.ne.s32.totalorder %s70, %s73
    %p82 = scmp.eq.s32.totalorder %s16, 1
    %p83 = por %p81, %p82
    %p84 = scmp.ne.s32.totalorder %s73, %s74
    %p85 = scmp.eq.s32.totalorder %s16, 0
    %p86 = por %p84, %p85
    %p87 = scmp.ne.s32.totalorder %s73, %s74
    %p88 = scmp.eq.s32.totalorder %s17, 1
    %p89 = por %p87, %p88
    %p91 = scmp.ne.s32.totalorder %s74, %s90
    %p92 = scmp.eq.s32.totalorder %s17, 0
    %p93 = por %p91, %p92
    %s94 = ssub.s32 %s18, %s37
    %s95 = ssub.s32 %s19, %s33
    %s96 = sor.u32 %s94, %s95
    %p97 = scmp.eq.s32.totalorder %s96, 0
    %s99 = sadd.s32 %s98, 1
    %s100 = scalar_select %p97, %s98, %s99
    %p103 = pneg %p97
    %p104 = scmp.eq.s32.totalorder %s11, 1
    %p105 = por %p103, %p104
    %p106 = scmp.ne.s32.totalorder %s98, %s101
    %p107 = scmp.eq.s32.totalorder %s11, 0
    %p108 = por %p106, %p107
    %p109 = scmp.ne.s32.totalorder %s98, %s101
    %p110 = scmp.eq.s32.totalorder %s16, 1
    %p111 = por %p109, %p110
    %p112 = scmp.ne.s32.totalorder %s101, %s102
    %p113 = scmp.eq.s32.totalorder %s16, 0
    %p114 = por %p112, %p113
    %p115 = scmp.ne.s32.totalorder %s101, %s102
    %p116 = scmp.eq.s32.totalorder %s17, 1
    %p117 = por %p115, %p116
    %p119 = scmp.ne.s32.totalorder %s102, %s118
    %p120 = scmp.eq.s32.totalorder %s17, 0
    %p121 = por %p119, %p120
    %s122 = ssub.s32 %s18, %s37
    %s123 = ssub.s32 %s19, %s33
    %s124 = sor.u32 %s122, %s123
    %p125 = scmp.eq.s32.totalorder %s124, 0
    %s127 = sadd.s32 %s126, 1
    %s128 = scalar_select %p125, %s126, %s127
    %p131 = pneg %p125
    %p132 = scmp.eq.s32.totalorder %s11, 1
    %p133 = por %p131, %p132
    %p134 = scmp.ne.s32.totalorder %s126, %s129
    %p135 = scmp.eq.s32.totalorder %s11, 0
    %p136 = por %p134, %p135
    %p137 = scmp.ne.s32.totalorder %s126, %s129
    %p138 = scmp.eq.s32.totalorder %s16, 1
    %p139 = por %p137, %p138
    %p140 = scmp.ne.s32.totalorder %s129, %s130
    %p141 = scmp.eq.s32.totalorder %s16, 0
    %p142 = por %p140, %p141
    %p143 = scmp.ne.s32.totalorder %s129, %s130
    %p144 = scmp.eq.s32.totalorder %s17, 1
    %p145 = por %p143, %p144
    %p147 = scmp.ne.s32.totalorder %s130, %s146
    %p148 = scmp.eq.s32.totalorder %s17, 0
    %p149 = por %p147, %p148
    %s150 = ssub.s32 %s18, %s37
    %s151 = ssub.s32 %s19, %s33
    %s152 = sor.u32 %s150, %s151
    %p153 = scmp.eq.s32.totalorder %s152, 0
    %s155 = sadd.s32 %s154, 1
    %s156 = scalar_select %p153, %s154, %s155
    %p159 = pneg %p153
    %p160 = scmp.eq.s32.totalorder %s11, 1
    %p161 = por %p159, %p160
    %p162 = scmp.ne.s32.totalorder %s154, %s157
    %p163 = scmp.eq.s32.totalorder %s11, 0
    %p164 = por %p162, %p163
    %p165 = scmp.ne.s32.totalorder %s154, %s157
    %p166 = scmp.eq.s32.totalorder %s16, 1
    %p167 = por %p165, %p166
    %p168 = scmp.ne.s32.totalorder %s157, %s158
    %p169 = scmp.eq.s32.totalorder %s16, 0
    %p170 = por %p168, %p169
    %p171 = scmp.ne.s32.totalorder %s157, %s158
    %p172 = scmp.eq.s32.totalorder %s17, 1
    %p173 = por %p171, %p172
    %p175 = scmp.ne.s32.totalorder %s158, %s174
    %p176 = scmp.eq.s32.totalorder %s17, 0
    %p177 = por %p175, %p176
    %p178 = scmp.le.s32.totalorder 1, %s11
    %p179 = scmp.lt.s32.totalorder %s11, 3
    %p180 = pnand %p178, %p179
    %p181 = pneg %p180
    // Predicated region
    $region9: #{pallas_matmul.1} parent=5 // pred_check
      _
    $region10: #{pallas_matmul.1} parent=5 // pred_check_branch
      %183 = sbr.rel (%p180) target = $region12
    $region11: #{pallas_matmul.1} parent=5 // pred_region
      %s184 = ssub.s32 %s11, 1
      // Predicated region
      $region13: #{pallas_matmul.1} parent=11 // pred_check
        %p185 = pneg %p86
      $region14: #{pallas_matmul.1} parent=11 // pred_check_branch
        %187 = sbr.rel (%p185) target = $region16
      $region15: #{pallas_matmul.1} parent=11 // pred_region
        %s188 = smul.u32 4, %s23
        %p189 = scmp.lt.s32.totalorder %s188, 3
        %s190 = scalar_select %p189, %s188, 3
        %p191 = scmp.lt.s32.totalorder %s22, 0
        %s192 = scalar_select %p191, %s22, 0
        %s193 = sadd.s32 %s192, %s190
        %s194 = smul.addr %s193, 4
        %s195 = scalar_lea.vmem %s1, %s194
        %s196 = smul.u32 4, %s23
      $region16: #{pallas_matmul.1} parent=11 // pred_fallthru
        _
    $region12: #{pallas_matmul.1} parent=5 // pred_fallthru
      _
    %p197 = scmp.lt.s32.totalorder %s11, 2
    // Predicated region
    $region17: #{pallas_matmul.1} parent=5 // pred_check
      %p198 = pneg %p197
    $region18: #{pallas_matmul.1} parent=5 // pred_check_branch
      %200 = sbr.rel (%p198) target = $region20
    $region19: #{pallas_matmul.1} parent=5 // pred_region
      // Predicated region
      $region21: #{pallas_matmul.1} parent=19 // pred_check
        %p201 = pneg %p52
      $region22: #{pallas_matmul.1} parent=19 // pred_check_branch
        %203 = sbr.rel (%p201) target = $region24
      $region23: #{pallas_matmul.1} parent=19 // pred_region
        %s204 = smul.u32 128, %s18
        %p205 = scmp.lt.s32.totalorder %s204, 255
        %s206 = scalar_select %p205, %s204, 255
        %p207 = scmp.lt.s32.totalorder %s20, 0
        %s208 = scalar_select %p207, %s20, 0
        %s209 = sadd.s32 %s208, %s206
        %s210 = smul.addr %s209, 4
        %s211 = scalar_lea.vmem %s0, %s210
        %s212 = smul.u32 128, %s18
      $region24: #{pallas_matmul.1} parent=19 // pred_fallthru
        _
    $region20: #{pallas_matmul.1} parent=5 // pred_fallthru
      _
    %p213 = scmp.le.s32.totalorder 1, %s11
    %p214 = scmp.lt.s32.totalorder %s11, 3
    %p215 = pnand %p213, %p214
    %p216 = pneg %p215
    // Predicated region
    $region25: #{pallas_matmul.1} parent=5 // pred_check
      _
    $region26: #{pallas_matmul.1} parent=5 // pred_check_branch
      %218 = sbr.rel (%p215) target = $region28
    $region27: #{pallas_matmul.1} parent=5 // pred_region
      %s219 = ssub.s32 %s11, 1
      %s220 = smul.u32 128, %s21
      %p221 = scmp.lt.s32.totalorder %s220, 255
      %s222 = scalar_select %p221, %s220, 255
      %p223 = scmp.lt.s32.totalorder %s23, 0
      %s224 = scalar_select %p223, %s23, 0
      %s225 = sadd.s32 %s224, %s222
      %s226 = smul.addr %s225, 4
      %s227 = scalar_lea.vmem %s0, %s226
      %p228 = pneg %p58
      %p229 = pneg %p55
      %s230 = smul.u32 4, %s23
      %p231 = scmp.lt.s32.totalorder %s230, 3
      %s232 = scalar_select %p231, %s230, 3
      %p233 = scmp.lt.s32.totalorder %s22, 0
      %s234 = scalar_select %p233, %s22, 0
      %s235 = sadd.s32 %s234, %s232
      %s236 = smul.addr %s235, 4
      %s237 = scalar_lea.vmem %s1, %s236
      %p238 = pneg %p86
      %p239 = pneg %p83
      %p240 = pneg %p114
      %p241 = pneg %p111
      %s242 = smul.u32 128, %s21
      %p243 = scmp.lt.s32.totalorder %s242, 255
      %s244 = scalar_select %p243, %s242, 255
      %p245 = scmp.lt.s32.totalorder %s22, 0
      %s246 = scalar_select %p245, %s22, 0
      %s247 = sadd.s32 %s246, %s244
      %s248 = smul.addr %s247, 4
      %s249 = scalar_lea.vmem %s2, %s248
      %p250 = pneg %p142
      %p251 = pneg %p139
      %p252 = scmp.lt.s32.totalorder %s21, 1
      %s253 = scalar_select %p252, %s21, 1
      %p254 = scmp.lt.s32.totalorder %s22, 0
      %s255 = scalar_select %p254, %s22, 0
      %s256 = sadd.s32 %s255, %s253
      %s257 = smul.addr %s256, 8
      %s258 = scalar_lea.vmem %s3, %s257
      %p259 = pneg %p170
      %p260 = pneg %p167
      %p261 = scmp.lt.s32.totalorder %s21, 1
      %s262 = scalar_select %p261, %s21, 1
      %p263 = scmp.lt.s32.totalorder %s22, 0
      %s264 = scalar_select %p263, %s22, 0
      %s265 = sadd.s32 %s264, %s262
      %s266 = smul.addr %s265, 8
      %s267 = scalar_lea.vmem %s4, %s266
      %s268 = smul.u32 128, %s21
      %p269 = scmp.lt.s32.totalorder %s268, 255
      %s270 = scalar_select %p269, %s268, 255
      %p271 = scmp.lt.s32.totalorder %s23, 0
      %s272 = scalar_select %p271, %s23, 0
      %s273 = sadd.s32 %s272, %s270
      %s274 = smul.addr %s273, 4
      %s275 = scalar_lea.vmem %s0, %s274
      %s276 = smul.u32 128, %s21
      %s277 = smul.u32 4, %s23
      %p278 = scmp.lt.s32.totalorder %s277, 3
      %s279 = scalar_select %p278, %s277, 3
      %p280 = scmp.lt.s32.totalorder %s22, 0
      %s281 = scalar_select %p280, %s22, 0
      %s282 = sadd.s32 %s281, %s279
      %s283 = smul.addr %s282, 4
      %s284 = scalar_lea.vmem %s1, %s283
      %s285 = smul.u32 4, %s23
      %s286 = smul.u32 128, %s21
      %p287 = scmp.lt.s32.totalorder %s286, 255
      %s288 = scalar_select %p287, %s286, 255
      %p289 = scmp.lt.s32.totalorder %s22, 0
      %s290 = scalar_select %p289, %s22, 0
      %s291 = sadd.s32 %s290, %s288
      %s292 = smul.addr %s291, 4
      %s293 = scalar_lea.vmem %s2, %s292
      %s294 = smul.u32 128, %s21
      %p295 = scmp.lt.s32.totalorder %s21, 1
      %s296 = scalar_select %p295, %s21, 1
      %p297 = scmp.lt.s32.totalorder %s22, 0
      %s298 = scalar_select %p297, %s22, 0
      %s299 = sadd.s32 %s298, %s296
      %s300 = smul.addr %s299, 8
      %s301 = scalar_lea.vmem %s3, %s300
      %p302 = scmp.lt.s32.totalorder %s21, 1
      %s303 = scalar_select %p302, %s21, 1
      %p304 = scmp.lt.s32.totalorder %s22, 0
      %s305 = scalar_select %p304, %s22, 0
      %s306 = sadd.s32 %s305, %s303
      %s307 = smul.addr %s306, 8
      %s308 = scalar_lea.vmem %s4, %s307
      %p310 = scmp.eq.s32.totalorder %s23, 0
      // Predicated region
      $region29: #{pallas_matmul.1} parent=27 // pred_check
        %p311 = pneg %p310
      $region30: #{pallas_matmul.1} parent=27 // pred_check_branch
        %313 = sbr.rel (%p311) target = $region32
      $region31: #{pallas_matmul.1} parent=27 // pred_region
        %vm314 = vcmask 130048
        %315 = vst.msk [vmem:[#allocation2] sm:$0xff] %vm314, 0.0
        %316 = vst.msk [vmem:[#allocation2 + $0x8] sm:$0xff] %vm314, 0.0
        %317 = vst.msk [vmem:[#allocation2 + $0x10] sm:$0xff] %vm314, 0.0
        %318 = vst.msk [vmem:[#allocation2 + $0x18] sm:$0xff] %vm314, 0.0
        %319 = vst.msk [vmem:[#allocation2 + $0x20] sm:$0xff] %vm314, 0.0
        %320 = vst.msk [vmem:[#allocation2 + $0x28] sm:$0xff] %vm314, 0.0
        %321 = vst.msk [vmem:[#allocation2 + $0x30] sm:$0xff] %vm314, 0.0
        %322 = vst.msk [vmem:[#allocation2 + $0x38] sm:$0xff] %vm314, 0.0
        %323 = vst.msk [vmem:[#allocation2 + $0x40] sm:$0xff] %vm314, 0.0
        %324 = vst.msk [vmem:[#allocation2 + $0x48] sm:$0xff] %vm314, 0.0
        %325 = vst.msk [vmem:[#allocation2 + $0x50] sm:$0xff] %vm314, 0.0
        %326 = vst.msk [vmem:[#allocation2 + $0x58] sm:$0xff] %vm314, 0.0
        %327 = vst.msk [vmem:[#allocation2 + $0x60] sm:$0xff] %vm314, 0.0
        %328 = vst.msk [vmem:[#allocation2 + $0x68] sm:$0xff] %vm314, 0.0
        %329 = vst.msk [vmem:[#allocation2 + $0x70] sm:$0xff] %vm314, 0.0
        %330 = vst.msk [vmem:[#allocation2 + $0x78] sm:$0xff] %vm314, 0.0
        %331 = vst.msk [vmem:[#allocation2 + $0x80] sm:$0xff] %vm314, 0.0
        %332 = vst.msk [vmem:[#allocation2 + $0x88] sm:$0xff] %vm314, 0.0
        %333 = vst.msk [vmem:[#allocation2 + $0x90] sm:$0xff] %vm314, 0.0
        %334 = vst.msk [vmem:[#allocation2 + $0x98] sm:$0xff] %vm314, 0.0
        %335 = vst.msk [vmem:[#allocation2 + $0xa0] sm:$0xff] %vm314, 0.0
        %336 = vst.msk [vmem:[#allocation2 + $0xa8] sm:$0xff] %vm314, 0.0
        %337 = vst.msk [vmem:[#allocation2 + $0xb0] sm:$0xff] %vm314, 0.0
        %338 = vst.msk [vmem:[#allocation2 + $0xb8] sm:$0xff] %vm314, 0.0
        %339 = vst.msk [vmem:[#allocation2 + $0xc0] sm:$0xff] %vm314, 0.0
        %340 = vst.msk [vmem:[#allocation2 + $0xc8] sm:$0xff] %vm314, 0.0
        %341 = vst.msk [vmem:[#allocation2 + $0xd0] sm:$0xff] %vm314, 0.0
        %342 = vst.msk [vmem:[#allocation2 + $0xd8] sm:$0xff] %vm314, 0.0
        %343 = vst.msk [vmem:[#allocation2 + $0xe0] sm:$0xff] %vm314, 0.0
        %344 = vst.msk [vmem:[#allocation2 + $0xe8] sm:$0xff] %vm314, 0.0
        %345 = vst.msk [vmem:[#allocation2 + $0xf0] sm:$0xff] %vm314, 0.0
        %346 = vst.msk [vmem:[#allocation2 + $0xf8] sm:$0xff] %vm314, 0.0
        %347 = vst.msk [vmem:[#allocation2 + $0x100] sm:$0xff] %vm314, 0.0
        %348 = vst.msk [vmem:[#allocation2 + $0x108] sm:$0xff] %vm314, 0.0
        %349 = vst.msk [vmem:[#allocation2 + $0x110] sm:$0xff] %vm314, 0.0
        %350 = vst.msk [vmem:[#allocation2 + $0x118] sm:$0xff] %vm314, 0.0
        %351 = vst.msk [vmem:[#allocation2 + $0x120] sm:$0xff] %vm314, 0.0
        %352 = vst.msk [vmem:[#allocation2 + $0x128] sm:$0xff] %vm314, 0.0
        %353 = vst.msk [vmem:[#allocation2 + $0x130] sm:$0xff] %vm314, 0.0
        %354 = vst.msk [vmem:[#allocation2 + $0x138] sm:$0xff] %vm314, 0.0
        %355 = vst.msk [vmem:[#allocation2 + $0x140] sm:$0xff] %vm314, 0.0
        %356 = vst.msk [vmem:[#allocation2 + $0x148] sm:$0xff] %vm314, 0.0
        %357 = vst.msk [vmem:[#allocation2 + $0x150] sm:$0xff] %vm314, 0.0
        %358 = vst.msk [vmem:[#allocation2 + $0x158] sm:$0xff] %vm314, 0.0
        %359 = vst.msk [vmem:[#allocation2 + $0x160] sm:$0xff] %vm314, 0.0
        %360 = vst.msk [vmem:[#allocation2 + $0x168] sm:$0xff] %vm314, 0.0
        %361 = vst.msk [vmem:[#allocation2 + $0x170] sm:$0xff] %vm314, 0.0
        %362 = vst.msk [vmem:[#allocation2 + $0x178] sm:$0xff] %vm314, 0.0
        %363 = vst.msk [vmem:[#allocation2 + $0x180] sm:$0xff] %vm314, 0.0
        %364 = vst.msk [vmem:[#allocation2 + $0x188] sm:$0xff] %vm314, 0.0
        %365 = vst.msk [vmem:[#allocation2 + $0x190] sm:$0xff] %vm314, 0.0
        %366 = vst.msk [vmem:[#allocation2 + $0x198] sm:$0xff] %vm314, 0.0
        %367 = vst.msk [vmem:[#allocation2 + $0x1a0] sm:$0xff] %vm314, 0.0
        %368 = vst.msk [vmem:[#allocation2 + $0x1a8] sm:$0xff] %vm314, 0.0
        %369 = vst.msk [vmem:[#allocation2 + $0x1b0] sm:$0xff] %vm314, 0.0
        %370 = vst.msk [vmem:[#allocation2 + $0x1b8] sm:$0xff] %vm314, 0.0
        %371 = vst.msk [vmem:[#allocation2 + $0x1c0] sm:$0xff] %vm314, 0.0
        %372 = vst.msk [vmem:[#allocation2 + $0x1c8] sm:$0xff] %vm314, 0.0
        %373 = vst.msk [vmem:[#allocation2 + $0x1d0] sm:$0xff] %vm314, 0.0
        %374 = vst.msk [vmem:[#allocation2 + $0x1d8] sm:$0xff] %vm314, 0.0
        %375 = vst.msk [vmem:[#allocation2 + $0x1e0] sm:$0xff] %vm314, 0.0
        %376 = vst.msk [vmem:[#allocation2 + $0x1e8] sm:$0xff] %vm314, 0.0
        %377 = vst.msk [vmem:[#allocation2 + $0x1f0] sm:$0xff] %vm314, 0.0
        %378 = vst.msk [vmem:[#allocation2 + $0x1f8] sm:$0xff] %vm314, 0.0
        %379 = vst.msk [vmem:[#allocation2 + $0x200] sm:$0xff] %vm314, 0.0
        %380 = vst.msk [vmem:[#allocation2 + $0x208] sm:$0xff] %vm314, 0.0
        %381 = vst.msk [vmem:[#allocation2 + $0x210] sm:$0xff] %vm314, 0.0
        %382 = vst.msk [vmem:[#allocation2 + $0x218] sm:$0xff] %vm314, 0.0
        %383 = vst.msk [vmem:[#allocation2 + $0x220] sm:$0xff] %vm314, 0.0
        %384 = vst.msk [vmem:[#allocation2 + $0x228] sm:$0xff] %vm314, 0.0
        %385 = vst.msk [vmem:[#allocation2 + $0x230] sm:$0xff] %vm314, 0.0
        %386 = vst.msk [vmem:[#allocation2 + $0x238] sm:$0xff] %vm314, 0.0
        %387 = vst.msk [vmem:[#allocation2 + $0x240] sm:$0xff] %vm314, 0.0
        %388 = vst.msk [vmem:[#allocation2 + $0x248] sm:$0xff] %vm314, 0.0
        %389 = vst.msk [vmem:[#allocation2 + $0x250] sm:$0xff] %vm314, 0.0
        %390 = vst.msk [vmem:[#allocation2 + $0x258] sm:$0xff] %vm314, 0.0
        %391 = vst.msk [vmem:[#allocation2 + $0x260] sm:$0xff] %vm314, 0.0
        %392 = vst.msk [vmem:[#allocation2 + $0x268] sm:$0xff] %vm314, 0.0
        %393 = vst.msk [vmem:[#allocation2 + $0x270] sm:$0xff] %vm314, 0.0
        %394 = vst.msk [vmem:[#allocation2 + $0x278] sm:$0xff] %vm314, 0.0
        %395 = vst.msk [vmem:[#allocation2 + $0x280] sm:$0xff] %vm314, 0.0
        %396 = vst.msk [vmem:[#allocation2 + $0x288] sm:$0xff] %vm314, 0.0
        %397 = vst.msk [vmem:[#allocation2 + $0x290] sm:$0xff] %vm314, 0.0
        %398 = vst.msk [vmem:[#allocation2 + $0x298] sm:$0xff] %vm314, 0.0
        %399 = vst.msk [vmem:[#allocation2 + $0x2a0] sm:$0xff] %vm314, 0.0
        %400 = vst.msk [vmem:[#allocation2 + $0x2a8] sm:$0xff] %vm314, 0.0
        %401 = vst.msk [vmem:[#allocation2 + $0x2b0] sm:$0xff] %vm314, 0.0
        %402 = vst.msk [vmem:[#allocation2 + $0x2b8] sm:$0xff] %vm314, 0.0
        %403 = vst.msk [vmem:[#allocation2 + $0x2c0] sm:$0xff] %vm314, 0.0
        %404 = vst.msk [vmem:[#allocation2 + $0x2c8] sm:$0xff] %vm314, 0.0
        %405 = vst.msk [vmem:[#allocation2 + $0x2d0] sm:$0xff] %vm314, 0.0
        %406 = vst.msk [vmem:[#allocation2 + $0x2d8] sm:$0xff] %vm314, 0.0
        %407 = vst.msk [vmem:[#allocation2 + $0x2e0] sm:$0xff] %vm314, 0.0
        %408 = vst.msk [vmem:[#allocation2 + $0x2e8] sm:$0xff] %vm314, 0.0
        %409 = vst.msk [vmem:[#allocation2 + $0x2f0] sm:$0xff] %vm314, 0.0
        %410 = vst.msk [vmem:[#allocation2 + $0x2f8] sm:$0xff] %vm314, 0.0
        %411 = vst.msk [vmem:[#allocation2 + $0x300] sm:$0xff] %vm314, 0.0
        %412 = vst.msk [vmem:[#allocation2 + $0x308] sm:$0xff] %vm314, 0.0
        %413 = vst.msk [vmem:[#allocation2 + $0x310] sm:$0xff] %vm314, 0.0
        %414 = vst.msk [vmem:[#allocation2 + $0x318] sm:$0xff] %vm314, 0.0
        %415 = vst.msk [vmem:[#allocation2 + $0x320] sm:$0xff] %vm314, 0.0
        %416 = vst.msk [vmem:[#allocation2 + $0x328] sm:$0xff] %vm314, 0.0
        %417 = vst.msk [vmem:[#allocation2 + $0x330] sm:$0xff] %vm314, 0.0
        %418 = vst.msk [vmem:[#allocation2 + $0x338] sm:$0xff] %vm314, 0.0
        %419 = vst.msk [vmem:[#allocation2 + $0x340] sm:$0xff] %vm314, 0.0
        %420 = vst.msk [vmem:[#allocation2 + $0x348] sm:$0xff] %vm314, 0.0
        %421 = vst.msk [vmem:[#allocation2 + $0x350] sm:$0xff] %vm314, 0.0
        %422 = vst.msk [vmem:[#allocation2 + $0x358] sm:$0xff] %vm314, 0.0
        %423 = vst.msk [vmem:[#allocation2 + $0x360] sm:$0xff] %vm314, 0.0
        %424 = vst.msk [vmem:[#allocation2 + $0x368] sm:$0xff] %vm314, 0.0
        %425 = vst.msk [vmem:[#allocation2 + $0x370] sm:$0xff] %vm314, 0.0
        %426 = vst.msk [vmem:[#allocation2 + $0x378] sm:$0xff] %vm314, 0.0
        %427 = vst.msk [vmem:[#allocation2 + $0x380] sm:$0xff] %vm314, 0.0
        %428 = vst.msk [vmem:[#allocation2 + $0x388] sm:$0xff] %vm314, 0.0
        %429 = vst.msk [vmem:[#allocation2 + $0x390] sm:$0xff] %vm314, 0.0
        %430 = vst.msk [vmem:[#allocation2 + $0x398] sm:$0xff] %vm314, 0.0
        %431 = vst.msk [vmem:[#allocation2 + $0x3a0] sm:$0xff] %vm314, 0.0
        %432 = vst.msk [vmem:[#allocation2 + $0x3a8] sm:$0xff] %vm314, 0.0
        %433 = vst.msk [vmem:[#allocation2 + $0x3b0] sm:$0xff] %vm314, 0.0
        %434 = vst.msk [vmem:[#allocation2 + $0x3b8] sm:$0xff] %vm314, 0.0
        %435 = vst.msk [vmem:[#allocation2 + $0x3c0] sm:$0xff] %vm314, 0.0
        %436 = vst.msk [vmem:[#allocation2 + $0x3c8] sm:$0xff] %vm314, 0.0
        %437 = vst.msk [vmem:[#allocation2 + $0x3d0] sm:$0xff] %vm314, 0.0
        %438 = vst.msk [vmem:[#allocation2 + $0x3d8] sm:$0xff] %vm314, 0.0
        %439 = vst.msk [vmem:[#allocation2 + $0x3e0] sm:$0xff] %vm314, 0.0
        %440 = vst.msk [vmem:[#allocation2 + $0x3e8] sm:$0xff] %vm314, 0.0
        %441 = vst.msk [vmem:[#allocation2 + $0x3f0] sm:$0xff] %vm314, 0.0
        %442 = vst.msk [vmem:[#allocation2 + $0x3f8] sm:$0xff] %vm314, 0.0
      $region32: #{pallas_matmul.1} parent=27 // pred_fallthru
        _
      %v443 = vld [vmem:[#allocation2] sm:$0xff]
      %v444 = vld [vmem:[#allocation2 + $0x8] sm:$0xff]
      %v445 = vld [vmem:[#allocation2 + $0x10] sm:$0xff]
      %v446 = vld [vmem:[#allocation2 + $0x18] sm:$0xff]
      %v447 = vld [vmem:[#allocation2 + $0x20] sm:$0xff]
      %v448 = vld [vmem:[#allocation2 + $0x28] sm:$0xff]
      %v449 = vld [vmem:[#allocation2 + $0x30] sm:$0xff]
      %v450 = vld [vmem:[#allocation2 + $0x38] sm:$0xff]
      %v451 = vld [vmem:[#allocation2 + $0x40] sm:$0xff]
      %v452 = vld [vmem:[#allocation2 + $0x48] sm:$0xff]
      %v453 = vld [vmem:[#allocation2 + $0x50] sm:$0xff]
      %v454 = vld [vmem:[#allocation2 + $0x58] sm:$0xff]
      %v455 = vld [vmem:[#allocation2 + $0x60] sm:$0xff]
      %v456 = vld [vmem:[#allocation2 + $0x68] sm:$0xff]
      %v457 = vld [vmem:[#allocation2 + $0x70] sm:$0xff]
      %v458 = vld [vmem:[#allocation2 + $0x78] sm:$0xff]
      %v459 = vld [vmem:[#allocation2 + $0x80] sm:$0xff]
      %v460 = vld [vmem:[#allocation2 + $0x88] sm:$0xff]
      %v461 = vld [vmem:[#allocation2 + $0x90] sm:$0xff]
      %v462 = vld [vmem:[#allocation2 + $0x98] sm:$0xff]
      %v463 = vld [vmem:[#allocation2 + $0xa0] sm:$0xff]
      %v464 = vld [vmem:[#allocation2 + $0xa8] sm:$0xff]
      %v465 = vld [vmem:[#allocation2 + $0xb0] sm:$0xff]
      %v466 = vld [vmem:[#allocation2 + $0xb8] sm:$0xff]
      %v467 = vld [vmem:[#allocation2 + $0xc0] sm:$0xff]
      %v468 = vld [vmem:[#allocation2 + $0xc8] sm:$0xff]
      %v469 = vld [vmem:[#allocation2 + $0xd0] sm:$0xff]
      %v470 = vld [vmem:[#allocation2 + $0xd8] sm:$0xff]
      %v471 = vld [vmem:[#allocation2 + $0xe0] sm:$0xff]
      %v472 = vld [vmem:[#allocation2 + $0xe8] sm:$0xff]
      %v473 = vld [vmem:[#allocation2 + $0xf0] sm:$0xff]
      %v474 = vld [vmem:[#allocation2 + $0xf8] sm:$0xff]
      %v475 = vld [vmem:[#allocation2 + $0x100] sm:$0xff]
      %v476 = vld [vmem:[#allocation2 + $0x108] sm:$0xff]
      %v477 = vld [vmem:[#allocation2 + $0x110] sm:$0xff]
      %v478 = vld [vmem:[#allocation2 + $0x118] sm:$0xff]
      %v479 = vld [vmem:[#allocation2 + $0x120] sm:$0xff]
      %v480 = vld [vmem:[#allocation2 + $0x128] sm:$0xff]
      %v481 = vld [vmem:[#allocation2 + $0x130] sm:$0xff]
      %v482 = vld [vmem:[#allocation2 + $0x138] sm:$0xff]
      %v483 = vld [vmem:[#allocation2 + $0x140] sm:$0xff]
      %v484 = vld [vmem:[#allocation2 + $0x148] sm:$0xff]
      %v485 = vld [vmem:[#allocation2 + $0x150] sm:$0xff]
      %v486 = vld [vmem:[#allocation2 + $0x158] sm:$0xff]
      %v487 = vld [vmem:[#allocation2 + $0x160] sm:$0xff]
      %v488 = vld [vmem:[#allocation2 + $0x168] sm:$0xff]
      %v489 = vld [vmem:[#allocation2 + $0x170] sm:$0xff]
      %v490 = vld [vmem:[#allocation2 + $0x178] sm:$0xff]
      %v491 = vld [vmem:[#allocation2 + $0x180] sm:$0xff]
      %v492 = vld [vmem:[#allocation2 + $0x188] sm:$0xff]
      %v493 = vld [vmem:[#allocation2 + $0x190] sm:$0xff]
      %v494 = vld [vmem:[#allocation2 + $0x198] sm:$0xff]
      %v495 = vld [vmem:[#allocation2 + $0x1a0] sm:$0xff]
      %v496 = vld [vmem:[#allocation2 + $0x1a8] sm:$0xff]
      %v497 = vld [vmem:[#allocation2 + $0x1b0] sm:$0xff]
      %v498 = vld [vmem:[#allocation2 + $0x1b8] sm:$0xff]
      %v499 = vld [vmem:[#allocation2 + $0x1c0] sm:$0xff]
      %v500 = vld [vmem:[#allocation2 + $0x1c8] sm:$0xff]
      %v501 = vld [vmem:[#allocation2 + $0x1d0] sm:$0xff]
      %v502 = vld [vmem:[#allocation2 + $0x1d8] sm:$0xff]
      %v503 = vld [vmem:[#allocation2 + $0x1e0] sm:$0xff]
      %v504 = vld [vmem:[#allocation2 + $0x1e8] sm:$0xff]
      %v505 = vld [vmem:[#allocation2 + $0x1f0] sm:$0xff]
      %v506 = vld [vmem:[#allocation2 + $0x1f8] sm:$0xff]
      %v507 = vld [vmem:[#allocation2 + $0x200] sm:$0xff]
      %v508 = vld [vmem:[#allocation2 + $0x208] sm:$0xff]
      %v509 = vld [vmem:[#allocation2 + $0x210] sm:$0xff]
      %v510 = vld [vmem:[#allocation2 + $0x218] sm:$0xff]
      %v511 = vld [vmem:[#allocation2 + $0x220] sm:$0xff]
      %v512 = vld [vmem:[#allocation2 + $0x228] sm:$0xff]
      %v513 = vld [vmem:[#allocation2 + $0x230] sm:$0xff]
      %v514 = vld [vmem:[#allocation2 + $0x238] sm:$0xff]
      %v515 = vld [vmem:[#allocation2 + $0x240] sm:$0xff]
      %v516 = vld [vmem:[#allocation2 + $0x248] sm:$0xff]
      %v517 = vld [vmem:[#allocation2 + $0x250] sm:$0xff]
      %v518 = vld [vmem:[#allocation2 + $0x258] sm:$0xff]
      %v519 = vld [vmem:[#allocation2 + $0x260] sm:$0xff]
      %v520 = vld [vmem:[#allocation2 + $0x268] sm:$0xff]
      %v521 = vld [vmem:[#allocation2 + $0x270] sm:$0xff]
      %v522 = vld [vmem:[#allocation2 + $0x278] sm:$0xff]
      %v523 = vld [vmem:[#allocation2 + $0x280] sm:$0xff]
      %v524 = vld [vmem:[#allocation2 + $0x288] sm:$0xff]
      %v525 = vld [vmem:[#allocation2 + $0x290] sm:$0xff]
      %v526 = vld [vmem:[#allocation2 + $0x298] sm:$0xff]
      %v527 = vld [vmem:[#allocation2 + $0x2a0] sm:$0xff]
      %v528 = vld [vmem:[#allocation2 + $0x2a8] sm:$0xff]
      %v529 = vld [vmem:[#allocation2 + $0x2b0] sm:$0xff]
      %v530 = vld [vmem:[#allocation2 + $0x2b8] sm:$0xff]
      %v531 = vld [vmem:[#allocation2 + $0x2c0] sm:$0xff]
      %v532 = vld [vmem:[#allocation2 + $0x2c8] sm:$0xff]
      %v533 = vld [vmem:[#allocation2 + $0x2d0] sm:$0xff]
      %v534 = vld [vmem:[#allocation2 + $0x2d8] sm:$0xff]
      %v535 = vld [vmem:[#allocation2 + $0x2e0] sm:$0xff]
      %v536 = vld [vmem:[#allocation2 + $0x2e8] sm:$0xff]
      %v537 = vld [vmem:[#allocation2 + $0x2f0] sm:$0xff]
      %v538 = vld [vmem:[#allocation2 + $0x2f8] sm:$0xff]
      %v539 = vld [vmem:[#allocation2 + $0x300] sm:$0xff]
      %v540 = vld [vmem:[#allocation2 + $0x308] sm:$0xff]
      %v541 = vld [vmem:[#allocation2 + $0x310] sm:$0xff]
      %v542 = vld [vmem:[#allocation2 + $0x318] sm:$0xff]
      %v543 = vld [vmem:[#allocation2 + $0x320] sm:$0xff]
      %v544 = vld [vmem:[#allocation2 + $0x328] sm:$0xff]
      %v545 = vld [vmem:[#allocation2 + $0x330] sm:$0xff]
      %v546 = vld [vmem:[#allocation2 + $0x338] sm:$0xff]
      %v547 = vld [vmem:[#allocation2 + $0x340] sm:$0xff]
      %v548 = vld [vmem:[#allocation2 + $0x348] sm:$0xff]
      %v549 = vld [vmem:[#allocation2 + $0x350] sm:$0xff]
      %v550 = vld [vmem:[#allocation2 + $0x358] sm:$0xff]
      %v551 = vld [vmem:[#allocation2 + $0x360] sm:$0xff]
      %v552 = vld [vmem:[#allocation2 + $0x368] sm:$0xff]
      %v553 = vld [vmem:[#allocation2 + $0x370] sm:$0xff]
      %v554 = vld [vmem:[#allocation2 + $0x378] sm:$0xff]
      %v555 = vld [vmem:[#allocation2 + $0x380] sm:$0xff]
      %v556 = vld [vmem:[#allocation2 + $0x388] sm:$0xff]
      %v557 = vld [vmem:[#allocation2 + $0x390] sm:$0xff]
      %v558 = vld [vmem:[#allocation2 + $0x398] sm:$0xff]
      %v559 = vld [vmem:[#allocation2 + $0x3a0] sm:$0xff]
      %v560 = vld [vmem:[#allocation2 + $0x3a8] sm:$0xff]
      %v561 = vld [vmem:[#allocation2 + $0x3b0] sm:$0xff]
      %v562 = vld [vmem:[#allocation2 + $0x3b8] sm:$0xff]
      %v563 = vld [vmem:[#allocation2 + $0x3c0] sm:$0xff]
      %v564 = vld [vmem:[#allocation2 + $0x3c8] sm:$0xff]
      %v565 = vld [vmem:[#allocation2 + $0x3d0] sm:$0xff]
      %v566 = vld [vmem:[#allocation2 + $0x3d8] sm:$0xff]
      %v567 = vld [vmem:[#allocation2 + $0x3e0] sm:$0xff]
      %v568 = vld [vmem:[#allocation2 + $0x3e8] sm:$0xff]
      %v569 = vld [vmem:[#allocation2 + $0x3f0] sm:$0xff]
      %v570 = vld [vmem:[#allocation2 + $0x3f8] sm:$0xff]
      %v571 = vld [vmem:[%s275] sm:$0xf]
      %v572 = vld [vmem:[%s275 + $0x4] sm:$0xf]
      %v573 = vld [vmem:[%s275 + $0x8] sm:$0xf]
      %v574 = vld [vmem:[%s275 + $0xc] sm:$0xf]
      %v575 = vld [vmem:[%s275 + $0x10] sm:$0xf]
      %v576 = vld [vmem:[%s275 + $0x14] sm:$0xf]
      %v577 = vld [vmem:[%s275 + $0x18] sm:$0xf]
      %v578 = vld [vmem:[%s275 + $0x1c] sm:$0xf]
      %v579 = vld [vmem:[%s275 + $0x20] sm:$0xf]
      %v580 = vld [vmem:[%s275 + $0x24] sm:$0xf]
      %v581 = vld [vmem:[%s275 + $0x28] sm:$0xf]
      %v582 = vld [vmem:[%s275 + $0x2c] sm:$0xf]
      %v583 = vld [vmem:[%s275 + $0x30] sm:$0xf]
      %v584 = vld [vmem:[%s275 + $0x34] sm:$0xf]
      %v585 = vld [vmem:[%s275 + $0x38] sm:$0xf]
      %v586 = vld [vmem:[%s275 + $0x3c] sm:$0xf]
      %v587 = vld [vmem:[%s275 + $0x40] sm:$0xf]
      %v588 = vld [vmem:[%s275 + $0x44] sm:$0xf]
      %v589 = vld [vmem:[%s275 + $0x48] sm:$0xf]
      %v590 = vld [vmem:[%s275 + $0x4c] sm:$0xf]
      %v591 = vld [vmem:[%s275 + $0x50] sm:$0xf]
      %v592 = vld [vmem:[%s275 + $0x54] sm:$0xf]
      %v593 = vld [vmem:[%s275 + $0x58] sm:$0xf]
      %v594 = vld [vmem:[%s275 + $0x5c] sm:$0xf]
      %v595 = vld [vmem:[%s275 + $0x60] sm:$0xf]
      %v596 = vld [vmem:[%s275 + $0x64] sm:$0xf]
      %v597 = vld [vmem:[%s275 + $0x68] sm:$0xf]
      %v598 = vld [vmem:[%s275 + $0x6c] sm:$0xf]
      %v599 = vld [vmem:[%s275 + $0x70] sm:$0xf]
      %v600 = vld [vmem:[%s275 + $0x74] sm:$0xf]
      %v601 = vld [vmem:[%s275 + $0x78] sm:$0xf]
      %v602 = vld [vmem:[%s275 + $0x7c] sm:$0xf]
      %v603 = vld [vmem:[%s275 + $0x80] sm:$0xf]
      %v604 = vld [vmem:[%s275 + $0x84] sm:$0xf]
      %v605 = vld [vmem:[%s275 + $0x88] sm:$0xf]
      %v606 = vld [vmem:[%s275 + $0x8c] sm:$0xf]
      %v607 = vld [vmem:[%s275 + $0x90] sm:$0xf]
      %v608 = vld [vmem:[%s275 + $0x94] sm:$0xf]
      %v609 = vld [vmem:[%s275 + $0x98] sm:$0xf]
      %v610 = vld [vmem:[%s275 + $0x9c] sm:$0xf]
      %v611 = vld [vmem:[%s275 + $0xa0] sm:$0xf]
      %v612 = vld [vmem:[%s275 + $0xa4] sm:$0xf]
      %v613 = vld [vmem:[%s275 + $0xa8] sm:$0xf]
      %v614 = vld [vmem:[%s275 + $0xac] sm:$0xf]
      %v615 = vld [vmem:[%s275 + $0xb0] sm:$0xf]
      %v616 = vld [vmem:[%s275 + $0xb4] sm:$0xf]
      %v617 = vld [vmem:[%s275 + $0xb8] sm:$0xf]
      %v618 = vld [vmem:[%s275 + $0xbc] sm:$0xf]
      %v619 = vld [vmem:[%s275 + $0xc0] sm:$0xf]
      %v620 = vld [vmem:[%s275 + $0xc4] sm:$0xf]
      %v621 = vld [vmem:[%s275 + $0xc8] sm:$0xf]
      %v622 = vld [vmem:[%s275 + $0xcc] sm:$0xf]
      %v623 = vld [vmem:[%s275 + $0xd0] sm:$0xf]
      %v624 = vld [vmem:[%s275 + $0xd4] sm:$0xf]
      %v625 = vld [vmem:[%s275 + $0xd8] sm:$0xf]
      %v626 = vld [vmem:[%s275 + $0xdc] sm:$0xf]
      %v627 = vld [vmem:[%s275 + $0xe0] sm:$0xf]
      %v628 = vld [vmem:[%s275 + $0xe4] sm:$0xf]
      %v629 = vld [vmem:[%s275 + $0xe8] sm:$0xf]
      %v630 = vld [vmem:[%s275 + $0xec] sm:$0xf]
      %v631 = vld [vmem:[%s275 + $0xf0] sm:$0xf]
      %v632 = vld [vmem:[%s275 + $0xf4] sm:$0xf]
      %v633 = vld [vmem:[%s275 + $0xf8] sm:$0xf]
      %v634 = vld [vmem:[%s275 + $0xfc] sm:$0xf]
      %v635 = vld [vmem:[%s275 + $0x100] sm:$0xf]
      %v636 = vld [vmem:[%s275 + $0x104] sm:$0xf]
      %v637 = vld [vmem:[%s275 + $0x108] sm:$0xf]
      %v638 = vld [vmem:[%s275 + $0x10c] sm:$0xf]
      %v639 = vld [vmem:[%s275 + $0x110] sm:$0xf]
      %v640 = vld [vmem:[%s275 + $0x114] sm:$0xf]
      %v641 = vld [vmem:[%s275 + $0x118] sm:$0xf]
      %v642 = vld [vmem:[%s275 + $0x11c] sm:$0xf]
      %v643 = vld [vmem:[%s275 + $0x120] sm:$0xf]
      %v644 = vld [vmem:[%s275 + $0x124] sm:$0xf]
      %v645 = vld [vmem:[%s275 + $0x128] sm:$0xf]
      %v646 = vld [vmem:[%s275 + $0x12c] sm:$0xf]
      %v647 = vld [vmem:[%s275 + $0x130] sm:$0xf]
      %v648 = vld [vmem:[%s275 + $0x134] sm:$0xf]
      %v649 = vld [vmem:[%s275 + $0x138] sm:$0xf]
      %v650 = vld [vmem:[%s275 + $0x13c] sm:$0xf]
      %v651 = vld [vmem:[%s275 + $0x140] sm:$0xf]
      %v652 = vld [vmem:[%s275 + $0x144] sm:$0xf]
      %v653 = vld [vmem:[%s275 + $0x148] sm:$0xf]
      %v654 = vld [vmem:[%s275 + $0x14c] sm:$0xf]
      %v655 = vld [vmem:[%s275 + $0x150] sm:$0xf]
      %v656 = vld [vmem:[%s275 + $0x154] sm:$0xf]
      %v657 = vld [vmem:[%s275 + $0x158] sm:$0xf]
      %v658 = vld [vmem:[%s275 + $0x15c] sm:$0xf]
      %v659 = vld [vmem:[%s275 + $0x160] sm:$0xf]
      %v660 = vld [vmem:[%s275 + $0x164] sm:$0xf]
      %v661 = vld [vmem:[%s275 + $0x168] sm:$0xf]
      %v662 = vld [vmem:[%s275 + $0x16c] sm:$0xf]
      %v663 = vld [vmem:[%s275 + $0x170] sm:$0xf]
      %v664 = vld [vmem:[%s275 + $0x174] sm:$0xf]
      %v665 = vld [vmem:[%s275 + $0x178] sm:$0xf]
      %v666 = vld [vmem:[%s275 + $0x17c] sm:$0xf]
      %v667 = vld [vmem:[%s275 + $0x180] sm:$0xf]
      %v668 = vld [vmem:[%s275 + $0x184] sm:$0xf]
      %v669 = vld [vmem:[%s275 + $0x188] sm:$0xf]
      %v670 = vld [vmem:[%s275 + $0x18c] sm:$0xf]
      %v671 = vld [vmem:[%s275 + $0x190] sm:$0xf]
      %v672 = vld [vmem:[%s275 + $0x194] sm:$0xf]
      %v673 = vld [vmem:[%s275 + $0x198] sm:$0xf]
      %v674 = vld [vmem:[%s275 + $0x19c] sm:$0xf]
      %v675 = vld [vmem:[%s275 + $0x1a0] sm:$0xf]
      %v676 = vld [vmem:[%s275 + $0x1a4] sm:$0xf]
      %v677 = vld [vmem:[%s275 + $0x1a8] sm:$0xf]
      %v678 = vld [vmem:[%s275 + $0x1ac] sm:$0xf]
      %v679 = vld [vmem:[%s275 + $0x1b0] sm:$0xf]
      %v680 = vld [vmem:[%s275 + $0x1b4] sm:$0xf]
      %v681 = vld [vmem:[%s275 + $0x1b8] sm:$0xf]
      %v682 = vld [vmem:[%s275 + $0x1bc] sm:$0xf]
      %v683 = vld [vmem:[%s275 + $0x1c0] sm:$0xf]
      %v684 = vld [vmem:[%s275 + $0x1c4] sm:$0xf]
      %v685 = vld [vmem:[%s275 + $0x1c8] sm:$0xf]
      %v686 = vld [vmem:[%s275 + $0x1cc] sm:$0xf]
      %v687 = vld [vmem:[%s275 + $0x1d0] sm:$0xf]
      %v688 = vld [vmem:[%s275 + $0x1d4] sm:$0xf]
      %v689 = vld [vmem:[%s275 + $0x1d8] sm:$0xf]
      %v690 = vld [vmem:[%s275 + $0x1dc] sm:$0xf]
      %v691 = vld [vmem:[%s275 + $0x1e0] sm:$0xf]
      %v692 = vld [vmem:[%s275 + $0x1e4] sm:$0xf]
      %v693 = vld [vmem:[%s275 + $0x1e8] sm:$0xf]
      %v694 = vld [vmem:[%s275 + $0x1ec] sm:$0xf]
      %v695 = vld [vmem:[%s275 + $0x1f0] sm:$0xf]
      %v696 = vld [vmem:[%s275 + $0x1f4] sm:$0xf]
      %v697 = vld [vmem:[%s275 + $0x1f8] sm:$0xf]
      %v698 = vld [vmem:[%s275 + $0x1fc] sm:$0xf]
      %v699 = vld [vmem:[%s284] sm:$0xf]
      %v700 = vld [vmem:[%s284 + $0x4] sm:$0xf]
      %v701 = vld [vmem:[%s284 + $0x8] sm:$0xf]
      %v702 = vld [vmem:[%s284 + $0xc] sm:$0x3]
      %v831 = vunpack.c.l.b16 %v571
      %v832 = vunpack.c.l.b16 %v572
      %v833 = vunpack.c.l.b16 %v573
      %v834 = vunpack.c.l.b16 %v574
      %v835 = vunpack.c.l.b16 %v575
      %v836 = vunpack.c.l.b16 %v576
      %v837 = vunpack.c.l.b16 %v577
      %v838 = vunpack.c.l.b16 %v578
      %v839 = vunpack.c.l.b16 %v579
      %v840 = vunpack.c.l.b16 %v580
      %v841 = vunpack.c.l.b16 %v581
      %v842 = vunpack.c.l.b16 %v582
      %v843 = vunpack.c.l.b16 %v583
      %v844 = vunpack.c.l.b16 %v584
      %v845 = vunpack.c.l.b16 %v585
      %v846 = vunpack.c.l.b16 %v586
      %v847 = vunpack.c.l.b16 %v587
      %v848 = vunpack.c.l.b16 %v588
      %v849 = vunpack.c.l.b16 %v589
      %v850 = vunpack.c.l.b16 %v590
      %v851 = vunpack.c.l.b16 %v591
      %v852 = vunpack.c.l.b16 %v592
      %v853 = vunpack.c.l.b16 %v593
      %v854 = vunpack.c.l.b16 %v594
      %v855 = vunpack.c.l.b16 %v595
      %v856 = vunpack.c.l.b16 %v596
      %v857 = vunpack.c.l.b16 %v597
      %v858 = vunpack.c.l.b16 %v598
      %v859 = vunpack.c.l.b16 %v599
      %v860 = vunpack.c.l.b16 %v600
      %v861 = vunpack.c.l.b16 %v601
      %v862 = vunpack.c.l.b16 %v602
      %v863 = vunpack.c.l.b16 %v603
      %v864 = vunpack.c.l.b16 %v604
      %v865 = vunpack.c.l.b16 %v605
      %v866 = vunpack.c.l.b16 %v606
      %v867 = vunpack.c.l.b16 %v607
      %v868 = vunpack.c.l.b16 %v608
      %v869 = vunpack.c.l.b16 %v609
      %v870 = vunpack.c.l.b16 %v610
      %v871 = vunpack.c.l.b16 %v611
      %v872 = vunpack.c.l.b16 %v612
      %v873 = vunpack.c.l.b16 %v613
      %v874 = vunpack.c.l.b16 %v614
      %v875 = vunpack.c.l.b16 %v615
      %v876 = vunpack.c.l.b16 %v616
      %v877 = vunpack.c.l.b16 %v617
      %v878 = vunpack.c.l.b16 %v618
      %v879 = vunpack.c.l.b16 %v619
      %v880 = vunpack.c.l.b16 %v620
      %v881 = vunpack.c.l.b16 %v621
      %v882 = vunpack.c.l.b16 %v622
      %v883 = vunpack.c.l.b16 %v623
      %v884 = vunpack.c.l.b16 %v624
      %v885 = vunpack.c.l.b16 %v625
      %v886 = vunpack.c.l.b16 %v626
      %v887 = vunpack.c.l.b16 %v627
      %v888 = vunpack.c.l.b16 %v628
      %v889 = vunpack.c.l.b16 %v629
      %v890 = vunpack.c.l.b16 %v630
      %v891 = vunpack.c.l.b16 %v631
      %v892 = vunpack.c.l.b16 %v632
      %v893 = vunpack.c.l.b16 %v633
      %v894 = vunpack.c.l.b16 %v634
      %v895 = vunpack.c.l.b16 %v635
      %v896 = vunpack.c.l.b16 %v636
      %v897 = vunpack.c.l.b16 %v637
      %v898 = vunpack.c.l.b16 %v638
      %v899 = vunpack.c.l.b16 %v639
      %v900 = vunpack.c.l.b16 %v640
      %v901 = vunpack.c.l.b16 %v641
      %v902 = vunpack.c.l.b16 %v642
      %v903 = vunpack.c.l.b16 %v643
      %v904 = vunpack.c.l.b16 %v644
      %v905 = vunpack.c.l.b16 %v645
      %v906 = vunpack.c.l.b16 %v646
      %v907 = vunpack.c.l.b16 %v647
      %v908 = vunpack.c.l.b16 %v648
      %v909 = vunpack.c.l.b16 %v649
      %v910 = vunpack.c.l.b16 %v650
      %v911 = vunpack.c.l.b16 %v651
      %v912 = vunpack.c.l.b16 %v652
      %v913 = vunpack.c.l.b16 %v653
      %v914 = vunpack.c.l.b16 %v654
      %v915 = vunpack.c.l.b16 %v655
      %v916 = vunpack.c.l.b16 %v656
      %v917 = vunpack.c.l.b16 %v657
      %v918 = vunpack.c.l.b16 %v658
      %v919 = vunpack.c.l.b16 %v659
      %v920 = vunpack.c.l.b16 %v660
      %v921 = vunpack.c.l.b16 %v661
      %v922 = vunpack.c.l.b16 %v662
      %v923 = vunpack.c.l.b16 %v663
      %v924 = vunpack.c.l.b16 %v664
      %v925 = vunpack.c.l.b16 %v665
      %v926 = vunpack.c.l.b16 %v666
      %v927 = vunpack.c.l.b16 %v667
      %v928 = vunpack.c.l.b16 %v668
      %v929 = vunpack.c.l.b16 %v669
      %v930 = vunpack.c.l.b16 %v670
      %v931 = vunpack.c.l.b16 %v671
      %v932 = vunpack.c.l.b16 %v672
      %v933 = vunpack.c.l.b16 %v673
      %v934 = vunpack.c.l.b16 %v674
      %v935 = vunpack.c.l.b16 %v675
      %v936 = vunpack.c.l.b16 %v676
      %v937 = vunpack.c.l.b16 %v677
      %v938 = vunpack.c.l.b16 %v678
      %v939 = vunpack.c.l.b16 %v679
      %v940 = vunpack.c.l.b16 %v680
      %v941 = vunpack.c.l.b16 %v681
      %v942 = vunpack.c.l.b16 %v682
      %v943 = vunpack.c.l.b16 %v683
      %v944 = vunpack.c.l.b16 %v684
      %v945 = vunpack.c.l.b16 %v685
      %v946 = vunpack.c.l.b16 %v686
      %v947 = vunpack.c.l.b16 %v687
      %v948 = vunpack.c.l.b16 %v688
      %v949 = vunpack.c.l.b16 %v689
      %v950 = vunpack.c.l.b16 %v690
      %v951 = vunpack.c.l.b16 %v691
      %v952 = vunpack.c.l.b16 %v692
      %v953 = vunpack.c.l.b16 %v693
      %v954 = vunpack.c.l.b16 %v694
      %v955 = vunpack.c.l.b16 %v695
      %v956 = vunpack.c.l.b16 %v696
      %v957 = vunpack.c.l.b16 %v697
      %v958 = vunpack.c.l.b16 %v698
      %v959 = vpack.c.b16 %v832, %v831
      %v960 = vpack.c.b16 %v834, %v833
      %v961 = vpack.c.b16 %v836, %v835
      %v962 = vpack.c.b16 %v838, %v837
      %v963 = vpack.c.b16 %v840, %v839
      %v964 = vpack.c.b16 %v842, %v841
      %v965 = vpack.c.b16 %v844, %v843
      %v966 = vpack.c.b16 %v846, %v845
      %v967 = vpack.c.b16 %v848, %v847
      %v968 = vpack.c.b16 %v850, %v849
      %v969 = vpack.c.b16 %v852, %v851
      %v970 = vpack.c.b16 %v854, %v853
      %v971 = vpack.c.b16 %v856, %v855
      %v972 = vpack.c.b16 %v858, %v857
      %v973 = vpack.c.b16 %v860, %v859
      %v974 = vpack.c.b16 %v862, %v861
      %v975 = vpack.c.b16 %v864, %v863
      %v976 = vpack.c.b16 %v866, %v865
      %v977 = vpack.c.b16 %v868, %v867
      %v978 = vpack.c.b16 %v870, %v869
      %v979 = vpack.c.b16 %v872, %v871
      %v980 = vpack.c.b16 %v874, %v873
      %v981 = vpack.c.b16 %v876, %v875
      %v982 = vpack.c.b16 %v878, %v877
      %v983 = vpack.c.b16 %v880, %v879
      %v984 = vpack.c.b16 %v882, %v881
      %v985 = vpack.c.b16 %v884, %v883
      %v986 = vpack.c.b16 %v886, %v885
      %v987 = vpack.c.b16 %v888, %v887
      %v988 = vpack.c.b16 %v890, %v889
      %v989 = vpack.c.b16 %v892, %v891
      %v990 = vpack.c.b16 %v894, %v893
      %v991 = vpack.c.b16 %v896, %v895
      %v992 = vpack.c.b16 %v898, %v897
      %v993 = vpack.c.b16 %v900, %v899
      %v994 = vpack.c.b16 %v902, %v901
      %v995 = vpack.c.b16 %v904, %v903
      %v996 = vpack.c.b16 %v906, %v905
      %v997 = vpack.c.b16 %v908, %v907
      %v998 = vpack.c.b16 %v910, %v909
      %v999 = vpack.c.b16 %v912, %v911
      %v1000 = vpack.c.b16 %v914, %v913
      %v1001 = vpack.c.b16 %v916, %v915
      %v1002 = vpack.c.b16 %v918, %v917
      %v1003 = vpack.c.b16 %v920, %v919
      %v1004 = vpack.c.b16 %v922, %v921
      %v1005 = vpack.c.b16 %v924, %v923
      %v1006 = vpack.c.b16 %v926, %v925
      %v1007 = vpack.c.b16 %v928, %v927
      %v1008 = vpack.c.b16 %v930, %v929
      %v1009 = vpack.c.b16 %v932, %v931
      %v1010 = vpack.c.b16 %v934, %v933
      %v1011 = vpack.c.b16 %v936, %v935
      %v1012 = vpack.c.b16 %v938, %v937
      %v1013 = vpack.c.b16 %v940, %v939
      %v1014 = vpack.c.b16 %v942, %v941
      %v1015 = vpack.c.b16 %v944, %v943
      %v1016 = vpack.c.b16 %v946, %v945
      %v1017 = vpack.c.b16 %v948, %v947
      %v1018 = vpack.c.b16 %v950, %v949
      %v1019 = vpack.c.b16 %v952, %v951
      %v1020 = vpack.c.b16 %v954, %v953
      %v1021 = vpack.c.b16 %v956, %v955
      %v1022 = vpack.c.b16 %v958, %v957
      %v1027 = vunpack.c.l.b16 %v699
      %v1028 = vunpack.c.l.b16 %v700
      %v1029 = vunpack.c.l.b16 %v701
      %v1030 = vunpack.c.l.b16 %v702
      %v1031 = vpack.c.b16 %v1028, %v1027
      %v1032 = vpack.c.b16 %v1030, %v1029
      %vm1034 = vcmask 220160
      %v1036 = vsel %vm1034, %v959, 0
      %v1039 = vsel %vm1034, %v960, 0
      %v1042 = vsel %vm1034, %v961, 0
      %v1045 = vsel %vm1034, %v962, 0
      %v1048 = vsel %vm1034, %v963, 0
      %v1051 = vsel %vm1034, %v964, 0
      %v1054 = vsel %vm1034, %v965, 0
      %v1057 = vsel %vm1034, %v966, 0
      %v1060 = vsel %vm1034, %v967, 0
      %v1063 = vsel %vm1034, %v968, 0
      %v1066 = vsel %vm1034, %v969, 0
      %v1069 = vsel %vm1034, %v970, 0
      %v1072 = vsel %vm1034, %v971, 0
      %v1075 = vsel %vm1034, %v972, 0
      %v1078 = vsel %vm1034, %v973, 0
      %v1081 = vsel %vm1034, %v974, 0
      %v1084 = vsel %vm1034, %v975, 0
      %v1087 = vsel %vm1034, %v976, 0
      %v1090 = vsel %vm1034, %v977, 0
      %v1093 = vsel %vm1034, %v978, 0
      %v1096 = vsel %vm1034, %v979, 0
      %v1099 = vsel %vm1034, %v980, 0
      %v1102 = vsel %vm1034, %v981, 0
      %v1105 = vsel %vm1034, %v982, 0
      %v1108 = vsel %vm1034, %v983, 0
      %v1111 = vsel %vm1034, %v984, 0
      %v1114 = vsel %vm1034, %v985, 0
      %v1117 = vsel %vm1034, %v986, 0
      %v1120 = vsel %vm1034, %v987, 0
      %v1123 = vsel %vm1034, %v988, 0
      %v1126 = vsel %vm1034, %v989, 0
      %v1129 = vsel %vm1034, %v990, 0
      %v1132 = vsel %vm1034, %v991, 0
      %v1135 = vsel %vm1034, %v992, 0
      %v1138 = vsel %vm1034, %v993, 0
      %v1141 = vsel %vm1034, %v994, 0
      %v1144 = vsel %vm1034, %v995, 0
      %v1147 = vsel %vm1034, %v996, 0
      %v1150 = vsel %vm1034, %v997, 0
      %v1153 = vsel %vm1034, %v998, 0
      %v1156 = vsel %vm1034, %v999, 0
      %v1159 = vsel %vm1034, %v1000, 0
      %v1162 = vsel %vm1034, %v1001, 0
      %v1165 = vsel %vm1034, %v1002, 0
      %v1168 = vsel %vm1034, %v1003, 0
      %v1171 = vsel %vm1034, %v1004, 0
      %v1174 = vsel %vm1034, %v1005, 0
      %v1177 = vsel %vm1034, %v1006, 0
      %v1180 = vsel %vm1034, %v1007, 0
      %v1183 = vsel %vm1034, %v1008, 0
      %v1186 = vsel %vm1034, %v1009, 0
      %v1189 = vsel %vm1034, %v1010, 0
      %v1192 = vsel %vm1034, %v1011, 0
      %v1195 = vsel %vm1034, %v1012, 0
      %v1198 = vsel %vm1034, %v1013, 0
      %v1201 = vsel %vm1034, %v1014, 0
      %v1204 = vsel %vm1034, %v1015, 0
      %v1207 = vsel %vm1034, %v1016, 0
      %v1210 = vsel %vm1034, %v1017, 0
      %v1213 = vsel %vm1034, %v1018, 0
      %v1216 = vsel %vm1034, %v1019, 0
      %v1219 = vsel %vm1034, %v1020, 0
      %v1222 = vsel %vm1034, %v1021, 0
      %v1225 = vsel %vm1034, %v1022, 0
      %vm1227 = vcmask 1044480
      %vm1228 = vcmask 1045504
      %v1229 = vsel %vm1227, 4294967295, 65535
      %v1230 = vsel %vm1228, %v1229, 0
      %v1232 = vand.u32 %v1032, %v1230
      %1234 = vmatprep.subr.bf16.mxu0 0
      %1235 = vmatpush1.bf16.msra.mxu0 %v1031
      %1236 = vmatprep.subr.bf16.mxu0 0
      %1237 = vmatpush1.bf16.msra.mxu0 %v1232
      %1238 = vmatprep.subr.bf16.mxu0 0
      %1239 = vmatpush1.bf16.msra.mxu0 0
      %1240 = vmatprep.subr.bf16.mxu0 0
      %1241 = vmatpush1.bf16.msra.mxu0 0
      %1242 = vmatprep.subr.bf16.mxu0 0
      %1243 = vmatpush1.bf16.msra.mxu0 0
      %1244 = vmatprep.subr.bf16.mxu0 0
      %1245 = vmatpush1.bf16.msra.mxu0 0
      %1246 = vmatprep.subr.bf16.mxu0 0
      %1247 = vmatpush1.bf16.msra.mxu0 0
      %1248 = vmatprep.subr.bf16.mxu0 0
      %1249 = vmatpush1.bf16.msra.mxu0 0
      %1250 = vmatprep.subr.bf16.mxu0 0
      %1251 = vmatpush1.bf16.msra.mxu0 0
      %1252 = vmatprep.subr.bf16.mxu0 0
      %1253 = vmatpush1.bf16.msra.mxu0 0
      %1254 = vmatprep.subr.bf16.mxu0 0
      %1255 = vmatpush1.bf16.msra.mxu0 0
      %1256 = vmatprep.subr.bf16.mxu0 0
      %1257 = vmatpush1.bf16.msra.mxu0 0
      %1258 = vmatprep.subr.bf16.mxu0 0
      %1259 = vmatpush1.bf16.msra.mxu0 0
      %1260 = vmatprep.subr.bf16.mxu0 0
      %1261 = vmatpush1.bf16.msra.mxu0 0
      %1262 = vmatprep.subr.bf16.mxu0 0
      %1263 = vmatpush1.bf16.msra.mxu0 0
      %1264 = vmatprep.subr.bf16.mxu0 0
      %1265 = vmatpush1.bf16.msra.mxu0 0
      %1266 = vmatprep.mubr.bf16.mxu0 0
      %1267 = vmatmul.mubr.bf16.gmra.mrb[0].mxu0 %v1036
      %v1268 = vpop.f32.mrb[0].mxu0
      %v1269 = vadd.f32 0.0, %v1268
      %v1270 = vpop.f32.mrb[0].mxu0
      %v1271 = vpop.f32.mrb[0].mxu0
      %v1272 = vadd.f32 0.0, %v1271
      %v1273 = vpop.f32.mrb[0].mxu0
      %1274 = vmatprep.mubr.bf16.mxu0 0
      %1275 = vmatmul.mubr.bf16.gmra.mrb[0].mxu0 %v1039
      %v1276 = vpop.f32.mrb[0].mxu0
      %v1277 = vadd.f32 0.0, %v1276
      %v1278 = vpop.f32.mrb[0].mxu0
      %v1279 = vpop.f32.mrb[0].mxu0
      %v1280 = vadd.f32 0.0, %v1279
      %v1281 = vpop.f32.mrb[0].mxu0
      %1282 = vmatprep.mubr.bf16.mxu0 0
      %1283 = vmatmul.mubr.bf16.gmra.mrb[0].mxu0 %v1042
      %v1284 = vpop.f32.mrb[0].mxu0
      %v1285 = vadd.f32 0.0, %v1284
      %v1286 = vpop.f32.mrb[0].mxu0
      %v1287 = vpop.f32.mrb[0].mxu0
      %v1288 = vadd.f32 0.0, %v1287
      %v1289 = vpop.f32.mrb[0].mxu0
      %1290 = vmatprep.mubr.bf16.mxu0 0
      %1291 = vmatmul.mubr.bf16.gmra.mrb[0].mxu0 %v1045
      %v1292 = vpop.f32.mrb[0].mxu0
      %v1293 = vadd.f32 0.0, %v1292
      %v1294 = vpop.f32.mrb[0].mxu0
      %v1295 = vpop.f32.mrb[0].mxu0
      %v1296 = vadd.f32 0.0, %v1295
      %v1297 = vpop.f32.mrb[0].mxu0
      %1298 = vmatprep.mubr.bf16.mxu0 0
      %1299 = vmatmul.mubr.bf16.gmra.mrb[0].mxu0 %v1048
      %v1300 = vpop.f32.mrb[0].mxu0
      %v1301 = vadd.f32 0.0, %v1300
      %v1302 = vpop.f32.mrb[0].mxu0
      %v1303 = vpop.f32.mrb[0].mxu0
      %v1304 = vadd.f32 0.0, %v1303
      %v1305 = vpop.f32.mrb[0].mxu0
      %1306 = vmatprep.mubr.bf16.mxu0 0
      %1307 = vmatmul.mubr.bf16.gmra.mrb[0].mxu0 %v1051
      %v1308 = vpop.f32.mrb[0].mxu0
      %v1309 = vadd.f32 0.0, %v1308
      %v1310 = vpop.f32.mrb[0].mxu0
      %v1311 = vpop.f32.mrb[0].mxu0
      %v1312 = vadd.f32 0.0, %v1311
      %v1313 = vpop.f32.mrb[0].mxu0
      %1314 = vmatprep.mubr.bf16.mxu0 0
      %1315 = vmatmul.mubr.bf16.gmra.mrb[0].mxu0 %v1054
      %v1316 = vpop.f32.mrb[0].mxu0
      %v1317 = vadd.f32 0.0, %v1316
      %v1318 = vpop.f32.mrb[0].mxu0
      %v1319 = vpop.f32.mrb[0].mxu0
      %v1320 = vadd.f32 0.0, %v1319
      %v1321 = vpop.f32.mrb[0].mxu0
      %1322 = vmatprep.mubr.bf16.mxu0 0
      %1323 = vmatmul.mubr.bf16.gmra.mrb[0].mxu0 %v1057
      %v1324 = vpop.f32.mrb[0].mxu0
      %v1325 = vadd.f32 0.0, %v1324
      %v1326 = vpop.f32.mrb[0].mxu0
      %v1327 = vpop.f32.mrb[0].mxu0
      %v1328 = vadd.f32 0.0, %v1327
      %v1329 = vpop.f32.mrb[0].mxu0
      %1330 = vmatprep.mubr.bf16.mxu0 0
      %1331 = vmatmul.mubr.bf16.gmra.mrb[0].mxu0 %v1060
      %v1332 = vpop.f32.mrb[0].mxu0
      %v1333 = vadd.f32 0.0, %v1332
      %v1334 = vpop.f32.mrb[0].mxu0
      %v1335 = vpop.f32.mrb[0].mxu0
      %v1336 = vadd.f32 0.0, %v1335
      %v1337 = vpop.f32.mrb[0].mxu0
      %1338 = vmatprep.mubr.bf16.mxu0 0
      %1339 = vmatmul.mubr.bf16.gmra.mrb[0].mxu0 %v1063
      %v1340 = vpop.f32.mrb[0].mxu0
      %v1341 = vadd.f32 0.0, %v1340
      %v1342 = vpop.f32.mrb[0].mxu0
      %v1343 = vpop.f32.mrb[0].mxu0
      %v1344 = vadd.f32 0.0, %v1343
      %v1345 = vpop.f32.mrb[0].mxu0
      %1346 = vmatprep.mubr.bf16.mxu0 0
      %1347 = vmatmul.mubr.bf16.gmra.mrb[0].mxu0 %v1066
      %v1348 = vpop.f32.mrb[0].mxu0
      %v1349 = vadd.f32 0.0, %v1348
      %v1350 = vpop.f32.mrb[0].mxu0
      %v1351 = vpop.f32.mrb[0].mxu0
      %v1352 = vadd.f32 0.0, %v1351
      %v1353 = vpop.f32.mrb[0].mxu0
      %1354 = vmatprep.mubr.bf16.mxu0 0
      %1355 = vmatmul.mubr.bf16.gmra.mrb[0].mxu0 %v1069
      %v1356 = vpop.f32.mrb[0].mxu0
      %v1357 = vadd.f32 0.0, %v1356
      %v1358 = vpop.f32.mrb[0].mxu0
      %v1359 = vpop.f32.mrb[0].mxu0
      %v1360 = vadd.f32 0.0, %v1359
      %v1361 = vpop.f32.mrb[0].mxu0
      %1362 = vmatprep.mubr.bf16.mxu0 0
      %1363 = vmatmul.mubr.bf16.gmra.mrb[0].mxu0 %v1072
      %v1364 = vpop.f32.mrb[0].mxu0
      %v1365 = vadd.f32 0.0, %v1364
      %v1366 = vpop.f32.mrb[0].mxu0
      %v1367 = vpop.f32.mrb[0].mxu0
      %v1368 = vadd.f32 0.0, %v1367
      %v1369 = vpop.f32.mrb[0].mxu0
      %1370 = vmatprep.mubr.bf16.mxu0 0
      %1371 = vmatmul.mubr.bf16.gmra.mrb[0].mxu0 %v1075
      %v1372 = vpop.f32.mrb[0].mxu0
      %v1373 = vadd.f32 0.0, %v1372
      %v1374 = vpop.f32.mrb[0].mxu0
      %v1375 = vpop.f32.mrb[0].mxu0
      %v1376 = vadd.f32 0.0, %v1375
      %v1377 = vpop.f32.mrb[0].mxu0
      %1378 = vmatprep.mubr.bf16.mxu0 0
      %1379 = vmatmul.mubr.bf16.gmra.mrb[0].mxu0 %v1078
      %v1380 = vpop.f32.mrb[0].mxu0
      %v1381 = vadd.f32 0.0, %v1380
      %v1382 = vpop.f32.mrb[0].mxu0
      %v1383 = vpop.f32.mrb[0].mxu0
      %v1384 = vadd.f32 0.0, %v1383
      %v1385 = vpop.f32.mrb[0].mxu0
      %1386 = vmatprep.mubr.bf16.mxu0 0
      %1387 = vmatmul.mubr.bf16.gmra.mrb[0].mxu0 %v1081
      %v1388 = vpop.f32.mrb[0].mxu0
      %v1389 = vadd.f32 0.0, %v1388
      %v1390 = vpop.f32.mrb[0].mxu0
      %v1391 = vpop.f32.mrb[0].mxu0
      %v1392 = vadd.f32 0.0, %v1391
      %v1393 = vpop.f32.mrb[0].mxu0
      %1394 = vmatprep.mubr.bf16.mxu0 0
      %1395 = vmatmul.mubr.bf16.gmra.mrb[0].mxu0 %v1084
      %v1396 = vpop.f32.mrb[0].mxu0
      %v1397 = vadd.f32 0.0, %v1396
      %v1398 = vpop.f32.mrb[0].mxu0
      %v1399 = vpop.f32.mrb[0].mxu0
      %v1400 = vadd.f32 0.0, %v1399
      %v1401 = vpop.f32.mrb[0].mxu0
      %1402 = vmatprep.mubr.bf16.mxu0 0
      %1403 = vmatmul.mubr.bf16.gmra.mrb[0].mxu0 %v1087
      %v1404 = vpop.f32.mrb[0].mxu0
      %v1405 = vadd.f32 0.0, %v1404
      %v1406 = vpop.f32.mrb[0].mxu0
      %v1407 = vpop.f32.mrb[0].mxu0
      %v1408 = vadd.f32 0.0, %v1407
      %v1409 = vpop.f32.mrb[0].mxu0
      %1410 = vmatprep.mubr.bf16.mxu0 0
      %1411 = vmatmul.mubr.bf16.gmra.mrb[0].mxu0 %v1090
      %v1412 = vpop.f32.mrb[0].mxu0
      %v1413 = vadd.f32 0.0, %v1412
      %v1414 = vpop.f32.mrb[0].mxu0
      %v1415 = vpop.f32.mrb[0].mxu0
      %v1416 = vadd.f32 0.0, %v1415
      %v1417 = vpop.f32.mrb[0].mxu0
      %1418 = vmatprep.mubr.bf16.mxu0 0
      %1419 = vmatmul.mubr.bf16.gmra.mrb[0].mxu0 %v1093
      %v1420 = vpop.f32.mrb[0].mxu0
      %v1421 = vadd.f32 0.0, %v1420
      %v1422 = vpop.f32.mrb[0].mxu0
      %v1423 = vpop.f32.mrb[0].mxu0
      %v1424 = vadd.f32 0.0, %v1423
      %v1425 = vpop.f32.mrb[0].mxu0
      %1426 = vmatprep.mubr.bf16.mxu0 0
      %1427 = vmatmul.mubr.bf16.gmra.mrb[0].mxu0 %v1096
      %v1428 = vpop.f32.mrb[0].mxu0
      %v1429 = vadd.f32 0.0, %v1428
      %v1430 = vpop.f32.mrb[0].mxu0
      %v1431 = vpop.f32.mrb[0].mxu0
      %v1432 = vadd.f32 0.0, %v1431
      %v1433 = vpop.f32.mrb[0].mxu0
      %1434 = vmatprep.mubr.bf16.mxu0 0
      %1435 = vmatmul.mubr.bf16.gmra.mrb[0].mxu0 %v1099
      %v1436 = vpop.f32.mrb[0].mxu0
      %v1437 = vadd.f32 0.0, %v1436
      %v1438 = vpop.f32.mrb[0].mxu0
      %v1439 = vpop.f32.mrb[0].mxu0
      %v1440 = vadd.f32 0.0, %v1439
      %v1441 = vpop.f32.mrb[0].mxu0
      %1442 = vmatprep.mubr.bf16.mxu0 0
      %1443 = vmatmul.mubr.bf16.gmra.mrb[0].mxu0 %v1102
      %v1444 = vpop.f32.mrb[0].mxu0
      %v1445 = vadd.f32 0.0, %v1444
      %v1446 = vpop.f32.mrb[0].mxu0
      %v1447 = vpop.f32.mrb[0].mxu0
      %v1448 = vadd.f32 0.0, %v1447
      %v1449 = vpop.f32.mrb[0].mxu0
      %1450 = vmatprep.mubr.bf16.mxu0 0
      %1451 = vmatmul.mubr.bf16.gmra.mrb[0].mxu0 %v1105
      %v1452 = vpop.f32.mrb[0].mxu0
      %v1453 = vadd.f32 0.0, %v1452
      %v1454 = vpop.f32.mrb[0].mxu0
      %v1455 = vpop.f32.mrb[0].mxu0
      %v1456 = vadd.f32 0.0, %v1455
      %v1457 = vpop.f32.mrb[0].mxu0
      %1458 = vmatprep.mubr.bf16.mxu0 0
      %1459 = vmatmul.mubr.bf16.gmra.mrb[0].mxu0 %v1108
      %v1460 = vpop.f32.mrb[0].mxu0
      %v1461 = vadd.f32 0.0, %v1460
      %v1462 = vpop.f32.mrb[0].mxu0
      %v1463 = vpop.f32.mrb[0].mxu0
      %v1464 = vadd.f32 0.0, %v1463
      %v1465 = vpop.f32.mrb[0].mxu0
      %1466 = vmatprep.mubr.bf16.mxu0 0
      %1467 = vmatmul.mubr.bf16.gmra.mrb[0].mxu0 %v1111
      %v1468 = vpop.f32.mrb[0].mxu0
      %v1469 = vadd.f32 0.0, %v1468
      %v1470 = vpop.f32.mrb[0].mxu0
      %v1471 = vpop.f32.mrb[0].mxu0
      %v1472 = vadd.f32 0.0, %v1471
      %v1473 = vpop.f32.mrb[0].mxu0
      %1474 = vmatprep.mubr.bf16.mxu0 0
      %1475 = vmatmul.mubr.bf16.gmra.mrb[0].mxu0 %v1114
      %v1476 = vpop.f32.mrb[0].mxu0
      %v1477 = vadd.f32 0.0, %v1476
      %v1478 = vpop.f32.mrb[0].mxu0
      %v1479 = vpop.f32.mrb[0].mxu0
      %v1480 = vadd.f32 0.0, %v1479
      %v1481 = vpop.f32.mrb[0].mxu0
      %1482 = vmatprep.mubr.bf16.mxu0 0
      %1483 = vmatmul.mubr.bf16.gmra.mrb[0].mxu0 %v1117
      %v1484 = vpop.f32.mrb[0].mxu0
      %v1485 = vadd.f32 0.0, %v1484
      %v1486 = vpop.f32.mrb[0].mxu0
      %v1487 = vpop.f32.mrb[0].mxu0
      %v1488 = vadd.f32 0.0, %v1487
      %v1489 = vpop.f32.mrb[0].mxu0
      %1490 = vmatprep.mubr.bf16.mxu0 0
      %1491 = vmatmul.mubr.bf16.gmra.mrb[0].mxu0 %v1120
      %v1492 = vpop.f32.mrb[0].mxu0
      %v1493 = vadd.f32 0.0, %v1492
      %v1494 = vpop.f32.mrb[0].mxu0
      %v1495 = vpop.f32.mrb[0].mxu0
      %v1496 = vadd.f32 0.0, %v1495
      %v1497 = vpop.f32.mrb[0].mxu0
      %1498 = vmatprep.mubr.bf16.mxu0 0
      %1499 = vmatmul.mubr.bf16.gmra.mrb[0].mxu0 %v1123
      %v1500 = vpop.f32.mrb[0].mxu0
      %v1501 = vadd.f32 0.0, %v1500
      %v1502 = vpop.f32.mrb[0].mxu0
      %v1503 = vpop.f32.mrb[0].mxu0
      %v1504 = vadd.f32 0.0, %v1503
      %v1505 = vpop.f32.mrb[0].mxu0
      %1506 = vmatprep.mubr.bf16.mxu0 0
      %1507 = vmatmul.mubr.bf16.gmra.mrb[0].mxu0 %v1126
      %v1508 = vpop.f32.mrb[0].mxu0
      %v1509 = vadd.f32 0.0, %v1508
      %v1510 = vpop.f32.mrb[0].mxu0
      %v1511 = vpop.f32.mrb[0].mxu0
      %v1512 = vadd.f32 0.0, %v1511
      %v1513 = vpop.f32.mrb[0].mxu0
      %1514 = vmatprep.mubr.bf16.mxu0 0
      %1515 = vmatmul.mubr.bf16.gmra.mrb[0].mxu0 %v1129
      %v1516 = vpop.f32.mrb[0].mxu0
      %v1517 = vadd.f32 0.0, %v1516
      %v1518 = vpop.f32.mrb[0].mxu0
      %v1519 = vpop.f32.mrb[0].mxu0
      %v1520 = vadd.f32 0.0, %v1519
      %v1521 = vpop.f32.mrb[0].mxu0
      %1522 = vmatprep.mubr.bf16.mxu0 0
      %1523 = vmatmul.mubr.bf16.gmra.mrb[0].mxu0 %v1132
      %v1524 = vpop.f32.mrb[0].mxu0
      %v1525 = vadd.f32 0.0, %v1524
      %v1526 = vpop.f32.mrb[0].mxu0
      %v1527 = vpop.f32.mrb[0].mxu0
      %v1528 = vadd.f32 0.0, %v1527
      %v1529 = vpop.f32.mrb[0].mxu0
      %1530 = vmatprep.mubr.bf16.mxu0 0
      %1531 = vmatmul.mubr.bf16.gmra.mrb[0].mxu0 %v1135
      %v1532 = vpop.f32.mrb[0].mxu0
      %v1533 = vadd.f32 0.0, %v1532
      %v1534 = vpop.f32.mrb[0].mxu0
      %v1535 = vpop.f32.mrb[0].mxu0
      %v1536 = vadd.f32 0.0, %v1535
      %v1537 = vpop.f32.mrb[0].mxu0
      %1538 = vmatprep.mubr.bf16.mxu0 0
      %1539 = vmatmul.mubr.bf16.gmra.mrb[0].mxu0 %v1138
      %v1540 = vpop.f32.mrb[0].mxu0
      %v1541 = vadd.f32 0.0, %v1540
      %v1542 = vpop.f32.mrb[0].mxu0
      %v1543 = vpop.f32.mrb[0].mxu0
      %v1544 = vadd.f32 0.0, %v1543
      %v1545 = vpop.f32.mrb[0].mxu0
      %1546 = vmatprep.mubr.bf16.mxu0 0
      %1547 = vmatmul.mubr.bf16.gmra.mrb[0].mxu0 %v1141
      %v1548 = vpop.f32.mrb[0].mxu0
      %v1549 = vadd.f32 0.0, %v1548
      %v1550 = vpop.f32.mrb[0].mxu0
      %v1551 = vpop.f32.mrb[0].mxu0
      %v1552 = vadd.f32 0.0, %v1551
      %v1553 = vpop.f32.mrb[0].mxu0
      %1554 = vmatprep.mubr.bf16.mxu0 0
      %1555 = vmatmul.mubr.bf16.gmra.mrb[0].mxu0 %v1144
      %v1556 = vpop.f32.mrb[0].mxu0
      %v1557 = vadd.f32 0.0, %v1556
      %v1558 = vpop.f32.mrb[0].mxu0
      %v1559 = vpop.f32.mrb[0].mxu0
      %v1560 = vadd.f32 0.0, %v1559
      %v1561 = vpop.f32.mrb[0].mxu0
      %1562 = vmatprep.mubr.bf16.mxu0 0
      %1563 = vmatmul.mubr.bf16.gmra.mrb[0].mxu0 %v1147
      %v1564 = vpop.f32.mrb[0].mxu0
      %v1565 = vadd.f32 0.0, %v1564
      %v1566 = vpop.f32.mrb[0].mxu0
      %v1567 = vpop.f32.mrb[0].mxu0
      %v1568 = vadd.f32 0.0, %v1567
      %v1569 = vpop.f32.mrb[0].mxu0
      %1570 = vmatprep.mubr.bf16.mxu0 0
      %1571 = vmatmul.mubr.bf16.gmra.mrb[0].mxu0 %v1150
      %v1572 = vpop.f32.mrb[0].mxu0
      %v1573 = vadd.f32 0.0, %v1572
      %v1574 = vpop.f32.mrb[0].mxu0
      %v1575 = vpop.f32.mrb[0].mxu0
      %v1576 = vadd.f32 0.0, %v1575
      %v1577 = vpop.f32.mrb[0].mxu0
      %1578 = vmatprep.mubr.bf16.mxu0 0
      %1579 = vmatmul.mubr.bf16.gmra.mrb[0].mxu0 %v1153
      %v1580 = vpop.f32.mrb[0].mxu0
      %v1581 = vadd.f32 0.0, %v1580
      %v1582 = vpop.f32.mrb[0].mxu0
      %v1583 = vpop.f32.mrb[0].mxu0
      %v1584 = vadd.f32 0.0, %v1583
      %v1585 = vpop.f32.mrb[0].mxu0
      %1586 = vmatprep.mubr.bf16.mxu0 0
      %1587 = vmatmul.mubr.bf16.gmra.mrb[0].mxu0 %v1156
      %v1588 = vpop.f32.mrb[0].mxu0
      %v1589 = vadd.f32 0.0, %v1588
      %v1590 = vpop.f32.mrb[0].mxu0
      %v1591 = vpop.f32.mrb[0].mxu0
      %v1592 = vadd.f32 0.0, %v1591
      %v1593 = vpop.f32.mrb[0].mxu0
      %1594 = vmatprep.mubr.bf16.mxu0 0
      %1595 = vmatmul.mubr.bf16.gmra.mrb[0].mxu0 %v1159
      %v1596 = vpop.f32.mrb[0].mxu0
      %v1597 = vadd.f32 0.0, %v1596
      %v1598 = vpop.f32.mrb[0].mxu0
      %v1599 = vpop.f32.mrb[0].mxu0
      %v1600 = vadd.f32 0.0, %v1599
      %v1601 = vpop.f32.mrb[0].mxu0
      %1602 = vmatprep.mubr.bf16.mxu0 0
      %1603 = vmatmul.mubr.bf16.gmra.mrb[0].mxu0 %v1162
      %v1604 = vpop.f32.mrb[0].mxu0
      %v1605 = vadd.f32 0.0, %v1604
      %v1606 = vpop.f32.mrb[0].mxu0
      %v1607 = vpop.f32.mrb[0].mxu0
      %v1608 = vadd.f32 0.0, %v1607
      %v1609 = vpop.f32.mrb[0].mxu0
      %1610 = vmatprep.mubr.bf16.mxu0 0
      %1611 = vmatmul.mubr.bf16.gmra.mrb[0].mxu0 %v1165
      %v1612 = vpop.f32.mrb[0].mxu0
      %v1613 = vadd.f32 0.0, %v1612
      %v1614 = vpop.f32.mrb[0].mxu0
      %v1615 = vpop.f32.mrb[0].mxu0
      %v1616 = vadd.f32 0.0, %v1615
      %v1617 = vpop.f32.mrb[0].mxu0
      %1618 = vmatprep.mubr.bf16.mxu0 0
      %1619 = vmatmul.mubr.bf16.gmra.mrb[0].mxu0 %v1168
      %v1620 = vpop.f32.mrb[0].mxu0
      %v1621 = vadd.f32 0.0, %v1620
      %v1622 = vpop.f32.mrb[0].mxu0
      %v1623 = vpop.f32.mrb[0].mxu0
      %v1624 = vadd.f32 0.0, %v1623
      %v1625 = vpop.f32.mrb[0].mxu0
      %1626 = vmatprep.mubr.bf16.mxu0 0
      %1627 = vmatmul.mubr.bf16.gmra.mrb[0].mxu0 %v1171
      %v1628 = vpop.f32.mrb[0].mxu0
      %v1629 = vadd.f32 0.0, %v1628
      %v1630 = vpop.f32.mrb[0].mxu0
      %v1631 = vpop.f32.mrb[0].mxu0
      %v1632 = vadd.f32 0.0, %v1631
      %v1633 = vpop.f32.mrb[0].mxu0
      %1634 = vmatprep.mubr.bf16.mxu0 0
      %1635 = vmatmul.mubr.bf16.gmra.mrb[0].mxu0 %v1174
      %v1636 = vpop.f32.mrb[0].mxu0
      %v1637 = vadd.f32 0.0, %v1636
      %v1638 = vpop.f32.mrb[0].mxu0
      %v1639 = vpop.f32.mrb[0].mxu0
      %v1640 = vadd.f32 0.0, %v1639
      %v1641 = vpop.f32.mrb[0].mxu0
      %1642 = vmatprep.mubr.bf16.mxu0 0
      %1643 = vmatmul.mubr.bf16.gmra.mrb[0].mxu0 %v1177
      %v1644 = vpop.f32.mrb[0].mxu0
      %v1645 = vadd.f32 0.0, %v1644
      %v1646 = vpop.f32.mrb[0].mxu0
      %v1647 = vpop.f32.mrb[0].mxu0
      %v1648 = vadd.f32 0.0, %v1647
      %v1649 = vpop.f32.mrb[0].mxu0
      %1650 = vmatprep.mubr.bf16.mxu0 0
      %1651 = vmatmul.mubr.bf16.gmra.mrb[0].mxu0 %v1180
      %v1652 = vpop.f32.mrb[0].mxu0
      %v1653 = vadd.f32 0.0, %v1652
      %v1654 = vpop.f32.mrb[0].mxu0
      %v1655 = vpop.f32.mrb[0].mxu0
      %v1656 = vadd.f32 0.0, %v1655
      %v1657 = vpop.f32.mrb[0].mxu0
      %1658 = vmatprep.mubr.bf16.mxu0 0
      %1659 = vmatmul.mubr.bf16.gmra.mrb[0].mxu0 %v1183
      %v1660 = vpop.f32.mrb[0].mxu0
      %v1661 = vadd.f32 0.0, %v1660
      %v1662 = vpop.f32.mrb[0].mxu0
      %v1663 = vpop.f32.mrb[0].mxu0
      %v1664 = vadd.f32 0.0, %v1663
      %v1665 = vpop.f32.mrb[0].mxu0
      %1666 = vmatprep.mubr.bf16.mxu0 0
      %1667 = vmatmul.mubr.bf16.gmra.mrb[0].mxu0 %v1186
      %v1668 = vpop.f32.mrb[0].mxu0
      %v1669 = vadd.f32 0.0, %v1668
      %v1670 = vpop.f32.mrb[0].mxu0
      %v1671 = vpop.f32.mrb[0].mxu0
      %v1672 = vadd.f32 0.0, %v1671
      %v1673 = vpop.f32.mrb[0].mxu0
      %1674 = vmatprep.mubr.bf16.mxu0 0
      %1675 = vmatmul.mubr.bf16.gmra.mrb[0].mxu0 %v1189
      %v1676 = vpop.f32.mrb[0].mxu0
      %v1677 = vadd.f32 0.0, %v1676
      %v1678 = vpop.f32.mrb[0].mxu0
      %v1679 = vpop.f32.mrb[0].mxu0
      %v1680 = vadd.f32 0.0, %v1679
      %v1681 = vpop.f32.mrb[0].mxu0
      %1682 = vmatprep.mubr.bf16.mxu0 0
      %1683 = vmatmul.mubr.bf16.gmra.mrb[0].mxu0 %v1192
      %v1684 = vpop.f32.mrb[0].mxu0
      %v1685 = vadd.f32 0.0, %v1684
      %v1686 = vpop.f32.mrb[0].mxu0
      %v1687 = vpop.f32.mrb[0].mxu0
      %v1688 = vadd.f32 0.0, %v1687
      %v1689 = vpop.f32.mrb[0].mxu0
      %1690 = vmatprep.mubr.bf16.mxu0 0
      %1691 = vmatmul.mubr.bf16.gmra.mrb[0].mxu0 %v1195
      %v1692 = vpop.f32.mrb[0].mxu0
      %v1693 = vadd.f32 0.0, %v1692
      %v1694 = vpop.f32.mrb[0].mxu0
      %v1695 = vpop.f32.mrb[0].mxu0
      %v1696 = vadd.f32 0.0, %v1695
      %v1697 = vpop.f32.mrb[0].mxu0
      %1698 = vmatprep.mubr.bf16.mxu0 0
      %1699 = vmatmul.mubr.bf16.gmra.mrb[0].mxu0 %v1198
      %v1700 = vpop.f32.mrb[0].mxu0
      %v1701 = vadd.f32 0.0, %v1700
      %v1702 = vpop.f32.mrb[0].mxu0
      %v1703 = vpop.f32.mrb[0].mxu0
      %v1704 = vadd.f32 0.0, %v1703
      %v1705 = vpop.f32.mrb[0].mxu0
      %1706 = vmatprep.mubr.bf16.mxu0 0
      %1707 = vmatmul.mubr.bf16.gmra.mrb[0].mxu0 %v1201
      %v1708 = vpop.f32.mrb[0].mxu0
      %v1709 = vadd.f32 0.0, %v1708
      %v1710 = vpop.f32.mrb[0].mxu0
      %v1711 = vpop.f32.mrb[0].mxu0
      %v1712 = vadd.f32 0.0, %v1711
      %v1713 = vpop.f32.mrb[0].mxu0
      %1714 = vmatprep.mubr.bf16.mxu0 0
      %1715 = vmatmul.mubr.bf16.gmra.mrb[0].mxu0 %v1204
      %v1716 = vpop.f32.mrb[0].mxu0
      %v1717 = vadd.f32 0.0, %v1716
      %v1718 = vpop.f32.mrb[0].mxu0
      %v1719 = vpop.f32.mrb[0].mxu0
      %v1720 = vadd.f32 0.0, %v1719
      %v1721 = vpop.f32.mrb[0].mxu0
      %1722 = vmatprep.mubr.bf16.mxu0 0
      %1723 = vmatmul.mubr.bf16.gmra.mrb[0].mxu0 %v1207
      %v1724 = vpop.f32.mrb[0].mxu0
      %v1725 = vadd.f32 0.0, %v1724
      %v1726 = vpop.f32.mrb[0].mxu0
      %v1727 = vpop.f32.mrb[0].mxu0
      %v1728 = vadd.f32 0.0, %v1727
      %v1729 = vpop.f32.mrb[0].mxu0
      %1730 = vmatprep.mubr.bf16.mxu0 0
      %1731 = vmatmul.mubr.bf16.gmra.mrb[0].mxu0 %v1210
      %v1732 = vpop.f32.mrb[0].mxu0
      %v1733 = vadd.f32 0.0, %v1732
      %v1734 = vpop.f32.mrb[0].mxu0
      %v1735 = vpop.f32.mrb[0].mxu0
      %v1736 = vadd.f32 0.0, %v1735
      %v1737 = vpop.f32.mrb[0].mxu0
      %1738 = vmatprep.mubr.bf16.mxu0 0
      %1739 = vmatmul.mubr.bf16.gmra.mrb[0].mxu0 %v1213
      %v1740 = vpop.f32.mrb[0].mxu0
      %v1741 = vadd.f32 0.0, %v1740
      %v1742 = vpop.f32.mrb[0].mxu0
      %v1743 = vpop.f32.mrb[0].mxu0
      %v1744 = vadd.f32 0.0, %v1743
      %v1745 = vpop.f32.mrb[0].mxu0
      %1746 = vmatprep.mubr.bf16.mxu0 0
      %1747 = vmatmul.mubr.bf16.gmra.mrb[0].mxu0 %v1216
      %v1748 = vpop.f32.mrb[0].mxu0
      %v1749 = vadd.f32 0.0, %v1748
      %v1750 = vpop.f32.mrb[0].mxu0
      %v1751 = vpop.f32.mrb[0].mxu0
      %v1752 = vadd.f32 0.0, %v1751
      %v1753 = vpop.f32.mrb[0].mxu0
      %1754 = vmatprep.mubr.bf16.mxu0 0
      %1755 = vmatmul.mubr.bf16.gmra.mrb[0].mxu0 %v1219
      %v1756 = vpop.f32.mrb[0].mxu0
      %v1757 = vadd.f32 0.0, %v1756
      %v1758 = vpop.f32.mrb[0].mxu0
      %v1759 = vpop.f32.mrb[0].mxu0
      %v1760 = vadd.f32 0.0, %v1759
      %v1761 = vpop.f32.mrb[0].mxu0
      %1762 = vmatprep.mubr.bf16.mxu0 0
      %1763 = vmatmul.mubr.bf16.gmra.mrb[0].mxu0 %v1222
      %v1764 = vpop.f32.mrb[0].mxu0
      %v1765 = vadd.f32 0.0, %v1764
      %v1766 = vpop.f32.mrb[0].mxu0
      %v1767 = vpop.f32.mrb[0].mxu0
      %v1768 = vadd.f32 0.0, %v1767
      %v1769 = vpop.f32.mrb[0].mxu0
      %1770 = vmatprep.mubr.bf16.mxu0 0
      %1771 = vmatmul.mubr.bf16.gmra.mrb[0].mxu0 %v1225
      %v1772 = vpop.f32.mrb[0].mxu0
      %v1773 = vadd.f32 0.0, %v1772
      %v1774 = vpop.f32.mrb[0].mxu0
      %v1775 = vpop.f32.mrb[0].mxu0
      %v1776 = vadd.f32 0.0, %v1775
      %v1777 = vpop.f32.mrb[0].mxu0
      %1778 = vdwg.mxu0
      %v1779 = vadd.f32 %v443, %v1269
      %v1780 = vadd.f32 %v444, %v1272
      %v1781 = vadd.f32 %v445, %v1277
      %v1782 = vadd.f32 %v446, %v1280
      %v1783 = vadd.f32 %v447, %v1285
      %v1784 = vadd.f32 %v448, %v1288
      %v1785 = vadd.f32 %v449, %v1293
      %v1786 = vadd.f32 %v450, %v1296
      %v1787 = vadd.f32 %v451, %v1301
      %v1788 = vadd.f32 %v452, %v1304
      %v1789 = vadd.f32 %v453, %v1309
      %v1790 = vadd.f32 %v454, %v1312
      %v1791 = vadd.f32 %v455, %v1317
      %v1792 = vadd.f32 %v456, %v1320
      %v1793 = vadd.f32 %v457, %v1325
      %v1794 = vadd.f32 %v458, %v1328
      %v1795 = vadd.f32 %v459, %v1333
      %v1796 = vadd.f32 %v460, %v1336
      %v1797 = vadd.f32 %v461, %v1341
      %v1798 = vadd.f32 %v462, %v1344
      %v1799 = vadd.f32 %v463, %v1349
      %v1800 = vadd.f32 %v464, %v1352
      %v1801 = vadd.f32 %v465, %v1357
      %v1802 = vadd.f32 %v466, %v1360
      %v1803 = vadd.f32 %v467, %v1365
      %v1804 = vadd.f32 %v468, %v1368
      %v1805 = vadd.f32 %v469, %v1373
      %v1806 = vadd.f32 %v470, %v1376
      %v1807 = vadd.f32 %v471, %v1381
      %v1808 = vadd.f32 %v472, %v1384
      %v1809 = vadd.f32 %v473, %v1389
      %v1810 = vadd.f32 %v474, %v1392
      %v1811 = vadd.f32 %v475, %v1397
      %v1812 = vadd.f32 %v476, %v1400
      %v1813 = vadd.f32 %v477, %v1405
      %v1814 = vadd.f32 %v478, %v1408
      %v1815 = vadd.f32 %v479, %v1413
      %v1816 = vadd.f32 %v480, %v1416
      %v1817 = vadd.f32 %v481, %v1421
      %v1818 = vadd.f32 %v482, %v1424
      %v1819 = vadd.f32 %v483, %v1429
      %v1820 = vadd.f32 %v484, %v1432
      %v1821 = vadd.f32 %v485, %v1437
      %v1822 = vadd.f32 %v486, %v1440
      %v1823 = vadd.f32 %v487, %v1445
      %v1824 = vadd.f32 %v488, %v1448
      %v1825 = vadd.f32 %v489, %v1453
      %v1826 = vadd.f32 %v490, %v1456
      %v1827 = vadd.f32 %v491, %v1461
      %v1828 = vadd.f32 %v492, %v1464
      %v1829 = vadd.f32 %v493, %v1469
      %v1830 = vadd.f32 %v494, %v1472
      %v1831 = vadd.f32 %v495, %v1477
      %v1832 = vadd.f32 %v496, %v1480
      %v1833 = vadd.f32 %v497, %v1485
      %v1834 = vadd.f32 %v498, %v1488
      %v1835 = vadd.f32 %v499, %v1493
      %v1836 = vadd.f32 %v500, %v1496
      %v1837 = vadd.f32 %v501, %v1501
      %v1838 = vadd.f32 %v502, %v1504
      %v1839 = vadd.f32 %v503, %v1509
      %v1840 = vadd.f32 %v504, %v1512
      %v1841 = vadd.f32 %v505, %v1517
      %v1842 = vadd.f32 %v506, %v1520
      %v1843 = vadd.f32 %v507, %v1525
      %v1844 = vadd.f32 %v508, %v1528
      %v1845 = vadd.f32 %v509, %v1533
      %v1846 = vadd.f32 %v510, %v1536
      %v1847 = vadd.f32 %v511, %v1541
      %v1848 = vadd.f32 %v512, %v1544
      %v1849 = vadd.f32 %v513, %v1549
      %v1850 = vadd.f32 %v514, %v1552
      %v1851 = vadd.f32 %v515, %v1557
      %v1852 = vadd.f32 %v516, %v1560
      %v1853 = vadd.f32 %v517, %v1565
      %v1854 = vadd.f32 %v518, %v1568
      %v1855 = vadd.f32 %v519, %v1573
      %v1856 = vadd.f32 %v520, %v1576
      %v1857 = vadd.f32 %v521, %v1581
      %v1858 = vadd.f32 %v522, %v1584
      %v1859 = vadd.f32 %v523, %v1589
      %v1860 = vadd.f32 %v524, %v1592
      %v1861 = vadd.f32 %v525, %v1597
      %v1862 = vadd.f32 %v526, %v1600
      %v1863 = vadd.f32 %v527, %v1605
      %v1864 = vadd.f32 %v528, %v1608
      %v1865 = vadd.f32 %v529, %v1613
      %v1866 = vadd.f32 %v530, %v1616
      %v1867 = vadd.f32 %v531, %v1621
      %v1868 = vadd.f32 %v532, %v1624
      %v1869 = vadd.f32 %v533, %v1629
      %v1870 = vadd.f32 %v534, %v1632
      %v1871 = vadd.f32 %v535, %v1637
      %v1872 = vadd.f32 %v536, %v1640
      %v1873 = vadd.f32 %v537, %v1645
      %v1874 = vadd.f32 %v538, %v1648
      %v1875 = vadd.f32 %v539, %v1653
      %v1876 = vadd.f32 %v540, %v1656
      %v1877 = vadd.f32 %v541, %v1661
      %v1878 = vadd.f32 %v542, %v1664
      %v1879 = vadd.f32 %v543, %v1669
      %v1880 = vadd.f32 %v544, %v1672
      %v1881 = vadd.f32 %v545, %v1677
      %v1882 = vadd.f32 %v546, %v1680
      %v1883 = vadd.f32 %v547, %v1685
      %v1884 = vadd.f32 %v548, %v1688
      %v1885 = vadd.f32 %v549, %v1693
      %v1886 = vadd.f32 %v550, %v1696
      %v1887 = vadd.f32 %v551, %v1701
      %v1888 = vadd.f32 %v552, %v1704
      %v1889 = vadd.f32 %v553, %v1709
      %v1890 = vadd.f32 %v554, %v1712
      %v1891 = vadd.f32 %v555, %v1717
      %v1892 = vadd.f32 %v556, %v1720
      %v1893 = vadd.f32 %v557, %v1725
      %v1894 = vadd.f32 %v558, %v1728
      %v1895 = vadd.f32 %v559, %v1733
      %v1896 = vadd.f32 %v560, %v1736
      %v1897 = vadd.f32 %v561, %v1741
      %v1898 = vadd.f32 %v562, %v1744
      %v1899 = vadd.f32 %v563, %v1749
      %v1900 = vadd.f32 %v564, %v1752
      %v1901 = vadd.f32 %v565, %v1757
      %v1902 = vadd.f32 %v566, %v1760
      %v1903 = vadd.f32 %v567, %v1765
      %v1904 = vadd.f32 %v568, %v1768
      %v1905 = vadd.f32 %v569, %v1773
      %v1906 = vadd.f32 %v570, %v1776
      %vm1907 = vcmask 130048
      %1908 = vst.msk [vmem:[#allocation2] sm:$0xff] %vm1907, %v1779
      %1909 = vst.msk [vmem:[#allocation2 + $0x8] sm:$0xff] %vm1907, %v1780
      %1910 = vst.msk [vmem:[#allocation2 + $0x10] sm:$0xff] %vm1907, %v1781
      %1911 = vst.msk [vmem:[#allocation2 + $0x18] sm:$0xff] %vm1907, %v1782
      %1912 = vst.msk [vmem:[#allocation2 + $0x20] sm:$0xff] %vm1907, %v1783
      %1913 = vst.msk [vmem:[#allocation2 + $0x28] sm:$0xff] %vm1907, %v1784
      %1914 = vst.msk [vmem:[#allocation2 + $0x30] sm:$0xff] %vm1907, %v1785
      %1915 = vst.msk [vmem:[#allocation2 + $0x38] sm:$0xff] %vm1907, %v1786
      %1916 = vst.msk [vmem:[#allocation2 + $0x40] sm:$0xff] %vm1907, %v1787
      %1917 = vst.msk [vmem:[#allocation2 + $0x48] sm:$0xff] %vm1907, %v1788
      %1918 = vst.msk [vmem:[#allocation2 + $0x50] sm:$0xff] %vm1907, %v1789
      %1919 = vst.msk [vmem:[#allocation2 + $0x58] sm:$0xff] %vm1907, %v1790
      %1920 = vst.msk [vmem:[#allocation2 + $0x60] sm:$0xff] %vm1907, %v1791
      %1921 = vst.msk [vmem:[#allocation2 + $0x68] sm:$0xff] %vm1907, %v1792
      %1922 = vst.msk [vmem:[#allocation2 + $0x70] sm:$0xff] %vm1907, %v1793
      %1923 = vst.msk [vmem:[#allocation2 + $0x78] sm:$0xff] %vm1907, %v1794
      %1924 = vst.msk [vmem:[#allocation2 + $0x80] sm:$0xff] %vm1907, %v1795
      %1925 = vst.msk [vmem:[#allocation2 + $0x88] sm:$0xff] %vm1907, %v1796
      %1926 = vst.msk [vmem:[#allocation2 + $0x90] sm:$0xff] %vm1907, %v1797
      %1927 = vst.msk [vmem:[#allocation2 + $0x98] sm:$0xff] %vm1907, %v1798
      %1928 = vst.msk [vmem:[#allocation2 + $0xa0] sm:$0xff] %vm1907, %v1799
      %1929 = vst.msk [vmem:[#allocation2 + $0xa8] sm:$0xff] %vm1907, %v1800
      %1930 = vst.msk [vmem:[#allocation2 + $0xb0] sm:$0xff] %vm1907, %v1801
      %1931 = vst.msk [vmem:[#allocation2 + $0xb8] sm:$0xff] %vm1907, %v1802
      %1932 = vst.msk [vmem:[#allocation2 + $0xc0] sm:$0xff] %vm1907, %v1803
      %1933 = vst.msk [vmem:[#allocation2 + $0xc8] sm:$0xff] %vm1907, %v1804
      %1934 = vst.msk [vmem:[#allocation2 + $0xd0] sm:$0xff] %vm1907, %v1805
      %1935 = vst.msk [vmem:[#allocation2 + $0xd8] sm:$0xff] %vm1907, %v1806
      %1936 = vst.msk [vmem:[#allocation2 + $0xe0] sm:$0xff] %vm1907, %v1807
      %1937 = vst.msk [vmem:[#allocation2 + $0xe8] sm:$0xff] %vm1907, %v1808
      %1938 = vst.msk [vmem:[#allocation2 + $0xf0] sm:$0xff] %vm1907, %v1809
      %1939 = vst.msk [vmem:[#allocation2 + $0xf8] sm:$0xff] %vm1907, %v1810
      %1940 = vst.msk [vmem:[#allocation2 + $0x100] sm:$0xff] %vm1907, %v1811
      %1941 = vst.msk [vmem:[#allocation2 + $0x108] sm:$0xff] %vm1907, %v1812
      %1942 = vst.msk [vmem:[#allocation2 + $0x110] sm:$0xff] %vm1907, %v1813
      %1943 = vst.msk [vmem:[#allocation2 + $0x118] sm:$0xff] %vm1907, %v1814
      %1944 = vst.msk [vmem:[#allocation2 + $0x120] sm:$0xff] %vm1907, %v1815
      %1945 = vst.msk [vmem:[#allocation2 + $0x128] sm:$0xff] %vm1907, %v1816
      %1946 = vst.msk [vmem:[#allocation2 + $0x130] sm:$0xff] %vm1907, %v1817
      %1947 = vst.msk [vmem:[#allocation2 + $0x138] sm:$0xff] %vm1907, %v1818
      %1948 = vst.msk [vmem:[#allocation2 + $0x140] sm:$0xff] %vm1907, %v1819
      %1949 = vst.msk [vmem:[#allocation2 + $0x148] sm:$0xff] %vm1907, %v1820
      %1950 = vst.msk [vmem:[#allocation2 + $0x150] sm:$0xff] %vm1907, %v1821
      %1951 = vst.msk [vmem:[#allocation2 + $0x158] sm:$0xff] %vm1907, %v1822
      %1952 = vst.msk [vmem:[#allocation2 + $0x160] sm:$0xff] %vm1907, %v1823
      %1953 = vst.msk [vmem:[#allocation2 + $0x168] sm:$0xff] %vm1907, %v1824
      %1954 = vst.msk [vmem:[#allocation2 + $0x170] sm:$0xff] %vm1907, %v1825
      %1955 = vst.msk [vmem:[#allocation2 + $0x178] sm:$0xff] %vm1907, %v1826
      %1956 = vst.msk [vmem:[#allocation2 + $0x180] sm:$0xff] %vm1907, %v1827
      %1957 = vst.msk [vmem:[#allocation2 + $0x188] sm:$0xff] %vm1907, %v1828
      %1958 = vst.msk [vmem:[#allocation2 + $0x190] sm:$0xff] %vm1907, %v1829
      %1959 = vst.msk [vmem:[#allocation2 + $0x198] sm:$0xff] %vm1907, %v1830
      %1960 = vst.msk [vmem:[#allocation2 + $0x1a0] sm:$0xff] %vm1907, %v1831
      %1961 = vst.msk [vmem:[#allocation2 + $0x1a8] sm:$0xff] %vm1907, %v1832
      %1962 = vst.msk [vmem:[#allocation2 + $0x1b0] sm:$0xff] %vm1907, %v1833
      %1963 = vst.msk [vmem:[#allocation2 + $0x1b8] sm:$0xff] %vm1907, %v1834
      %1964 = vst.msk [vmem:[#allocation2 + $0x1c0] sm:$0xff] %vm1907, %v1835
      %1965 = vst.msk [vmem:[#allocation2 + $0x1c8] sm:$0xff] %vm1907, %v1836
      %1966 = vst.msk [vmem:[#allocation2 + $0x1d0] sm:$0xff] %vm1907, %v1837
      %1967 = vst.msk [vmem:[#allocation2 + $0x1d8] sm:$0xff] %vm1907, %v1838
      %1968 = vst.msk [vmem:[#allocation2 + $0x1e0] sm:$0xff] %vm1907, %v1839
      %1969 = vst.msk [vmem:[#allocation2 + $0x1e8] sm:$0xff] %vm1907, %v1840
      %1970 = vst.msk [vmem:[#allocation2 + $0x1f0] sm:$0xff] %vm1907, %v1841
      %1971 = vst.msk [vmem:[#allocation2 + $0x1f8] sm:$0xff] %vm1907, %v1842
      %1972 = vst.msk [vmem:[#allocation2 + $0x200] sm:$0xff] %vm1907, %v1843
      %1973 = vst.msk [vmem:[#allocation2 + $0x208] sm:$0xff] %vm1907, %v1844
      %1974 = vst.msk [vmem:[#allocation2 + $0x210] sm:$0xff] %vm1907, %v1845
      %1975 = vst.msk [vmem:[#allocation2 + $0x218] sm:$0xff] %vm1907, %v1846
      %1976 = vst.msk [vmem:[#allocation2 + $0x220] sm:$0xff] %vm1907, %v1847
      %1977 = vst.msk [vmem:[#allocation2 + $0x228] sm:$0xff] %vm1907, %v1848
      %1978 = vst.msk [vmem:[#allocation2 + $0x230] sm:$0xff] %vm1907, %v1849
      %1979 = vst.msk [vmem:[#allocation2 + $0x238] sm:$0xff] %vm1907, %v1850
      %1980 = vst.msk [vmem:[#allocation2 + $0x240] sm:$0xff] %vm1907, %v1851
      %1981 = vst.msk [vmem:[#allocation2 + $0x248] sm:$0xff] %vm1907, %v1852
      %1982 = vst.msk [vmem:[#allocation2 + $0x250] sm:$0xff] %vm1907, %v1853
      %1983 = vst.msk [vmem:[#allocation2 + $0x258] sm:$0xff] %vm1907, %v1854
      %1984 = vst.msk [vmem:[#allocation2 + $0x260] sm:$0xff] %vm1907, %v1855
      %1985 = vst.msk [vmem:[#allocation2 + $0x268] sm:$0xff] %vm1907, %v1856
      %1986 = vst.msk [vmem:[#allocation2 + $0x270] sm:$0xff] %vm1907, %v1857
      %1987 = vst.msk [vmem:[#allocation2 + $0x278] sm:$0xff] %vm1907, %v1858
      %1988 = vst.msk [vmem:[#allocation2 + $0x280] sm:$0xff] %vm1907, %v1859
      %1989 = vst.msk [vmem:[#allocation2 + $0x288] sm:$0xff] %vm1907, %v1860
      %1990 = vst.msk [vmem:[#allocation2 + $0x290] sm:$0xff] %vm1907, %v1861
      %1991 = vst.msk [vmem:[#allocation2 + $0x298] sm:$0xff] %vm1907, %v1862
      %1992 = vst.msk [vmem:[#allocation2 + $0x2a0] sm:$0xff] %vm1907, %v1863
      %1993 = vst.msk [vmem:[#allocation2 + $0x2a8] sm:$0xff] %vm1907, %v1864
      %1994 = vst.msk [vmem:[#allocation2 + $0x2b0] sm:$0xff] %vm1907, %v1865
      %1995 = vst.msk [vmem:[#allocation2 + $0x2b8] sm:$0xff] %vm1907, %v1866
      %1996 = vst.msk [vmem:[#allocation2 + $0x2c0] sm:$0xff] %vm1907, %v1867
      %1997 = vst.msk [vmem:[#allocation2 + $0x2c8] sm:$0xff] %vm1907, %v1868
      %1998 = vst.msk [vmem:[#allocation2 + $0x2d0] sm:$0xff] %vm1907, %v1869
      %1999 = vst.msk [vmem:[#allocation2 + $0x2d8] sm:$0xff] %vm1907, %v1870
      %2000 = vst.msk [vmem:[#allocation2 + $0x2e0] sm:$0xff] %vm1907, %v1871
      %2001 = vst.msk [vmem:[#allocation2 + $0x2e8] sm:$0xff] %vm1907, %v1872
      %2002 = vst.msk [vmem:[#allocation2 + $0x2f0] sm:$0xff] %vm1907, %v1873
      %2003 = vst.msk [vmem:[#allocation2 + $0x2f8] sm:$0xff] %vm1907, %v1874
      %2004 = vst.msk [vmem:[#allocation2 + $0x300] sm:$0xff] %vm1907, %v1875
      %2005 = vst.msk [vmem:[#allocation2 + $0x308] sm:$0xff] %vm1907, %v1876
      %2006 = vst.msk [vmem:[#allocation2 + $0x310] sm:$0xff] %vm1907, %v1877
      %2007 = vst.msk [vmem:[#allocation2 + $0x318] sm:$0xff] %vm1907, %v1878
      %2008 = vst.msk [vmem:[#allocation2 + $0x320] sm:$0xff] %vm1907, %v1879
      %2009 = vst.msk [vmem:[#allocation2 + $0x328] sm:$0xff] %vm1907, %v1880
      %2010 = vst.msk [vmem:[#allocation2 + $0x330] sm:$0xff] %vm1907, %v1881
      %2011 = vst.msk [vmem:[#allocation2 + $0x338] sm:$0xff] %vm1907, %v1882
      %2012 = vst.msk [vmem:[#allocation2 + $0x340] sm:$0xff] %vm1907, %v1883
      %2013 = vst.msk [vmem:[#allocation2 + $0x348] sm:$0xff] %vm1907, %v1884
      %2014 = vst.msk [vmem:[#allocation2 + $0x350] sm:$0xff] %vm1907, %v1885
      %2015 = vst.msk [vmem:[#allocation2 + $0x358] sm:$0xff] %vm1907, %v1886
      %2016 = vst.msk [vmem:[#allocation2 + $0x360] sm:$0xff] %vm1907, %v1887
      %2017 = vst.msk [vmem:[#allocation2 + $0x368] sm:$0xff] %vm1907, %v1888
      %2018 = vst.msk [vmem:[#allocation2 + $0x370] sm:$0xff] %vm1907, %v1889
      %2019 = vst.msk [vmem:[#allocation2 + $0x378] sm:$0xff] %vm1907, %v1890
      %2020 = vst.msk [vmem:[#allocation2 + $0x380] sm:$0xff] %vm1907, %v1891
      %2021 = vst.msk [vmem:[#allocation2 + $0x388] sm:$0xff] %vm1907, %v1892
      %2022 = vst.msk [vmem:[#allocation2 + $0x390] sm:$0xff] %vm1907, %v1893
      %2023 = vst.msk [vmem:[#allocation2 + $0x398] sm:$0xff] %vm1907, %v1894
      %2024 = vst.msk [vmem:[#allocation2 + $0x3a0] sm:$0xff] %vm1907, %v1895
      %2025 = vst.msk [vmem:[#allocation2 + $0x3a8] sm:$0xff] %vm1907, %v1896
      %2026 = vst.msk [vmem:[#allocation2 + $0x3b0] sm:$0xff] %vm1907, %v1897
      %2027 = vst.msk [vmem:[#allocation2 + $0x3b8] sm:$0xff] %vm1907, %v1898
      %2028 = vst.msk [vmem:[#allocation2 + $0x3c0] sm:$0xff] %vm1907, %v1899
      %2029 = vst.msk [vmem:[#allocation2 + $0x3c8] sm:$0xff] %vm1907, %v1900
      %2030 = vst.msk [vmem:[#allocation2 + $0x3d0] sm:$0xff] %vm1907, %v1901
      %2031 = vst.msk [vmem:[#allocation2 + $0x3d8] sm:$0xff] %vm1907, %v1902
      %2032 = vst.msk [vmem:[#allocation2 + $0x3e0] sm:$0xff] %vm1907, %v1903
      %2033 = vst.msk [vmem:[#allocation2 + $0x3e8] sm:$0xff] %vm1907, %v1904
      %2034 = vst.msk [vmem:[#allocation2 + $0x3f0] sm:$0xff] %vm1907, %v1905
      %2035 = vst.msk [vmem:[#allocation2 + $0x3f8] sm:$0xff] %vm1907, %v1906
      // Predicated region
      $region33: #{pallas_matmul.1} parent=27 // pred_check
        %p2036 = pneg %p310
      $region34: #{pallas_matmul.1} parent=27 // pred_check_branch
        %2038 = sbr.rel (%p2036) target = $region36
      $region35: #{pallas_matmul.1} parent=27 // pred_region
        %v2039 = vld [vmem:[#allocation2] sm:$0xff]
        %v2040 = vld [vmem:[#allocation2 + $0x8] sm:$0xff]
        %v2041 = vld [vmem:[#allocation2 + $0x10] sm:$0xff]
        %v2042 = vld [vmem:[#allocation2 + $0x18] sm:$0xff]
        %v2043 = vld [vmem:[#allocation2 + $0x20] sm:$0xff]
        %v2044 = vld [vmem:[#allocation2 + $0x28] sm:$0xff]
        %v2045 = vld [vmem:[#allocation2 + $0x30] sm:$0xff]
        %v2046 = vld [vmem:[#allocation2 + $0x38] sm:$0xff]
        %v2047 = vld [vmem:[#allocation2 + $0x40] sm:$0xff]
        %v2048 = vld [vmem:[#allocation2 + $0x48] sm:$0xff]
        %v2049 = vld [vmem:[#allocation2 + $0x50] sm:$0xff]
        %v2050 = vld [vmem:[#allocation2 + $0x58] sm:$0xff]
        %v2051 = vld [vmem:[#allocation2 + $0x60] sm:$0xff]
        %v2052 = vld [vmem:[#allocation2 + $0x68] sm:$0xff]
        %v2053 = vld [vmem:[#allocation2 + $0x70] sm:$0xff]
        %v2054 = vld [vmem:[#allocation2 + $0x78] sm:$0xff]
        %v2055 = vld [vmem:[#allocation2 + $0x80] sm:$0xff]
        %v2056 = vld [vmem:[#allocation2 + $0x88] sm:$0xff]
        %v2057 = vld [vmem:[#allocation2 + $0x90] sm:$0xff]
        %v2058 = vld [vmem:[#allocation2 + $0x98] sm:$0xff]
        %v2059 = vld [vmem:[#allocation2 + $0xa0] sm:$0xff]
        %v2060 = vld [vmem:[#allocation2 + $0xa8] sm:$0xff]
        %v2061 = vld [vmem:[#allocation2 + $0xb0] sm:$0xff]
        %v2062 = vld [vmem:[#allocation2 + $0xb8] sm:$0xff]
        %v2063 = vld [vmem:[#allocation2 + $0xc0] sm:$0xff]
        %v2064 = vld [vmem:[#allocation2 + $0xc8] sm:$0xff]
        %v2065 = vld [vmem:[#allocation2 + $0xd0] sm:$0xff]
        %v2066 = vld [vmem:[#allocation2 + $0xd8] sm:$0xff]
        %v2067 = vld [vmem:[#allocation2 + $0xe0] sm:$0xff]
        %v2068 = vld [vmem:[#allocation2 + $0xe8] sm:$0xff]
        %v2069 = vld [vmem:[#allocation2 + $0xf0] sm:$0xff]
        %v2070 = vld [vmem:[#allocation2 + $0xf8] sm:$0xff]
        %v2071 = vld [vmem:[#allocation2 + $0x100] sm:$0xff]
        %v2072 = vld [vmem:[#allocation2 + $0x108] sm:$0xff]
        %v2073 = vld [vmem:[#allocation2 + $0x110] sm:$0xff]
        %v2074 = vld [vmem:[#allocation2 + $0x118] sm:$0xff]
        %v2075 = vld [vmem:[#allocation2 + $0x120] sm:$0xff]
        %v2076 = vld [vmem:[#allocation2 + $0x128] sm:$0xff]
        %v2077 = vld [vmem:[#allocation2 + $0x130] sm:$0xff]
        %v2078 = vld [vmem:[#allocation2 + $0x138] sm:$0xff]
        %v2079 = vld [vmem:[#allocation2 + $0x140] sm:$0xff]
        %v2080 = vld [vmem:[#allocation2 + $0x148] sm:$0xff]
        %v2081 = vld [vmem:[#allocation2 + $0x150] sm:$0xff]
        %v2082 = vld [vmem:[#allocation2 + $0x158] sm:$0xff]
        %v2083 = vld [vmem:[#allocation2 + $0x160] sm:$0xff]
        %v2084 = vld [vmem:[#allocation2 + $0x168] sm:$0xff]
        %v2085 = vld [vmem:[#allocation2 + $0x170] sm:$0xff]
        %v2086 = vld [vmem:[#allocation2 + $0x178] sm:$0xff]
        %v2087 = vld [vmem:[#allocation2 + $0x180] sm:$0xff]
        %v2088 = vld [vmem:[#allocation2 + $0x188] sm:$0xff]
        %v2089 = vld [vmem:[#allocation2 + $0x190] sm:$0xff]
        %v2090 = vld [vmem:[#allocation2 + $0x198] sm:$0xff]
        %v2091 = vld [vmem:[#allocation2 + $0x1a0] sm:$0xff]
        %v2092 = vld [vmem:[#allocation2 + $0x1a8] sm:$0xff]
        %v2093 = vld [vmem:[#allocation2 + $0x1b0] sm:$0xff]
        %v2094 = vld [vmem:[#allocation2 + $0x1b8] sm:$0xff]
        %v2095 = vld [vmem:[#allocation2 + $0x1c0] sm:$0xff]
        %v2096 = vld [vmem:[#allocation2 + $0x1c8] sm:$0xff]
        %v2097 = vld [vmem:[#allocation2 + $0x1d0] sm:$0xff]
        %v2098 = vld [vmem:[#allocation2 + $0x1d8] sm:$0xff]
        %v2099 = vld [vmem:[#allocation2 + $0x1e0] sm:$0xff]
        %v2100 = vld [vmem:[#allocation2 + $0x1e8] sm:$0xff]
        %v2101 = vld [vmem:[#allocation2 + $0x1f0] sm:$0xff]
        %v2102 = vld [vmem:[#allocation2 + $0x1f8] sm:$0xff]
        %v2103 = vld [vmem:[#allocation2 + $0x200] sm:$0xff]
        %v2104 = vld [vmem:[#allocation2 + $0x208] sm:$0xff]
        %v2105 = vld [vmem:[#allocation2 + $0x210] sm:$0xff]
        %v2106 = vld [vmem:[#allocation2 + $0x218] sm:$0xff]
        %v2107 = vld [vmem:[#allocation2 + $0x220] sm:$0xff]
        %v2108 = vld [vmem:[#allocation2 + $0x228] sm:$0xff]
        %v2109 = vld [vmem:[#allocation2 + $0x230] sm:$0xff]
        %v2110 = vld [vmem:[#allocation2 + $0x238] sm:$0xff]
        %v2111 = vld [vmem:[#allocation2 + $0x240] sm:$0xff]
        %v2112 = vld [vmem:[#allocation2 + $0x248] sm:$0xff]
        %v2113 = vld [vmem:[#allocation2 + $0x250] sm:$0xff]
        %v2114 = vld [vmem:[#allocation2 + $0x258] sm:$0xff]
        %v2115 = vld [vmem:[#allocation2 + $0x260] sm:$0xff]
        %v2116 = vld [vmem:[#allocation2 + $0x268] sm:$0xff]
        %v2117 = vld [vmem:[#allocation2 + $0x270] sm:$0xff]
        %v2118 = vld [vmem:[#allocation2 + $0x278] sm:$0xff]
        %v2119 = vld [vmem:[#allocation2 + $0x280] sm:$0xff]
        %v2120 = vld [vmem:[#allocation2 + $0x288] sm:$0xff]
        %v2121 = vld [vmem:[#allocation2 + $0x290] sm:$0xff]
        %v2122 = vld [vmem:[#allocation2 + $0x298] sm:$0xff]
        %v2123 = vld [vmem:[#allocation2 + $0x2a0] sm:$0xff]
        %v2124 = vld [vmem:[#allocation2 + $0x2a8] sm:$0xff]
        %v2125 = vld [vmem:[#allocation2 + $0x2b0] sm:$0xff]
        %v2126 = vld [vmem:[#allocation2 + $0x2b8] sm:$0xff]
        %v2127 = vld [vmem:[#allocation2 + $0x2c0] sm:$0xff]
        %v2128 = vld [vmem:[#allocation2 + $0x2c8] sm:$0xff]
        %v2129 = vld [vmem:[#allocation2 + $0x2d0] sm:$0xff]
        %v2130 = vld [vmem:[#allocation2 + $0x2d8] sm:$0xff]
        %v2131 = vld [vmem:[#allocation2 + $0x2e0] sm:$0xff]
        %v2132 = vld [vmem:[#allocation2 + $0x2e8] sm:$0xff]
        %v2133 = vld [vmem:[#allocation2 + $0x2f0] sm:$0xff]
        %v2134 = vld [vmem:[#allocation2 + $0x2f8] sm:$0xff]
        %v2135 = vld [vmem:[#allocation2 + $0x300] sm:$0xff]
        %v2136 = vld [vmem:[#allocation2 + $0x308] sm:$0xff]
        %v2137 = vld [vmem:[#allocation2 + $0x310] sm:$0xff]
        %v2138 = vld [vmem:[#allocation2 + $0x318] sm:$0xff]
        %v2139 = vld [vmem:[#allocation2 + $0x320] sm:$0xff]
        %v2140 = vld [vmem:[#allocation2 + $0x328] sm:$0xff]
        %v2141 = vld [vmem:[#allocation2 + $0x330] sm:$0xff]
        %v2142 = vld [vmem:[#allocation2 + $0x338] sm:$0xff]
        %v2143 = vld [vmem:[#allocation2 + $0x340] sm:$0xff]
        %v2144 = vld [vmem:[#allocation2 + $0x348] sm:$0xff]
        %v2145 = vld [vmem:[#allocation2 + $0x350] sm:$0xff]
        %v2146 = vld [vmem:[#allocation2 + $0x358] sm:$0xff]
        %v2147 = vld [vmem:[#allocation2 + $0x360] sm:$0xff]
        %v2148 = vld [vmem:[#allocation2 + $0x368] sm:$0xff]
        %v2149 = vld [vmem:[#allocation2 + $0x370] sm:$0xff]
        %v2150 = vld [vmem:[#allocation2 + $0x378] sm:$0xff]
        %v2151 = vld [vmem:[#allocation2 + $0x380] sm:$0xff]
        %v2152 = vld [vmem:[#allocation2 + $0x388] sm:$0xff]
        %v2153 = vld [vmem:[#allocation2 + $0x390] sm:$0xff]
        %v2154 = vld [vmem:[#allocation2 + $0x398] sm:$0xff]
        %v2155 = vld [vmem:[#allocation2 + $0x3a0] sm:$0xff]
        %v2156 = vld [vmem:[#allocation2 + $0x3a8] sm:$0xff]
        %v2157 = vld [vmem:[#allocation2 + $0x3b0] sm:$0xff]
        %v2158 = vld [vmem:[#allocation2 + $0x3b8] sm:$0xff]
        %v2159 = vld [vmem:[#allocation2 + $0x3c0] sm:$0xff]
        %v2160 = vld [vmem:[#allocation2 + $0x3c8] sm:$0xff]
        %v2161 = vld [vmem:[#allocation2 + $0x3d0] sm:$0xff]
        %v2162 = vld [vmem:[#allocation2 + $0x3d8] sm:$0xff]
        %v2163 = vld [vmem:[#allocation2 + $0x3e0] sm:$0xff]
        %v2164 = vld [vmem:[#allocation2 + $0x3e8] sm:$0xff]
        %v2165 = vld [vmem:[#allocation2 + $0x3f0] sm:$0xff]
        %v2166 = vld [vmem:[#allocation2 + $0x3f8] sm:$0xff]
        %v2167 = vpack.c.bf16 %v2040, %v2039
        %v2168 = vpack.c.bf16 %v2042, %v2041
        %v2169 = vpack.c.bf16 %v2044, %v2043
        %v2170 = vpack.c.bf16 %v2046, %v2045
        %v2171 = vpack.c.bf16 %v2048, %v2047
        %v2172 = vpack.c.bf16 %v2050, %v2049
        %v2173 = vpack.c.bf16 %v2052, %v2051
        %v2174 = vpack.c.bf16 %v2054, %v2053
        %v2175 = vpack.c.bf16 %v2056, %v2055
        %v2176 = vpack.c.bf16 %v2058, %v2057
        %v2177 = vpack.c.bf16 %v2060, %v2059
        %v2178 = vpack.c.bf16 %v2062, %v2061
        %v2179 = vpack.c.bf16 %v2064, %v2063
        %v2180 = vpack.c.bf16 %v2066, %v2065
        %v2181 = vpack.c.bf16 %v2068, %v2067
        %v2182 = vpack.c.bf16 %v2070, %v2069
        %v2183 = vpack.c.bf16 %v2072, %v2071
        %v2184 = vpack.c.bf16 %v2074, %v2073
        %v2185 = vpack.c.bf16 %v2076, %v2075
        %v2186 = vpack.c.bf16 %v2078, %v2077
        %v2187 = vpack.c.bf16 %v2080, %v2079
        %v2188 = vpack.c.bf16 %v2082, %v2081
        %v2189 = vpack.c.bf16 %v2084, %v2083
        %v2190 = vpack.c.bf16 %v2086, %v2085
        %v2191 = vpack.c.bf16 %v2088, %v2087
        %v2192 = vpack.c.bf16 %v2090, %v2089
        %v2193 = vpack.c.bf16 %v2092, %v2091
        %v2194 = vpack.c.bf16 %v2094, %v2093
        %v2195 = vpack.c.bf16 %v2096, %v2095
        %v2196 = vpack.c.bf16 %v2098, %v2097
        %v2197 = vpack.c.bf16 %v2100, %v2099
        %v2198 = vpack.c.bf16 %v2102, %v2101
        %v2199 = vpack.c.bf16 %v2104, %v2103
        %v2200 = vpack.c.bf16 %v2106, %v2105
        %v2201 = vpack.c.bf16 %v2108, %v2107
        %v2202 = vpack.c.bf16 %v2110, %v2109
        %v2203 = vpack.c.bf16 %v2112, %v2111
        %v2204 = vpack.c.bf16 %v2114, %v2113
        %v2205 = vpack.c.bf16 %v2116, %v2115
        %v2206 = vpack.c.bf16 %v2118, %v2117
        %v2207 = vpack.c.bf16 %v2120, %v2119
        %v2208 = vpack.c.bf16 %v2122, %v2121
        %v2209 = vpack.c.bf16 %v2124, %v2123
        %v2210 = vpack.c.bf16 %v2126, %v2125
        %v2211 = vpack.c.bf16 %v2128, %v2127
        %v2212 = vpack.c.bf16 %v2130, %v2129
        %v2213 = vpack.c.bf16 %v2132, %v2131
        %v2214 = vpack.c.bf16 %v2134, %v2133
        %v2215 = vpack.c.bf16 %v2136, %v2135
        %v2216 = vpack.c.bf16 %v2138, %v2137
        %v2217 = vpack.c.bf16 %v2140, %v2139
        %v2218 = vpack.c.bf16 %v2142, %v2141
        %v2219 = vpack.c.bf16 %v2144, %v2143
        %v2220 = vpack.c.bf16 %v2146, %v2145
        %v2221 = vpack.c.bf16 %v2148, %v2147
        %v2222 = vpack.c.bf16 %v2150, %v2149
        %v2223 = vpack.c.bf16 %v2152, %v2151
        %v2224 = vpack.c.bf16 %v2154, %v2153
        %v2225 = vpack.c.bf16 %v2156, %v2155
        %v2226 = vpack.c.bf16 %v2158, %v2157
        %v2227 = vpack.c.bf16 %v2160, %v2159
        %v2228 = vpack.c.bf16 %v2162, %v2161
        %v2229 = vpack.c.bf16 %v2164, %v2163
        %v2230 = vpack.c.bf16 %v2166, %v2165
        %v2295 = vunpack.c.l.b16 %v2167
        %v2296 = vunpack.c.h.b16 %v2167
        %v2297 = vunpack.c.l.b16 %v2168
        %v2298 = vunpack.c.h.b16 %v2168
        %v2299 = vunpack.c.l.b16 %v2169
        %v2300 = vunpack.c.h.b16 %v2169
        %v2301 = vunpack.c.l.b16 %v2170
        %v2302 = vunpack.c.h.b16 %v2170
        %v2303 = vunpack.c.l.b16 %v2171
        %v2304 = vunpack.c.h.b16 %v2171
        %v2305 = vunpack.c.l.b16 %v2172
        %v2306 = vunpack.c.h.b16 %v2172
        %v2307 = vunpack.c.l.b16 %v2173
        %v2308 = vunpack.c.h.b16 %v2173
        %v2309 = vunpack.c.l.b16 %v2174
        %v2310 = vunpack.c.h.b16 %v2174
        %v2311 = vunpack.c.l.b16 %v2175
        %v2312 = vunpack.c.h.b16 %v2175
        %v2313 = vunpack.c.l.b16 %v2176
        %v2314 = vunpack.c.h.b16 %v2176
        %v2315 = vunpack.c.l.b16 %v2177
        %v2316 = vunpack.c.h.b16 %v2177
        %v2317 = vunpack.c.l.b16 %v2178
        %v2318 = vunpack.c.h.b16 %v2178
        %v2319 = vunpack.c.l.b16 %v2179
        %v2320 = vunpack.c.h.b16 %v2179
        %v2321 = vunpack.c.l.b16 %v2180
        %v2322 = vunpack.c.h.b16 %v2180
        %v2323 = vunpack.c.l.b16 %v2181
        %v2324 = vunpack.c.h.b16 %v2181
        %v2325 = vunpack.c.l.b16 %v2182
        %v2326 = vunpack.c.h.b16 %v2182
        %v2327 = vunpack.c.l.b16 %v2183
        %v2328 = vunpack.c.h.b16 %v2183
        %v2329 = vunpack.c.l.b16 %v2184
        %v2330 = vunpack.c.h.b16 %v2184
        %v2331 = vunpack.c.l.b16 %v2185
        %v2332 = vunpack.c.h.b16 %v2185
        %v2333 = vunpack.c.l.b16 %v2186
        %v2334 = vunpack.c.h.b16 %v2186
        %v2335 = vunpack.c.l.b16 %v2187
        %v2336 = vunpack.c.h.b16 %v2187
        %v2337 = vunpack.c.l.b16 %v2188
        %v2338 = vunpack.c.h.b16 %v2188
        %v2339 = vunpack.c.l.b16 %v2189
        %v2340 = vunpack.c.h.b16 %v2189
        %v2341 = vunpack.c.l.b16 %v2190
        %v2342 = vunpack.c.h.b16 %v2190
        %v2343 = vunpack.c.l.b16 %v2191
        %v2344 = vunpack.c.h.b16 %v2191
        %v2345 = vunpack.c.l.b16 %v2192
        %v2346 = vunpack.c.h.b16 %v2192
        %v2347 = vunpack.c.l.b16 %v2193
        %v2348 = vunpack.c.h.b16 %v2193
        %v2349 = vunpack.c.l.b16 %v2194
        %v2350 = vunpack.c.h.b16 %v2194
        %v2351 = vunpack.c.l.b16 %v2195
        %v2352 = vunpack.c.h.b16 %v2195
        %v2353 = vunpack.c.l.b16 %v2196
        %v2354 = vunpack.c.h.b16 %v2196
        %v2355 = vunpack.c.l.b16 %v2197
        %v2356 = vunpack.c.h.b16 %v2197
        %v2357 = vunpack.c.l.b16 %v2198
        %v2358 = vunpack.c.h.b16 %v2198
        %v2359 = vunpack.c.l.b16 %v2199
        %v2360 = vunpack.c.h.b16 %v2199
        %v2361 = vunpack.c.l.b16 %v2200
        %v2362 = vunpack.c.h.b16 %v2200
        %v2363 = vunpack.c.l.b16 %v2201
        %v2364 = vunpack.c.h.b16 %v2201
        %v2365 = vunpack.c.l.b16 %v2202
        %v2366 = vunpack.c.h.b16 %v2202
        %v2367 = vunpack.c.l.b16 %v2203
        %v2368 = vunpack.c.h.b16 %v2203
        %v2369 = vunpack.c.l.b16 %v2204
        %v2370 = vunpack.c.h.b16 %v2204
        %v2371 = vunpack.c.l.b16 %v2205
        %v2372 = vunpack.c.h.b16 %v2205
        %v2373 = vunpack.c.l.b16 %v2206
        %v2374 = vunpack.c.h.b16 %v2206
        %v2375 = vunpack.c.l.b16 %v2207
        %v2376 = vunpack.c.h.b16 %v2207
        %v2377 = vunpack.c.l.b16 %v2208
        %v2378 = vunpack.c.h.b16 %v2208
        %v2379 = vunpack.c.l.b16 %v2209
        %v2380 = vunpack.c.h.b16 %v2209
        %v2381 = vunpack.c.l.b16 %v2210
        %v2382 = vunpack.c.h.b16 %v2210
        %v2383 = vunpack.c.l.b16 %v2211
        %v2384 = vunpack.c.h.b16 %v2211
        %v2385 = vunpack.c.l.b16 %v2212
        %v2386 = vunpack.c.h.b16 %v2212
        %v2387 = vunpack.c.l.b16 %v2213
        %v2388 = vunpack.c.h.b16 %v2213
        %v2389 = vunpack.c.l.b16 %v2214
        %v2390 = vunpack.c.h.b16 %v2214
        %v2391 = vunpack.c.l.b16 %v2215
        %v2392 = vunpack.c.h.b16 %v2215
        %v2393 = vunpack.c.l.b16 %v2216
        %v2394 = vunpack.c.h.b16 %v2216
        %v2395 = vunpack.c.l.b16 %v2217
        %v2396 = vunpack.c.h.b16 %v2217
        %v2397 = vunpack.c.l.b16 %v2218
        %v2398 = vunpack.c.h.b16 %v2218
        %v2399 = vunpack.c.l.b16 %v2219
        %v2400 = vunpack.c.h.b16 %v2219
        %v2401 = vunpack.c.l.b16 %v2220
        %v2402 = vunpack.c.h.b16 %v2220
        %v2403 = vunpack.c.l.b16 %v2221
        %v2404 = vunpack.c.h.b16 %v2221
        %v2405 = vunpack.c.l.b16 %v2222
        %v2406 = vunpack.c.h.b16 %v2222
        %v2407 = vunpack.c.l.b16 %v2223
        %v2408 = vunpack.c.h.b16 %v2223
        %v2409 = vunpack.c.l.b16 %v2224
        %v2410 = vunpack.c.h.b16 %v2224
        %v2411 = vunpack.c.l.b16 %v2225
        %v2412 = vunpack.c.h.b16 %v2225
        %v2413 = vunpack.c.l.b16 %v2226
        %v2414 = vunpack.c.h.b16 %v2226
        %v2415 = vunpack.c.l.b16 %v2227
        %v2416 = vunpack.c.h.b16 %v2227
        %v2417 = vunpack.c.l.b16 %v2228
        %v2418 = vunpack.c.h.b16 %v2228
        %v2419 = vunpack.c.l.b16 %v2229
        %v2420 = vunpack.c.h.b16 %v2229
        %v2421 = vunpack.c.l.b16 %v2230
        %v2422 = vunpack.c.h.b16 %v2230
        %v2423 = vpack.c.b16 %v2295, %v2295
        %v2424 = vpack.c.b16 %v2296, %v2296
        %v2425 = vpack.c.b16 %v2297, %v2297
        %v2426 = vpack.c.b16 %v2298, %v2298
        %v2427 = vpack.c.b16 %v2299, %v2299
        %v2428 = vpack.c.b16 %v2300, %v2300
        %v2429 = vpack.c.b16 %v2301, %v2301
        %v2430 = vpack.c.b16 %v2302, %v2302
        %v2431 = vpack.c.b16 %v2303, %v2303
        %v2432 = vpack.c.b16 %v2304, %v2304
        %v2433 = vpack.c.b16 %v2305, %v2305
        %v2434 = vpack.c.b16 %v2306, %v2306
        %v2435 = vpack.c.b16 %v2307, %v2307
        %v2436 = vpack.c.b16 %v2308, %v2308
        %v2437 = vpack.c.b16 %v2309, %v2309
        %v2438 = vpack.c.b16 %v2310, %v2310
        %v2439 = vpack.c.b16 %v2311, %v2311
        %v2440 = vpack.c.b16 %v2312, %v2312
        %v2441 = vpack.c.b16 %v2313, %v2313
        %v2442 = vpack.c.b16 %v2314, %v2314
        %v2443 = vpack.c.b16 %v2315, %v2315
        %v2444 = vpack.c.b16 %v2316, %v2316
        %v2445 = vpack.c.b16 %v2317, %v2317
        %v2446 = vpack.c.b16 %v2318, %v2318
        %v2447 = vpack.c.b16 %v2319, %v2319
        %v2448 = vpack.c.b16 %v2320, %v2320
        %v2449 = vpack.c.b16 %v2321, %v2321
        %v2450 = vpack.c.b16 %v2322, %v2322
        %v2451 = vpack.c.b16 %v2323, %v2323
        %v2452 = vpack.c.b16 %v2324, %v2324
        %v2453 = vpack.c.b16 %v2325, %v2325
        %v2454 = vpack.c.b16 %v2326, %v2326
        %v2455 = vpack.c.b16 %v2327, %v2327
        %v2456 = vpack.c.b16 %v2328, %v2328
        %v2457 = vpack.c.b16 %v2329, %v2329
        %v2458 = vpack.c.b16 %v2330, %v2330
        %v2459 = vpack.c.b16 %v2331, %v2331
        %v2460 = vpack.c.b16 %v2332, %v2332
        %v2461 = vpack.c.b16 %v2333, %v2333
        %v2462 = vpack.c.b16 %v2334, %v2334
        %v2463 = vpack.c.b16 %v2335, %v2335
        %v2464 = vpack.c.b16 %v2336, %v2336
        %v2465 = vpack.c.b16 %v2337, %v2337
        %v2466 = vpack.c.b16 %v2338, %v2338
        %v2467 = vpack.c.b16 %v2339, %v2339
        %v2468 = vpack.c.b16 %v2340, %v2340
        %v2469 = vpack.c.b16 %v2341, %v2341
        %v2470 = vpack.c.b16 %v2342, %v2342
        %v2471 = vpack.c.b16 %v2343, %v2343
        %v2472 = vpack.c.b16 %v2344, %v2344
        %v2473 = vpack.c.b16 %v2345, %v2345
        %v2474 = vpack.c.b16 %v2346, %v2346
        %v2475 = vpack.c.b16 %v2347, %v2347
        %v2476 = vpack.c.b16 %v2348, %v2348
        %v2477 = vpack.c.b16 %v2349, %v2349
        %v2478 = vpack.c.b16 %v2350, %v2350
        %v2479 = vpack.c.b16 %v2351, %v2351
        %v2480 = vpack.c.b16 %v2352, %v2352
        %v2481 = vpack.c.b16 %v2353, %v2353
        %v2482 = vpack.c.b16 %v2354, %v2354
        %v2483 = vpack.c.b16 %v2355, %v2355
        %v2484 = vpack.c.b16 %v2356, %v2356
        %v2485 = vpack.c.b16 %v2357, %v2357
        %v2486 = vpack.c.b16 %v2358, %v2358
        %v2487 = vpack.c.b16 %v2359, %v2359
        %v2488 = vpack.c.b16 %v2360, %v2360
        %v2489 = vpack.c.b16 %v2361, %v2361
        %v2490 = vpack.c.b16 %v2362, %v2362
        %v2491 = vpack.c.b16 %v2363, %v2363
        %v2492 = vpack.c.b16 %v2364, %v2364
        %v2493 = vpack.c.b16 %v2365, %v2365
        %v2494 = vpack.c.b16 %v2366, %v2366
        %v2495 = vpack.c.b16 %v2367, %v2367
        %v2496 = vpack.c.b16 %v2368, %v2368
        %v2497 = vpack.c.b16 %v2369, %v2369
        %v2498 = vpack.c.b16 %v2370, %v2370
        %v2499 = vpack.c.b16 %v2371, %v2371
        %v2500 = vpack.c.b16 %v2372, %v2372
        %v2501 = vpack.c.b16 %v2373, %v2373
        %v2502 = vpack.c.b16 %v2374, %v2374
        %v2503 = vpack.c.b16 %v2375, %v2375
        %v2504 = vpack.c.b16 %v2376, %v2376
        %v2505 = vpack.c.b16 %v2377, %v2377
        %v2506 = vpack.c.b16 %v2378, %v2378
        %v2507 = vpack.c.b16 %v2379, %v2379
        %v2508 = vpack.c.b16 %v2380, %v2380
        %v2509 = vpack.c.b16 %v2381, %v2381
        %v2510 = vpack.c.b16 %v2382, %v2382
        %v2511 = vpack.c.b16 %v2383, %v2383
        %v2512 = vpack.c.b16 %v2384, %v2384
        %v2513 = vpack.c.b16 %v2385, %v2385
        %v2514 = vpack.c.b16 %v2386, %v2386
        %v2515 = vpack.c.b16 %v2387, %v2387
        %v2516 = vpack.c.b16 %v2388, %v2388
        %v2517 = vpack.c.b16 %v2389, %v2389
        %v2518 = vpack.c.b16 %v2390, %v2390
        %v2519 = vpack.c.b16 %v2391, %v2391
        %v2520 = vpack.c.b16 %v2392, %v2392
        %v2521 = vpack.c.b16 %v2393, %v2393
        %v2522 = vpack.c.b16 %v2394, %v2394
        %v2523 = vpack.c.b16 %v2395, %v2395
        %v2524 = vpack.c.b16 %v2396, %v2396
        %v2525 = vpack.c.b16 %v2397, %v2397
        %v2526 = vpack.c.b16 %v2398, %v2398
        %v2527 = vpack.c.b16 %v2399, %v2399
        %v2528 = vpack.c.b16 %v2400, %v2400
        %v2529 = vpack.c.b16 %v2401, %v2401
        %v2530 = vpack.c.b16 %v2402, %v2402
        %v2531 = vpack.c.b16 %v2403, %v2403
        %v2532 = vpack.c.b16 %v2404, %v2404
        %v2533 = vpack.c.b16 %v2405, %v2405
        %v2534 = vpack.c.b16 %v2406, %v2406
        %v2535 = vpack.c.b16 %v2407, %v2407
        %v2536 = vpack.c.b16 %v2408, %v2408
        %v2537 = vpack.c.b16 %v2409, %v2409
        %v2538 = vpack.c.b16 %v2410, %v2410
        %v2539 = vpack.c.b16 %v2411, %v2411
        %v2540 = vpack.c.b16 %v2412, %v2412
        %v2541 = vpack.c.b16 %v2413, %v2413
        %v2542 = vpack.c.b16 %v2414, %v2414
        %v2543 = vpack.c.b16 %v2415, %v2415
        %v2544 = vpack.c.b16 %v2416, %v2416
        %v2545 = vpack.c.b16 %v2417, %v2417
        %v2546 = vpack.c.b16 %v2418, %v2418
        %v2547 = vpack.c.b16 %v2419, %v2419
        %v2548 = vpack.c.b16 %v2420, %v2420
        %v2549 = vpack.c.b16 %v2421, %v2421
        %v2550 = vpack.c.b16 %v2422, %v2422
        %vm2679 = vcmask 125952
        %2680 = vst.msk [vmem:[%s293] sm:$0xf] %vm2679, %v2423
        %2681 = vst.msk [vmem:[%s293 + $0x4] sm:$0xf] %vm2679, %v2424
        %2682 = vst.msk [vmem:[%s293 + $0x8] sm:$0xf] %vm2679, %v2425
        %2683 = vst.msk [vmem:[%s293 + $0xc] sm:$0xf] %vm2679, %v2426
        %2684 = vst.msk [vmem:[%s293 + $0x10] sm:$0xf] %vm2679, %v2427
        %2685 = vst.msk [vmem:[%s293 + $0x14] sm:$0xf] %vm2679, %v2428
        %2686 = vst.msk [vmem:[%s293 + $0x18] sm:$0xf] %vm2679, %v2429
        %2687 = vst.msk [vmem:[%s293 + $0x1c] sm:$0xf] %vm2679, %v2430
        %2688 = vst.msk [vmem:[%s293 + $0x20] sm:$0xf] %vm2679, %v2431
        %2689 = vst.msk [vmem:[%s293 + $0x24] sm:$0xf] %vm2679, %v2432
        %2690 = vst.msk [vmem:[%s293 + $0x28] sm:$0xf] %vm2679, %v2433
        %2691 = vst.msk [vmem:[%s293 + $0x2c] sm:$0xf] %vm2679, %v2434
        %2692 = vst.msk [vmem:[%s293 + $0x30] sm:$0xf] %vm2679, %v2435
        %2693 = vst.msk [vmem:[%s293 + $0x34] sm:$0xf] %vm2679, %v2436
        %2694 = vst.msk [vmem:[%s293 + $0x38] sm:$0xf] %vm2679, %v2437
        %2695 = vst.msk [vmem:[%s293 + $0x3c] sm:$0xf] %vm2679, %v2438
        %2696 = vst.msk [vmem:[%s293 + $0x40] sm:$0xf] %vm2679, %v2439
        %2697 = vst.msk [vmem:[%s293 + $0x44] sm:$0xf] %vm2679, %v2440
        %2698 = vst.msk [vmem:[%s293 + $0x48] sm:$0xf] %vm2679, %v2441
        %2699 = vst.msk [vmem:[%s293 + $0x4c] sm:$0xf] %vm2679, %v2442
        %2700 = vst.msk [vmem:[%s293 + $0x50] sm:$0xf] %vm2679, %v2443
        %2701 = vst.msk [vmem:[%s293 + $0x54] sm:$0xf] %vm2679, %v2444
        %2702 = vst.msk [vmem:[%s293 + $0x58] sm:$0xf] %vm2679, %v2445
        %2703 = vst.msk [vmem:[%s293 + $0x5c] sm:$0xf] %vm2679, %v2446
        %2704 = vst.msk [vmem:[%s293 + $0x60] sm:$0xf] %vm2679, %v2447
        %2705 = vst.msk [vmem:[%s293 + $0x64] sm:$0xf] %vm2679, %v2448
        %2706 = vst.msk [vmem:[%s293 + $0x68] sm:$0xf] %vm2679, %v2449
        %2707 = vst.msk [vmem:[%s293 + $0x6c] sm:$0xf] %vm2679, %v2450
        %2708 = vst.msk [vmem:[%s293 + $0x70] sm:$0xf] %vm2679, %v2451
        %2709 = vst.msk [vmem:[%s293 + $0x74] sm:$0xf] %vm2679, %v2452
        %2710 = vst.msk [vmem:[%s293 + $0x78] sm:$0xf] %vm2679, %v2453
        %2711 = vst.msk [vmem:[%s293 + $0x7c] sm:$0xf] %vm2679, %v2454
        %2712 = vst.msk [vmem:[%s293 + $0x80] sm:$0xf] %vm2679, %v2455
        %2713 = vst.msk [vmem:[%s293 + $0x84] sm:$0xf] %vm2679, %v2456
        %2714 = vst.msk [vmem:[%s293 + $0x88] sm:$0xf] %vm2679, %v2457
        %2715 = vst.msk [vmem:[%s293 + $0x8c] sm:$0xf] %vm2679, %v2458
        %2716 = vst.msk [vmem:[%s293 + $0x90] sm:$0xf] %vm2679, %v2459
        %2717 = vst.msk [vmem:[%s293 + $0x94] sm:$0xf] %vm2679, %v2460
        %2718 = vst.msk [vmem:[%s293 + $0x98] sm:$0xf] %vm2679, %v2461
        %2719 = vst.msk [vmem:[%s293 + $0x9c] sm:$0xf] %vm2679, %v2462
        %2720 = vst.msk [vmem:[%s293 + $0xa0] sm:$0xf] %vm2679, %v2463
        %2721 = vst.msk [vmem:[%s293 + $0xa4] sm:$0xf] %vm2679, %v2464
        %2722 = vst.msk [vmem:[%s293 + $0xa8] sm:$0xf] %vm2679, %v2465
        %2723 = vst.msk [vmem:[%s293 + $0xac] sm:$0xf] %vm2679, %v2466
        %2724 = vst.msk [vmem:[%s293 + $0xb0] sm:$0xf] %vm2679, %v2467
        %2725 = vst.msk [vmem:[%s293 + $0xb4] sm:$0xf] %vm2679, %v2468
        %2726 = vst.msk [vmem:[%s293 + $0xb8] sm:$0xf] %vm2679, %v2469
        %2727 = vst.msk [vmem:[%s293 + $0xbc] sm:$0xf] %vm2679, %v2470
        %2728 = vst.msk [vmem:[%s293 + $0xc0] sm:$0xf] %vm2679, %v2471
        %2729 = vst.msk [vmem:[%s293 + $0xc4] sm:$0xf] %vm2679, %v2472
        %2730 = vst.msk [vmem:[%s293 + $0xc8] sm:$0xf] %vm2679, %v2473
        %2731 = vst.msk [vmem:[%s293 + $0xcc] sm:$0xf] %vm2679, %v2474
        %2732 = vst.msk [vmem:[%s293 + $0xd0] sm:$0xf] %vm2679, %v2475
        %2733 = vst.msk [vmem:[%s293 + $0xd4] sm:$0xf] %vm2679, %v2476
        %2734 = vst.msk [vmem:[%s293 + $0xd8] sm:$0xf] %vm2679, %v2477
        %2735 = vst.msk [vmem:[%s293 + $0xdc] sm:$0xf] %vm2679, %v2478
        %2736 = vst.msk [vmem:[%s293 + $0xe0] sm:$0xf] %vm2679, %v2479
        %2737 = vst.msk [vmem:[%s293 + $0xe4] sm:$0xf] %vm2679, %v2480
        %2738 = vst.msk [vmem:[%s293 + $0xe8] sm:$0xf] %vm2679, %v2481
        %2739 = vst.msk [vmem:[%s293 + $0xec] sm:$0xf] %vm2679, %v2482
        %2740 = vst.msk [vmem:[%s293 + $0xf0] sm:$0xf] %vm2679, %v2483
        %2741 = vst.msk [vmem:[%s293 + $0xf4] sm:$0xf] %vm2679, %v2484
        %2742 = vst.msk [vmem:[%s293 + $0xf8] sm:$0xf] %vm2679, %v2485
        %2743 = vst.msk [vmem:[%s293 + $0xfc] sm:$0xf] %vm2679, %v2486
        %2744 = vst.msk [vmem:[%s293 + $0x100] sm:$0xf] %vm2679, %v2487
        %2745 = vst.msk [vmem:[%s293 + $0x104] sm:$0xf] %vm2679, %v2488
        %2746 = vst.msk [vmem:[%s293 + $0x108] sm:$0xf] %vm2679, %v2489
        %2747 = vst.msk [vmem:[%s293 + $0x10c] sm:$0xf] %vm2679, %v2490
        %2748 = vst.msk [vmem:[%s293 + $0x110] sm:$0xf] %vm2679, %v2491
        %2749 = vst.msk [vmem:[%s293 + $0x114] sm:$0xf] %vm2679, %v2492
        %2750 = vst.msk [vmem:[%s293 + $0x118] sm:$0xf] %vm2679, %v2493
        %2751 = vst.msk [vmem:[%s293 + $0x11c] sm:$0xf] %vm2679, %v2494
        %2752 = vst.msk [vmem:[%s293 + $0x120] sm:$0xf] %vm2679, %v2495
        %2753 = vst.msk [vmem:[%s293 + $0x124] sm:$0xf] %vm2679, %v2496
        %2754 = vst.msk [vmem:[%s293 + $0x128] sm:$0xf] %vm2679, %v2497
        %2755 = vst.msk [vmem:[%s293 + $0x12c] sm:$0xf] %vm2679, %v2498
        %2756 = vst.msk [vmem:[%s293 + $0x130] sm:$0xf] %vm2679, %v2499
        %2757 = vst.msk [vmem:[%s293 + $0x134] sm:$0xf] %vm2679, %v2500
        %2758 = vst.msk [vmem:[%s293 + $0x138] sm:$0xf] %vm2679, %v2501
        %2759 = vst.msk [vmem:[%s293 + $0x13c] sm:$0xf] %vm2679, %v2502
        %2760 = vst.msk [vmem:[%s293 + $0x140] sm:$0xf] %vm2679, %v2503
        %2761 = vst.msk [vmem:[%s293 + $0x144] sm:$0xf] %vm2679, %v2504
        %2762 = vst.msk [vmem:[%s293 + $0x148] sm:$0xf] %vm2679, %v2505
        %2763 = vst.msk [vmem:[%s293 + $0x14c] sm:$0xf] %vm2679, %v2506
        %2764 = vst.msk [vmem:[%s293 + $0x150] sm:$0xf] %vm2679, %v2507
        %2765 = vst.msk [vmem:[%s293 + $0x154] sm:$0xf] %vm2679, %v2508
        %2766 = vst.msk [vmem:[%s293 + $0x158] sm:$0xf] %vm2679, %v2509
        %2767 = vst.msk [vmem:[%s293 + $0x15c] sm:$0xf] %vm2679, %v2510
        %2768 = vst.msk [vmem:[%s293 + $0x160] sm:$0xf] %vm2679, %v2511
        %2769 = vst.msk [vmem:[%s293 + $0x164] sm:$0xf] %vm2679, %v2512
        %2770 = vst.msk [vmem:[%s293 + $0x168] sm:$0xf] %vm2679, %v2513
        %2771 = vst.msk [vmem:[%s293 + $0x16c] sm:$0xf] %vm2679, %v2514
        %2772 = vst.msk [vmem:[%s293 + $0x170] sm:$0xf] %vm2679, %v2515
        %2773 = vst.msk [vmem:[%s293 + $0x174] sm:$0xf] %vm2679, %v2516
        %2774 = vst.msk [vmem:[%s293 + $0x178] sm:$0xf] %vm2679, %v2517
        %2775 = vst.msk [vmem:[%s293 + $0x17c] sm:$0xf] %vm2679, %v2518
        %2776 = vst.msk [vmem:[%s293 + $0x180] sm:$0xf] %vm2679, %v2519
        %2777 = vst.msk [vmem:[%s293 + $0x184] sm:$0xf] %vm2679, %v2520
        %2778 = vst.msk [vmem:[%s293 + $0x188] sm:$0xf] %vm2679, %v2521
        %2779 = vst.msk [vmem:[%s293 + $0x18c] sm:$0xf] %vm2679, %v2522
        %2780 = vst.msk [vmem:[%s293 + $0x190] sm:$0xf] %vm2679, %v2523
        %2781 = vst.msk [vmem:[%s293 + $0x194] sm:$0xf] %vm2679, %v2524
        %2782 = vst.msk [vmem:[%s293 + $0x198] sm:$0xf] %vm2679, %v2525
        %2783 = vst.msk [vmem:[%s293 + $0x19c] sm:$0xf] %vm2679, %v2526
        %2784 = vst.msk [vmem:[%s293 + $0x1a0] sm:$0xf] %vm2679, %v2527
        %2785 = vst.msk [vmem:[%s293 + $0x1a4] sm:$0xf] %vm2679, %v2528
        %2786 = vst.msk [vmem:[%s293 + $0x1a8] sm:$0xf] %vm2679, %v2529
        %2787 = vst.msk [vmem:[%s293 + $0x1ac] sm:$0xf] %vm2679, %v2530
        %2788 = vst.msk [vmem:[%s293 + $0x1b0] sm:$0xf] %vm2679, %v2531
        %2789 = vst.msk [vmem:[%s293 + $0x1b4] sm:$0xf] %vm2679, %v2532
        %2790 = vst.msk [vmem:[%s293 + $0x1b8] sm:$0xf] %vm2679, %v2533
        %2791 = vst.msk [vmem:[%s293 + $0x1bc] sm:$0xf] %vm2679, %v2534
        %2792 = vst.msk [vmem:[%s293 + $0x1c0] sm:$0xf] %vm2679, %v2535
        %2793 = vst.msk [vmem:[%s293 + $0x1c4] sm:$0xf] %vm2679, %v2536
        %2794 = vst.msk [vmem:[%s293 + $0x1c8] sm:$0xf] %vm2679, %v2537
        %2795 = vst.msk [vmem:[%s293 + $0x1cc] sm:$0xf] %vm2679, %v2538
        %2796 = vst.msk [vmem:[%s293 + $0x1d0] sm:$0xf] %vm2679, %v2539
        %2797 = vst.msk [vmem:[%s293 + $0x1d4] sm:$0xf] %vm2679, %v2540
        %2798 = vst.msk [vmem:[%s293 + $0x1d8] sm:$0xf] %vm2679, %v2541
        %2799 = vst.msk [vmem:[%s293 + $0x1dc] sm:$0xf] %vm2679, %v2542
        %2800 = vst.msk [vmem:[%s293 + $0x1e0] sm:$0xf] %vm2679, %v2543
        %2801 = vst.msk [vmem:[%s293 + $0x1e4] sm:$0xf] %vm2679, %v2544
        %2802 = vst.msk [vmem:[%s293 + $0x1e8] sm:$0xf] %vm2679, %v2545
        %2803 = vst.msk [vmem:[%s293 + $0x1ec] sm:$0xf] %vm2679, %v2546
        %2804 = vst.msk [vmem:[%s293 + $0x1f0] sm:$0xf] %vm2679, %v2547
        %2805 = vst.msk [vmem:[%s293 + $0x1f4] sm:$0xf] %vm2679, %v2548
        %2806 = vst.msk [vmem:[%s293 + $0x1f8] sm:$0xf] %vm2679, %v2549
        %2807 = vst.msk [vmem:[%s293 + $0x1fc] sm:$0xf] %vm2679, %v2550
        %v2808 = vsel %vm1907, %v2039, 0.0
        %v2809 = vsel %vm1907, %v2040, 0.0
        %v2810 = vadd.f32 %v2808, %v2809
        %v2811 = vsel %vm1907, %v2041, 0.0
        %v2812 = vadd.f32 %v2810, %v2811
        %v2813 = vsel %vm1907, %v2042, 0.0
        %v2814 = vadd.f32 %v2812, %v2813
        %v2815 = vsel %vm1907, %v2043, 0.0
        %v2816 = vadd.f32 %v2814, %v2815
        %v2817 = vsel %vm1907, %v2044, 0.0
        %v2818 = vadd.f32 %v2816, %v2817
        %v2819 = vsel %vm1907, %v2045, 0.0
        %v2820 = vadd.f32 %v2818, %v2819
        %v2821 = vsel %vm1907, %v2046, 0.0
        %v2822 = vadd.f32 %v2820, %v2821
        %v2823 = vsel %vm1907, %v2047, 0.0
        %v2824 = vadd.f32 %v2822, %v2823
        %v2825 = vsel %vm1907, %v2048, 0.0
        %v2826 = vadd.f32 %v2824, %v2825
        %v2827 = vsel %vm1907, %v2049, 0.0
        %v2828 = vadd.f32 %v2826, %v2827
        %v2829 = vsel %vm1907, %v2050, 0.0
        %v2830 = vadd.f32 %v2828, %v2829
        %v2831 = vsel %vm1907, %v2051, 0.0
        %v2832 = vadd.f32 %v2830, %v2831
        %v2833 = vsel %vm1907, %v2052, 0.0
        %v2834 = vadd.f32 %v2832, %v2833
        %v2835 = vsel %vm1907, %v2053, 0.0
        %v2836 = vadd.f32 %v2834, %v2835
        %v2837 = vsel %vm1907, %v2054, 0.0
        %v2838 = vadd.f32 %v2836, %v2837
        %v2839 = vsel %vm1907, %v2055, 0.0
        %v2840 = vadd.f32 %v2838, %v2839
        %v2841 = vsel %vm1907, %v2056, 0.0
        %v2842 = vadd.f32 %v2840, %v2841
        %v2843 = vsel %vm1907, %v2057, 0.0
        %v2844 = vadd.f32 %v2842, %v2843
        %v2845 = vsel %vm1907, %v2058, 0.0
        %v2846 = vadd.f32 %v2844, %v2845
        %v2847 = vsel %vm1907, %v2059, 0.0
        %v2848 = vadd.f32 %v2846, %v2847
        %v2849 = vsel %vm1907, %v2060, 0.0
        %v2850 = vadd.f32 %v2848, %v2849
        %v2851 = vsel %vm1907, %v2061, 0.0
        %v2852 = vadd.f32 %v2850, %v2851
        %v2853 = vsel %vm1907, %v2062, 0.0
        %v2854 = vadd.f32 %v2852, %v2853
        %v2855 = vsel %vm1907, %v2063, 0.0
        %v2856 = vadd.f32 %v2854, %v2855
        %v2857 = vsel %vm1907, %v2064, 0.0
        %v2858 = vadd.f32 %v2856, %v2857
        %v2859 = vsel %vm1907, %v2065, 0.0
        %v2860 = vadd.f32 %v2858, %v2859
        %v2861 = vsel %vm1907, %v2066, 0.0
        %v2862 = vadd.f32 %v2860, %v2861
        %v2863 = vsel %vm1907, %v2067, 0.0
        %v2864 = vadd.f32 %v2862, %v2863
        %v2865 = vsel %vm1907, %v2068, 0.0
        %v2866 = vadd.f32 %v2864, %v2865
        %v2867 = vsel %vm1907, %v2069, 0.0
        %v2868 = vadd.f32 %v2866, %v2867
        %v2869 = vsel %vm1907, %v2070, 0.0
        %v2870 = vadd.f32 %v2868, %v2869
        %v2871 = vsel %vm1907, %v2071, 0.0
        %v2872 = vadd.f32 %v2870, %v2871
        %v2873 = vsel %vm1907, %v2072, 0.0
        %v2874 = vadd.f32 %v2872, %v2873
        %v2875 = vsel %vm1907, %v2073, 0.0
        %v2876 = vadd.f32 %v2874, %v2875
        %v2877 = vsel %vm1907, %v2074, 0.0
        %v2878 = vadd.f32 %v2876, %v2877
        %v2879 = vsel %vm1907, %v2075, 0.0
        %v2880 = vadd.f32 %v2878, %v2879
        %v2881 = vsel %vm1907, %v2076, 0.0
        %v2882 = vadd.f32 %v2880, %v2881
        %v2883 = vsel %vm1907, %v2077, 0.0
        %v2884 = vadd.f32 %v2882, %v2883
        %v2885 = vsel %vm1907, %v2078, 0.0
        %v2886 = vadd.f32 %v2884, %v2885
        %v2887 = vsel %vm1907, %v2079, 0.0
        %v2888 = vadd.f32 %v2886, %v2887
        %v2889 = vsel %vm1907, %v2080, 0.0
        %v2890 = vadd.f32 %v2888, %v2889
        %v2891 = vsel %vm1907, %v2081, 0.0
        %v2892 = vadd.f32 %v2890, %v2891
        %v2893 = vsel %vm1907, %v2082, 0.0
        %v2894 = vadd.f32 %v2892, %v2893
        %v2895 = vsel %vm1907, %v2083, 0.0
        %v2896 = vadd.f32 %v2894, %v2895
        %v2897 = vsel %vm1907, %v2084, 0.0
        %v2898 = vadd.f32 %v2896, %v2897
        %v2899 = vsel %vm1907, %v2085, 0.0
        %v2900 = vadd.f32 %v2898, %v2899
        %v2901 = vsel %vm1907, %v2086, 0.0
        %v2902 = vadd.f32 %v2900, %v2901
        %v2903 = vsel %vm1907, %v2087, 0.0
        %v2904 = vadd.f32 %v2902, %v2903
        %v2905 = vsel %vm1907, %v2088, 0.0
        %v2906 = vadd.f32 %v2904, %v2905
        %v2907 = vsel %vm1907, %v2089, 0.0
        %v2908 = vadd.f32 %v2906, %v2907
        %v2909 = vsel %vm1907, %v2090, 0.0
        %v2910 = vadd.f32 %v2908, %v2909
        %v2911 = vsel %vm1907, %v2091, 0.0
        %v2912 = vadd.f32 %v2910, %v2911
        %v2913 = vsel %vm1907, %v2092, 0.0
        %v2914 = vadd.f32 %v2912, %v2913
        %v2915 = vsel %vm1907, %v2093, 0.0
        %v2916 = vadd.f32 %v2914, %v2915
        %v2917 = vsel %vm1907, %v2094, 0.0
        %v2918 = vadd.f32 %v2916, %v2917
        %v2919 = vsel %vm1907, %v2095, 0.0
        %v2920 = vadd.f32 %v2918, %v2919
        %v2921 = vsel %vm1907, %v2096, 0.0
        %v2922 = vadd.f32 %v2920, %v2921
        %v2923 = vsel %vm1907, %v2097, 0.0
        %v2924 = vadd.f32 %v2922, %v2923
        %v2925 = vsel %vm1907, %v2098, 0.0
        %v2926 = vadd.f32 %v2924, %v2925
        %v2927 = vsel %vm1907, %v2099, 0.0
        %v2928 = vadd.f32 %v2926, %v2927
        %v2929 = vsel %vm1907, %v2100, 0.0
        %v2930 = vadd.f32 %v2928, %v2929
        %v2931 = vsel %vm1907, %v2101, 0.0
        %v2932 = vadd.f32 %v2930, %v2931
        %v2933 = vsel %vm1907, %v2102, 0.0
        %v2934 = vadd.f32 %v2932, %v2933
        %v2935 = vsel %vm1907, %v2103, 0.0
        %v2936 = vadd.f32 %v2934, %v2935
        %v2937 = vsel %vm1907, %v2104, 0.0
        %v2938 = vadd.f32 %v2936, %v2937
        %v2939 = vsel %vm1907, %v2105, 0.0
        %v2940 = vadd.f32 %v2938, %v2939
        %v2941 = vsel %vm1907, %v2106, 0.0
        %v2942 = vadd.f32 %v2940, %v2941
        %v2943 = vsel %vm1907, %v2107, 0.0
        %v2944 = vadd.f32 %v2942, %v2943
        %v2945 = vsel %vm1907, %v2108, 0.0
        %v2946 = vadd.f32 %v2944, %v2945
        %v2947 = vsel %vm1907, %v2109, 0.0
        %v2948 = vadd.f32 %v2946, %v2947
        %v2949 = vsel %vm1907, %v2110, 0.0
        %v2950 = vadd.f32 %v2948, %v2949
        %v2951 = vsel %vm1907, %v2111, 0.0
        %v2952 = vadd.f32 %v2950, %v2951
        %v2953 = vsel %vm1907, %v2112, 0.0
        %v2954 = vadd.f32 %v2952, %v2953
        %v2955 = vsel %vm1907, %v2113, 0.0
        %v2956 = vadd.f32 %v2954, %v2955
        %v2957 = vsel %vm1907, %v2114, 0.0
        %v2958 = vadd.f32 %v2956, %v2957
        %v2959 = vsel %vm1907, %v2115, 0.0
        %v2960 = vadd.f32 %v2958, %v2959
        %v2961 = vsel %vm1907, %v2116, 0.0
        %v2962 = vadd.f32 %v2960, %v2961
        %v2963 = vsel %vm1907, %v2117, 0.0
        %v2964 = vadd.f32 %v2962, %v2963
        %v2965 = vsel %vm1907, %v2118, 0.0
        %v2966 = vadd.f32 %v2964, %v2965
        %v2967 = vsel %vm1907, %v2119, 0.0
        %v2968 = vadd.f32 %v2966, %v2967
        %v2969 = vsel %vm1907, %v2120, 0.0
        %v2970 = vadd.f32 %v2968, %v2969
        %v2971 = vsel %vm1907, %v2121, 0.0
        %v2972 = vadd.f32 %v2970, %v2971
        %v2973 = vsel %vm1907, %v2122, 0.0
        %v2974 = vadd.f32 %v2972, %v2973
        %v2975 = vsel %vm1907, %v2123, 0.0
        %v2976 = vadd.f32 %v2974, %v2975
        %v2977 = vsel %vm1907, %v2124, 0.0
        %v2978 = vadd.f32 %v2976, %v2977
        %v2979 = vsel %vm1907, %v2125, 0.0
        %v2980 = vadd.f32 %v2978, %v2979
        %v2981 = vsel %vm1907, %v2126, 0.0
        %v2982 = vadd.f32 %v2980, %v2981
        %v2983 = vsel %vm1907, %v2127, 0.0
        %v2984 = vadd.f32 %v2982, %v2983
        %v2985 = vsel %vm1907, %v2128, 0.0
        %v2986 = vadd.f32 %v2984, %v2985
        %v2987 = vsel %vm1907, %v2129, 0.0
        %v2988 = vadd.f32 %v2986, %v2987
        %v2989 = vsel %vm1907, %v2130, 0.0
        %v2990 = vadd.f32 %v2988, %v2989
        %v2991 = vsel %vm1907, %v2131, 0.0
        %v2992 = vadd.f32 %v2990, %v2991
        %v2993 = vsel %vm1907, %v2132, 0.0
        %v2994 = vadd.f32 %v2992, %v2993
        %v2995 = vsel %vm1907, %v2133, 0.0
        %v2996 = vadd.f32 %v2994, %v2995
        %v2997 = vsel %vm1907, %v2134, 0.0
        %v2998 = vadd.f32 %v2996, %v2997
        %v2999 = vsel %vm1907, %v2135, 0.0
        %v3000 = vadd.f32 %v2998, %v2999
        %v3001 = vsel %vm1907, %v2136, 0.0
        %v3002 = vadd.f32 %v3000, %v3001
        %v3003 = vsel %vm1907, %v2137, 0.0
        %v3004 = vadd.f32 %v3002, %v3003
        %v3005 = vsel %vm1907, %v2138, 0.0
        %v3006 = vadd.f32 %v3004, %v3005
        %v3007 = vsel %vm1907, %v2139, 0.0
        %v3008 = vadd.f32 %v3006, %v3007
        %v3009 = vsel %vm1907, %v2140, 0.0
        %v3010 = vadd.f32 %v3008, %v3009
        %v3011 = vsel %vm1907, %v2141, 0.0
        %v3012 = vadd.f32 %v3010, %v3011
        %v3013 = vsel %vm1907, %v2142, 0.0
        %v3014 = vadd.f32 %v3012, %v3013
        %v3015 = vsel %vm1907, %v2143, 0.0
        %v3016 = vadd.f32 %v3014, %v3015
        %v3017 = vsel %vm1907, %v2144, 0.0
        %v3018 = vadd.f32 %v3016, %v3017
        %v3019 = vsel %vm1907, %v2145, 0.0
        %v3020 = vadd.f32 %v3018, %v3019
        %v3021 = vsel %vm1907, %v2146, 0.0
        %v3022 = vadd.f32 %v3020, %v3021
        %v3023 = vsel %vm1907, %v2147, 0.0
        %v3024 = vadd.f32 %v3022, %v3023
        %v3025 = vsel %vm1907, %v2148, 0.0
        %v3026 = vadd.f32 %v3024, %v3025
        %v3027 = vsel %vm1907, %v2149, 0.0
        %v3028 = vadd.f32 %v3026, %v3027
        %v3029 = vsel %vm1907, %v2150, 0.0
        %v3030 = vadd.f32 %v3028, %v3029
        %v3031 = vsel %vm1907, %v2151, 0.0
        %v3032 = vadd.f32 %v3030, %v3031
        %v3033 = vsel %vm1907, %v2152, 0.0
        %v3034 = vadd.f32 %v3032, %v3033
        %v3035 = vsel %vm1907, %v2153, 0.0
        %v3036 = vadd.f32 %v3034, %v3035
        %v3037 = vsel %vm1907, %v2154, 0.0
        %v3038 = vadd.f32 %v3036, %v3037
        %v3039 = vsel %vm1907, %v2155, 0.0
        %v3040 = vadd.f32 %v3038, %v3039
        %v3041 = vsel %vm1907, %v2156, 0.0
        %v3042 = vadd.f32 %v3040, %v3041
        %v3043 = vsel %vm1907, %v2157, 0.0
        %v3044 = vadd.f32 %v3042, %v3043
        %v3045 = vsel %vm1907, %v2158, 0.0
        %v3046 = vadd.f32 %v3044, %v3045
        %v3047 = vsel %vm1907, %v2159, 0.0
        %v3048 = vadd.f32 %v3046, %v3047
        %v3049 = vsel %vm1907, %v2160, 0.0
        %v3050 = vadd.f32 %v3048, %v3049
        %v3051 = vsel %vm1907, %v2161, 0.0
        %v3052 = vadd.f32 %v3050, %v3051
        %v3053 = vsel %vm1907, %v2162, 0.0
        %v3054 = vadd.f32 %v3052, %v3053
        %v3055 = vsel %vm1907, %v2163, 0.0
        %v3056 = vadd.f32 %v3054, %v3055
        %v3057 = vsel %vm1907, %v2164, 0.0
        %v3058 = vadd.f32 %v3056, %v3057
        %v3059 = vsel %vm1907, %v2165, 0.0
        %v3060 = vadd.f32 %v3058, %v3059
        %v3061 = vsel %vm1907, %v2166, 0.0
        %v3062 = vadd.f32 %v3060, %v3061
        %v3063 = vrot.slane %v3062, 4
        %v3064 = vadd.f32 %v3062, %v3063
        %v3065 = vrot.slane %v3064, 2
        %v3066 = vadd.f32 %v3064, %v3065
        %v3067 = vrot.slane %v3066, 1
        %v3068 = vadd.f32 %v3066, %v3067
        %v3069 = vmul.f32 %v3068, 0.125
        %v3070 = vmul.f32 %v2039, %v2039
        %v3071 = vmul.f32 %v2040, %v2040
        %v3072 = vmul.f32 %v2041, %v2041
        %v3073 = vmul.f32 %v2042, %v2042
        %v3074 = vmul.f32 %v2043, %v2043
        %v3075 = vmul.f32 %v2044, %v2044
        %v3076 = vmul.f32 %v2045, %v2045
        %v3077 = vmul.f32 %v2046, %v2046
        %v3078 = vmul.f32 %v2047, %v2047
        %v3079 = vmul.f32 %v2048, %v2048
        %v3080 = vmul.f32 %v2049, %v2049
        %v3081 = vmul.f32 %v2050, %v2050
        %v3082 = vmul.f32 %v2051, %v2051
        %v3083 = vmul.f32 %v2052, %v2052
        %v3084 = vmul.f32 %v2053, %v2053
        %v3085 = vmul.f32 %v2054, %v2054
        %v3086 = vmul.f32 %v2055, %v2055
        %v3087 = vmul.f32 %v2056, %v2056
        %v3088 = vmul.f32 %v2057, %v2057
        %v3089 = vmul.f32 %v2058, %v2058
        %v3090 = vmul.f32 %v2059, %v2059
        %v3091 = vmul.f32 %v2060, %v2060
        %v3092 = vmul.f32 %v2061, %v2061
        %v3093 = vmul.f32 %v2062, %v2062
        %v3094 = vmul.f32 %v2063, %v2063
        %v3095 = vmul.f32 %v2064, %v2064
        %v3096 = vmul.f32 %v2065, %v2065
        %v3097 = vmul.f32 %v2066, %v2066
        %v3098 = vmul.f32 %v2067, %v2067
        %v3099 = vmul.f32 %v2068, %v2068
        %v3100 = vmul.f32 %v2069, %v2069
        %v3101 = vmul.f32 %v2070, %v2070
        %v3102 = vmul.f32 %v2071, %v2071
        %v3103 = vmul.f32 %v2072, %v2072
        %v3104 = vmul.f32 %v2073, %v2073
        %v3105 = vmul.f32 %v2074, %v2074
        %v3106 = vmul.f32 %v2075, %v2075
        %v3107 = vmul.f32 %v2076, %v2076
        %v3108 = vmul.f32 %v2077, %v2077
        %v3109 = vmul.f32 %v2078, %v2078
        %v3110 = vmul.f32 %v2079, %v2079
        %v3111 = vmul.f32 %v2080, %v2080
        %v3112 = vmul.f32 %v2081, %v2081
        %v3113 = vmul.f32 %v2082, %v2082
        %v3114 = vmul.f32 %v2083, %v2083
        %v3115 = vmul.f32 %v2084, %v2084
        %v3116 = vmul.f32 %v2085, %v2085
        %v3117 = vmul.f32 %v2086, %v2086
        %v3118 = vmul.f32 %v2087, %v2087
        %v3119 = vmul.f32 %v2088, %v2088
        %v3120 = vmul.f32 %v2089, %v2089
        %v3121 = vmul.f32 %v2090, %v2090
        %v3122 = vmul.f32 %v2091, %v2091
        %v3123 = vmul.f32 %v2092, %v2092
        %v3124 = vmul.f32 %v2093, %v2093
        %v3125 = vmul.f32 %v2094, %v2094
        %v3126 = vmul.f32 %v2095, %v2095
        %v3127 = vmul.f32 %v2096, %v2096
        %v3128 = vmul.f32 %v2097, %v2097
        %v3129 = vmul.f32 %v2098, %v2098
        %v3130 = vmul.f32 %v2099, %v2099
        %v3131 = vmul.f32 %v2100, %v2100
        %v3132 = vmul.f32 %v2101, %v2101
        %v3133 = vmul.f32 %v2102, %v2102
        %v3134 = vmul.f32 %v2103, %v2103
        %v3135 = vmul.f32 %v2104, %v2104
        %v3136 = vmul.f32 %v2105, %v2105
        %v3137 = vmul.f32 %v2106, %v2106
        %v3138 = vmul.f32 %v2107, %v2107
        %v3139 = vmul.f32 %v2108, %v2108
        %v3140 = vmul.f32 %v2109, %v2109
        %v3141 = vmul.f32 %v2110, %v2110
        %v3142 = vmul.f32 %v2111, %v2111
        %v3143 = vmul.f32 %v2112, %v2112
        %v3144 = vmul.f32 %v2113, %v2113
        %v3145 = vmul.f32 %v2114, %v2114
        %v3146 = vmul.f32 %v2115, %v2115
        %v3147 = vmul.f32 %v2116, %v2116
        %v3148 = vmul.f32 %v2117, %v2117
        %v3149 = vmul.f32 %v2118, %v2118
        %v3150 = vmul.f32 %v2119, %v2119
        %v3151 = vmul.f32 %v2120, %v2120
        %v3152 = vmul.f32 %v2121, %v2121
        %v3153 = vmul.f32 %v2122, %v2122
        %v3154 = vmul.f32 %v2123, %v2123
        %v3155 = vmul.f32 %v2124, %v2124
        %v3156 = vmul.f32 %v2125, %v2125
        %v3157 = vmul.f32 %v2126, %v2126
        %v3158 = vmul.f32 %v2127, %v2127
        %v3159 = vmul.f32 %v2128, %v2128
        %v3160 = vmul.f32 %v2129, %v2129
        %v3161 = vmul.f32 %v2130, %v2130
        %v3162 = vmul.f32 %v2131, %v2131
        %v3163 = vmul.f32 %v2132, %v2132
        %v3164 = vmul.f32 %v2133, %v2133
        %v3165 = vmul.f32 %v2134, %v2134
        %v3166 = vmul.f32 %v2135, %v2135
        %v3167 = vmul.f32 %v2136, %v2136
        %v3168 = vmul.f32 %v2137, %v2137
        %v3169 = vmul.f32 %v2138, %v2138
        %v3170 = vmul.f32 %v2139, %v2139
        %v3171 = vmul.f32 %v2140, %v2140
        %v3172 = vmul.f32 %v2141, %v2141
        %v3173 = vmul.f32 %v2142, %v2142
        %v3174 = vmul.f32 %v2143, %v2143
        %v3175 = vmul.f32 %v2144, %v2144
        %v3176 = vmul.f32 %v2145, %v2145
        %v3177 = vmul.f32 %v2146, %v2146
        %v3178 = vmul.f32 %v2147, %v2147
        %v3179 = vmul.f32 %v2148, %v2148
        %v3180 = vmul.f32 %v2149, %v2149
        %v3181 = vmul.f32 %v2150, %v2150
        %v3182 = vmul.f32 %v2151, %v2151
        %v3183 = vmul.f32 %v2152, %v2152
        %v3184 = vmul.f32 %v2153, %v2153
        %v3185 = vmul.f32 %v2154, %v2154
        %v3186 = vmul.f32 %v2155, %v2155
        %v3187 = vmul.f32 %v2156, %v2156
        %v3188 = vmul.f32 %v2157, %v2157
        %v3189 = vmul.f32 %v2158, %v2158
        %v3190 = vmul.f32 %v2159, %v2159
        %v3191 = vmul.f32 %v2160, %v2160
        %v3192 = vmul.f32 %v2161, %v2161
        %v3193 = vmul.f32 %v2162, %v2162
        %v3194 = vmul.f32 %v2163, %v2163
        %v3195 = vmul.f32 %v2164, %v2164
        %v3196 = vmul.f32 %v2165, %v2165
        %v3197 = vmul.f32 %v2166, %v2166
        %v3198 = vsel %vm1907, %v3070, 0.0
        %v3199 = vsel %vm1907, %v3071, 0.0
        %v3200 = vadd.f32 %v3198, %v3199
        %v3201 = vsel %vm1907, %v3072, 0.0
        %v3202 = vadd.f32 %v3200, %v3201
        %v3203 = vsel %vm1907, %v3073, 0.0
        %v3204 = vadd.f32 %v3202, %v3203
        %v3205 = vsel %vm1907, %v3074, 0.0
        %v3206 = vadd.f32 %v3204, %v3205
        %v3207 = vsel %vm1907, %v3075, 0.0
        %v3208 = vadd.f32 %v3206, %v3207
        %v3209 = vsel %vm1907, %v3076, 0.0
        %v3210 = vadd.f32 %v3208, %v3209
        %v3211 = vsel %vm1907, %v3077, 0.0
        %v3212 = vadd.f32 %v3210, %v3211
        %v3213 = vsel %vm1907, %v3078, 0.0
        %v3214 = vadd.f32 %v3212, %v3213
        %v3215 = vsel %vm1907, %v3079, 0.0
        %v3216 = vadd.f32 %v3214, %v3215
        %v3217 = vsel %vm1907, %v3080, 0.0
        %v3218 = vadd.f32 %v3216, %v3217
        %v3219 = vsel %vm1907, %v3081, 0.0
        %v3220 = vadd.f32 %v3218, %v3219
        %v3221 = vsel %vm1907, %v3082, 0.0
        %v3222 = vadd.f32 %v3220, %v3221
        %v3223 = vsel %vm1907, %v3083, 0.0
        %v3224 = vadd.f32 %v3222, %v3223
        %v3225 = vsel %vm1907, %v3084, 0.0
        %v3226 = vadd.f32 %v3224, %v3225
        %v3227 = vsel %vm1907, %v3085, 0.0
        %v3228 = vadd.f32 %v3226, %v3227
        %v3229 = vsel %vm1907, %v3086, 0.0
        %v3230 = vadd.f32 %v3228, %v3229
        %v3231 = vsel %vm1907, %v3087, 0.0
        %v3232 = vadd.f32 %v3230, %v3231
        %v3233 = vsel %vm1907, %v3088, 0.0
        %v3234 = vadd.f32 %v3232, %v3233
        %v3235 = vsel %vm1907, %v3089, 0.0
        %v3236 = vadd.f32 %v3234, %v3235
        %v3237 = vsel %vm1907, %v3090, 0.0
        %v3238 = vadd.f32 %v3236, %v3237
        %v3239 = vsel %vm1907, %v3091, 0.0
        %v3240 = vadd.f32 %v3238, %v3239
        %v3241 = vsel %vm1907, %v3092, 0.0
        %v3242 = vadd.f32 %v3240, %v3241
        %v3243 = vsel %vm1907, %v3093, 0.0
        %v3244 = vadd.f32 %v3242, %v3243
        %v3245 = vsel %vm1907, %v3094, 0.0
        %v3246 = vadd.f32 %v3244, %v3245
        %v3247 = vsel %vm1907, %v3095, 0.0
        %v3248 = vadd.f32 %v3246, %v3247
        %v3249 = vsel %vm1907, %v3096, 0.0
        %v3250 = vadd.f32 %v3248, %v3249
        %v3251 = vsel %vm1907, %v3097, 0.0
        %v3252 = vadd.f32 %v3250, %v3251
        %v3253 = vsel %vm1907, %v3098, 0.0
        %v3254 = vadd.f32 %v3252, %v3253
        %v3255 = vsel %vm1907, %v3099, 0.0
        %v3256 = vadd.f32 %v3254, %v3255
        %v3257 = vsel %vm1907, %v3100, 0.0
        %v3258 = vadd.f32 %v3256, %v3257
        %v3259 = vsel %vm1907, %v3101, 0.0
        %v3260 = vadd.f32 %v3258, %v3259
        %v3261 = vsel %vm1907, %v3102, 0.0
        %v3262 = vadd.f32 %v3260, %v3261
        %v3263 = vsel %vm1907, %v3103, 0.0
        %v3264 = vadd.f32 %v3262, %v3263
        %v3265 = vsel %vm1907, %v3104, 0.0
        %v3266 = vadd.f32 %v3264, %v3265
        %v3267 = vsel %vm1907, %v3105, 0.0
        %v3268 = vadd.f32 %v3266, %v3267
        %v3269 = vsel %vm1907, %v3106, 0.0
        %v3270 = vadd.f32 %v3268, %v3269
        %v3271 = vsel %vm1907, %v3107, 0.0
        %v3272 = vadd.f32 %v3270, %v3271
        %v3273 = vsel %vm1907, %v3108, 0.0
        %v3274 = vadd.f32 %v3272, %v3273
        %v3275 = vsel %vm1907, %v3109, 0.0
        %v3276 = vadd.f32 %v3274, %v3275
        %v3277 = vsel %vm1907, %v3110, 0.0
        %v3278 = vadd.f32 %v3276, %v3277
        %v3279 = vsel %vm1907, %v3111, 0.0
        %v3280 = vadd.f32 %v3278, %v3279
        %v3281 = vsel %vm1907, %v3112, 0.0
        %v3282 = vadd.f32 %v3280, %v3281
        %v3283 = vsel %vm1907, %v3113, 0.0
        %v3284 = vadd.f32 %v3282, %v3283
        %v3285 = vsel %vm1907, %v3114, 0.0
        %v3286 = vadd.f32 %v3284, %v3285
        %v3287 = vsel %vm1907, %v3115, 0.0
        %v3288 = vadd.f32 %v3286, %v3287
        %v3289 = vsel %vm1907, %v3116, 0.0
        %v3290 = vadd.f32 %v3288, %v3289
        %v3291 = vsel %vm1907, %v3117, 0.0
        %v3292 = vadd.f32 %v3290, %v3291
        %v3293 = vsel %vm1907, %v3118, 0.0
        %v3294 = vadd.f32 %v3292, %v3293
        %v3295 = vsel %vm1907, %v3119, 0.0
        %v3296 = vadd.f32 %v3294, %v3295
        %v3297 = vsel %vm1907, %v3120, 0.0
        %v3298 = vadd.f32 %v3296, %v3297
        %v3299 = vsel %vm1907, %v3121, 0.0
        %v3300 = vadd.f32 %v3298, %v3299
        %v3301 = vsel %vm1907, %v3122, 0.0
        %v3302 = vadd.f32 %v3300, %v3301
        %v3303 = vsel %vm1907, %v3123, 0.0
        %v3304 = vadd.f32 %v3302, %v3303
        %v3305 = vsel %vm1907, %v3124, 0.0
        %v3306 = vadd.f32 %v3304, %v3305
        %v3307 = vsel %vm1907, %v3125, 0.0
        %v3308 = vadd.f32 %v3306, %v3307
        %v3309 = vsel %vm1907, %v3126, 0.0
        %v3310 = vadd.f32 %v3308, %v3309
        %v3311 = vsel %vm1907, %v3127, 0.0
        %v3312 = vadd.f32 %v3310, %v3311
        %v3313 = vsel %vm1907, %v3128, 0.0
        %v3314 = vadd.f32 %v3312, %v3313
        %v3315 = vsel %vm1907, %v3129, 0.0
        %v3316 = vadd.f32 %v3314, %v3315
        %v3317 = vsel %vm1907, %v3130, 0.0
        %v3318 = vadd.f32 %v3316, %v3317
        %v3319 = vsel %vm1907, %v3131, 0.0
        %v3320 = vadd.f32 %v3318, %v3319
        %v3321 = vsel %vm1907, %v3132, 0.0
        %v3322 = vadd.f32 %v3320, %v3321
        %v3323 = vsel %vm1907, %v3133, 0.0
        %v3324 = vadd.f32 %v3322, %v3323
        %v3325 = vsel %vm1907, %v3134, 0.0
        %v3326 = vadd.f32 %v3324, %v3325
        %v3327 = vsel %vm1907, %v3135, 0.0
        %v3328 = vadd.f32 %v3326, %v3327
        %v3329 = vsel %vm1907, %v3136, 0.0
        %v3330 = vadd.f32 %v3328, %v3329
        %v3331 = vsel %vm1907, %v3137, 0.0
        %v3332 = vadd.f32 %v3330, %v3331
        %v3333 = vsel %vm1907, %v3138, 0.0
        %v3334 = vadd.f32 %v3332, %v3333
        %v3335 = vsel %vm1907, %v3139, 0.0
        %v3336 = vadd.f32 %v3334, %v3335
        %v3337 = vsel %vm1907, %v3140, 0.0
        %v3338 = vadd.f32 %v3336, %v3337
        %v3339 = vsel %vm1907, %v3141, 0.0
        %v3340 = vadd.f32 %v3338, %v3339
        %v3341 = vsel %vm1907, %v3142, 0.0
        %v3342 = vadd.f32 %v3340, %v3341
        %v3343 = vsel %vm1907, %v3143, 0.0
        %v3344 = vadd.f32 %v3342, %v3343
        %v3345 = vsel %vm1907, %v3144, 0.0
        %v3346 = vadd.f32 %v3344, %v3345
        %v3347 = vsel %vm1907, %v3145, 0.0
        %v3348 = vadd.f32 %v3346, %v3347
        %v3349 = vsel %vm1907, %v3146, 0.0
        %v3350 = vadd.f32 %v3348, %v3349
        %v3351 = vsel %vm1907, %v3147, 0.0
        %v3352 = vadd.f32 %v3350, %v3351
        %v3353 = vsel %vm1907, %v3148, 0.0
        %v3354 = vadd.f32 %v3352, %v3353
        %v3355 = vsel %vm1907, %v3149, 0.0
        %v3356 = vadd.f32 %v3354, %v3355
        %v3357 = vsel %vm1907, %v3150, 0.0
        %v3358 = vadd.f32 %v3356, %v3357
        %v3359 = vsel %vm1907, %v3151, 0.0
        %v3360 = vadd.f32 %v3358, %v3359
        %v3361 = vsel %vm1907, %v3152, 0.0
        %v3362 = vadd.f32 %v3360, %v3361
        %v3363 = vsel %vm1907, %v3153, 0.0
        %v3364 = vadd.f32 %v3362, %v3363
        %v3365 = vsel %vm1907, %v3154, 0.0
        %v3366 = vadd.f32 %v3364, %v3365
        %v3367 = vsel %vm1907, %v3155, 0.0
        %v3368 = vadd.f32 %v3366, %v3367
        %v3369 = vsel %vm1907, %v3156, 0.0
        %v3370 = vadd.f32 %v3368, %v3369
        %v3371 = vsel %vm1907, %v3157, 0.0
        %v3372 = vadd.f32 %v3370, %v3371
        %v3373 = vsel %vm1907, %v3158, 0.0
        %v3374 = vadd.f32 %v3372, %v3373
        %v3375 = vsel %vm1907, %v3159, 0.0
        %v3376 = vadd.f32 %v3374, %v3375
        %v3377 = vsel %vm1907, %v3160, 0.0
        %v3378 = vadd.f32 %v3376, %v3377
        %v3379 = vsel %vm1907, %v3161, 0.0
        %v3380 = vadd.f32 %v3378, %v3379
        %v3381 = vsel %vm1907, %v3162, 0.0
        %v3382 = vadd.f32 %v3380, %v3381
        %v3383 = vsel %vm1907, %v3163, 0.0
        %v3384 = vadd.f32 %v3382, %v3383
        %v3385 = vsel %vm1907, %v3164, 0.0
        %v3386 = vadd.f32 %v3384, %v3385
        %v3387 = vsel %vm1907, %v3165, 0.0
        %v3388 = vadd.f32 %v3386, %v3387
        %v3389 = vsel %vm1907, %v3166, 0.0
        %v3390 = vadd.f32 %v3388, %v3389
        %v3391 = vsel %vm1907, %v3167, 0.0
        %v3392 = vadd.f32 %v3390, %v3391
        %v3393 = vsel %vm1907, %v3168, 0.0
        %v3394 = vadd.f32 %v3392, %v3393
        %v3395 = vsel %vm1907, %v3169, 0.0
        %v3396 = vadd.f32 %v3394, %v3395
        %v3397 = vsel %vm1907, %v3170, 0.0
        %v3398 = vadd.f32 %v3396, %v3397
        %v3399 = vsel %vm1907, %v3171, 0.0
        %v3400 = vadd.f32 %v3398, %v3399
        %v3401 = vsel %vm1907, %v3172, 0.0
        %v3402 = vadd.f32 %v3400, %v3401
        %v3403 = vsel %vm1907, %v3173, 0.0
        %v3404 = vadd.f32 %v3402, %v3403
        %v3405 = vsel %vm1907, %v3174, 0.0
        %v3406 = vadd.f32 %v3404, %v3405
        %v3407 = vsel %vm1907, %v3175, 0.0
        %v3408 = vadd.f32 %v3406, %v3407
        %v3409 = vsel %vm1907, %v3176, 0.0
        %v3410 = vadd.f32 %v3408, %v3409
        %v3411 = vsel %vm1907, %v3177, 0.0
        %v3412 = vadd.f32 %v3410, %v3411
        %v3413 = vsel %vm1907, %v3178, 0.0
        %v3414 = vadd.f32 %v3412, %v3413
        %v3415 = vsel %vm1907, %v3179, 0.0
        %v3416 = vadd.f32 %v3414, %v3415
        %v3417 = vsel %vm1907, %v3180, 0.0
        %v3418 = vadd.f32 %v3416, %v3417
        %v3419 = vsel %vm1907, %v3181, 0.0
        %v3420 = vadd.f32 %v3418, %v3419
        %v3421 = vsel %vm1907, %v3182, 0.0
        %v3422 = vadd.f32 %v3420, %v3421
        %v3423 = vsel %vm1907, %v3183, 0.0
        %v3424 = vadd.f32 %v3422, %v3423
        %v3425 = vsel %vm1907, %v3184, 0.0
        %v3426 = vadd.f32 %v3424, %v3425
        %v3427 = vsel %vm1907, %v3185, 0.0
        %v3428 = vadd.f32 %v3426, %v3427
        %v3429 = vsel %vm1907, %v3186, 0.0
        %v3430 = vadd.f32 %v3428, %v3429
        %v3431 = vsel %vm1907, %v3187, 0.0
        %v3432 = vadd.f32 %v3430, %v3431
        %v3433 = vsel %vm1907, %v3188, 0.0
        %v3434 = vadd.f32 %v3432, %v3433
        %v3435 = vsel %vm1907, %v3189, 0.0
        %v3436 = vadd.f32 %v3434, %v3435
        %v3437 = vsel %vm1907, %v3190, 0.0
        %v3438 = vadd.f32 %v3436, %v3437
        %v3439 = vsel %vm1907, %v3191, 0.0
        %v3440 = vadd.f32 %v3438, %v3439
        %v3441 = vsel %vm1907, %v3192, 0.0
        %v3442 = vadd.f32 %v3440, %v3441
        %v3443 = vsel %vm1907, %v3193, 0.0
        %v3444 = vadd.f32 %v3442, %v3443
        %v3445 = vsel %vm1907, %v3194, 0.0
        %v3446 = vadd.f32 %v3444, %v3445
        %v3447 = vsel %vm1907, %v3195, 0.0
        %v3448 = vadd.f32 %v3446, %v3447
        %v3449 = vsel %vm1907, %v3196, 0.0
        %v3450 = vadd.f32 %v3448, %v3449
        %v3451 = vsel %vm1907, %v3197, 0.0
        %v3452 = vadd.f32 %v3450, %v3451
        %v3453 = vrot.slane %v3452, 4
        %v3454 = vadd.f32 %v3452, %v3453
        %v3455 = vrot.slane %v3454, 2
        %v3456 = vadd.f32 %v3454, %v3455
        %v3457 = vrot.slane %v3456, 1
        %v3458 = vadd.f32 %v3456, %v3457
        %v3459 = vmul.f32 %v3458, 0.125
        %3460 = vst.msk [vmem:[%s301] sm:$0xff] %vm1907, %v3069
        %3461 = vst.msk [vmem:[%s308] sm:$0xff] %vm1907, %v3459
      $region36: #{pallas_matmul.1} parent=27 // pred_fallthru
        _
      %s3462 = smul.u32 128, %s21
      %p3463 = scmp.lt.s32.totalorder %s3462, 255
      %s3464 = scalar_select %p3463, %s3462, 255
      %p3465 = scmp.lt.s32.totalorder %s22, 0
      %s3466 = scalar_select %p3465, %s22, 0
      %s3467 = sadd.s32 %s3466, %s3464
      %s3468 = smul.addr %s3467, 4
      %s3469 = scalar_lea.vmem %s2, %s3468
      %p3470 = scmp.lt.s32.totalorder %s21, 1
      %s3471 = scalar_select %p3470, %s21, 1
      %p3472 = scmp.lt.s32.totalorder %s22, 0
      %s3473 = scalar_select %p3472, %s22, 0
      %s3474 = sadd.s32 %s3473, %s3471
      %s3475 = smul.addr %s3474, 8
      %s3476 = scalar_lea.vmem %s3, %s3475
      %p3477 = scmp.lt.s32.totalorder %s21, 1
      %s3478 = scalar_select %p3477, %s21, 1
      %p3479 = scmp.lt.s32.totalorder %s22, 0
      %s3480 = scalar_select %p3479, %s22, 0
      %s3481 = sadd.s32 %s3480, %s3478
      %s3482 = smul.addr %s3481, 8
      %s3483 = scalar_lea.vmem %s4, %s3482
      // Predicated region
      $region37: #{pallas_matmul.1} parent=27 // pred_check
        %p3484 = pneg %p111
      $region38: #{pallas_matmul.1} parent=27 // pred_check_branch
        %3486 = sbr.rel (%p3484) target = $region40
      $region39: #{pallas_matmul.1} parent=27 // pred_region
        %s3487 = smul.u32 128, %s21
      $region40: #{pallas_matmul.1} parent=27 // pred_fallthru
        _
      // Predicated region
      $region41: #{pallas_matmul.1} parent=27 // pred_check
        %p3488 = pneg %p139
      $region42: #{pallas_matmul.1} parent=27 // pred_check_branch
        %3490 = sbr.rel (%p3488) target = $region44
      $region43: #{pallas_matmul.1} parent=27 // pred_region
        _
      $region44: #{pallas_matmul.1} parent=27 // pred_fallthru
        _
      // Predicated region
      $region45: #{pallas_matmul.1} parent=27 // pred_check
        %p3491 = pneg %p167
      $region46: #{pallas_matmul.1} parent=27 // pred_check_branch
        %3493 = sbr.rel (%p3491) target = $region48
      $region47: #{pallas_matmul.1} parent=27 // pred_region
        _
      $region48: #{pallas_matmul.1} parent=27 // pred_fallthru
        _
    $region28: #{pallas_matmul.1} parent=5 // pred_fallthru
      _
    %p3494 = scmp.le.s32.totalorder 2, %s11
    // Predicated region
    $region49: #{pallas_matmul.1} parent=5 // pred_check
      %p3495 = pneg %p3494
    $region50: #{pallas_matmul.1} parent=5 // pred_check_branch
      %3497 = sbr.rel (%p3495) target = $region52
    $region51: #{pallas_matmul.1} parent=5 // pred_region
      %s3498 = ssub.s32 %s11, 2
      // Predicated region
      $region53: #{pallas_matmul.1} parent=51 // pred_check
        %p3499 = pneg %p117
      $region54: #{pallas_matmul.1} parent=51 // pred_check_branch
        %3501 = sbr.rel (%p3499) target = $region56
      $region55: #{pallas_matmul.1} parent=51 // pred_region
        %s3502 = smul.u32 128, %s24
        %p3503 = scmp.lt.s32.totalorder %s3502, 255
        %s3504 = scalar_select %p3503, %s3502, 255
        %p3505 = scmp.lt.s32.totalorder %s25, 0
        %s3506 = scalar_select %p3505, %s25, 0
        %s3507 = sadd.s32 %s3506, %s3504
        %s3508 = smul.addr %s3507, 4
        %s3509 = scalar_lea.vmem %s2, %s3508
      $region56: #{pallas_matmul.1} parent=51 // pred_fallthru
        _
      // Predicated region
      $region57: #{pallas_matmul.1} parent=51 // pred_check
        %p3510 = pneg %p145
      $region58: #{pallas_matmul.1} parent=51 // pred_check_branch
        %3512 = sbr.rel (%p3510) target = $region60
      $region59: #{pallas_matmul.1} parent=51 // pred_region
        %p3513 = scmp.lt.s32.totalorder %s24, 1
        %s3514 = scalar_select %p3513, %s24, 1
        %p3515 = scmp.lt.s32.totalorder %s25, 0
        %s3516 = scalar_select %p3515, %s25, 0
        %s3517 = sadd.s32 %s3516, %s3514
        %s3518 = smul.addr %s3517, 8
        %s3519 = scalar_lea.vmem %s3, %s3518
      $region60: #{pallas_matmul.1} parent=51 // pred_fallthru
        _
      // Predicated region
      $region61: #{pallas_matmul.1} parent=51 // pred_check
        %p3520 = pneg %p173
      $region62: #{pallas_matmul.1} parent=51 // pred_check_branch
        %3522 = sbr.rel (%p3520) target = $region64
      $region63: #{pallas_matmul.1} parent=51 // pred_region
        %p3523 = scmp.lt.s32.totalorder %s24, 1
        %s3524 = scalar_select %p3523, %s24, 1
        %p3525 = scmp.lt.s32.totalorder %s25, 0
        %s3526 = scalar_select %p3525, %s25, 0
        %s3527 = sadd.s32 %s3526, %s3524
        %s3528 = smul.addr %s3527, 8
        %s3529 = scalar_lea.vmem %s4, %s3528
      $region64: #{pallas_matmul.1} parent=51 // pred_fallthru
        _
    $region52: #{pallas_matmul.1} parent=5 // pred_fallthru
      _
  $region6: #{pallas_matmul.1} parent=0 // loop_footer
    %s15 = sadd.s32 1, %s11
  $region7: #{pallas_matmul.1} parent=0 // loop_footer_branch
    %10 = sbr.rel target = $region3
  $region8: #{pallas_matmul.1} parent=0 // loop_exit
    _

</llo_original>
